<compile_context>
chip_gen: v5e
topology: v5e:2x2
jax: 0.10.0
libtpu: 0.0.40
codegen_flags: <defaults>
</compile_context>

<pallas_src>
import functools
import math

import jax
import jax.numpy as jnp
from jax.experimental import pallas as pl
from jax.experimental.pallas import tpu as pltpu

# ----------------------------- config (small) -------------------------------
CFG = dict(
    vocab_size=128,
    emb_dim=32,
    n_layers=2,
    n_heads=2,
    qk_nope_dim=16,
    qk_rope_dim=8,
    v_head_dim=16,
    q_lora_rank=24,
    kv_lora_rank=16,
    dense_hidden=64,     # hidden dim of dense FFN (first_k_dense layers)
    moe_hidden=32,       # hidden dim of each routed expert
    shared_hidden=32,    # hidden dim of the shared expert
    n_experts=4,
    top_k=2,
    first_k_dense=1,
    rope_theta=10000.0,
    rms_eps=1e-6,
)

# --------------------------- in-kernel helpers -------------------------------

def _dot(a, b):
    """MXU matmul: bf16 inputs, f32 accumulation."""
    return jnp.dot(a.astype(jnp.bfloat16), b.astype(jnp.bfloat16),
                   preferred_element_type=jnp.float32)


def _dot_nt(a, b):
    """a @ b.T on the MXU (contract last dims), bf16 in / f32 out."""
    return jax.lax.dot_general(
        a.astype(jnp.bfloat16), b.astype(jnp.bfloat16),
        (((1,), (1,)), ((), ())), preferred_element_type=jnp.float32)


def _rms(x, w, eps):
    """RMSNorm prologue: pure VPU/EUP work fused in front of the consuming matmul."""
    ms = jnp.mean(x * x, axis=-1, keepdims=True)
    return x * jax.lax.rsqrt(ms + eps) * w


def _sigmoid(x):
    return 1.0 / (1.0 + jnp.exp(-x))


def _silu(x):
    return x * _sigmoid(x)


def _rope(x, cos, sin, rot):
    # x, cos, sin: (S, R); rot: (R, R) constant so that x @ rot == concat([-x2, x1]).
    rot_half = jnp.dot(x, rot, preferred_element_type=jnp.float32)
    return x * cos + rot_half * sin


# ----------------------- fused per-block attention kernel --------------------

def _attn_block_kernel(x_ref, bias_ref, cos_ref, sin_ref, rot_ref,
                       attn_norm_ref, w_dq_ref, q_norm_ref,
                       w_uq_nope_ref, w_uq_rope_ref,
                       w_dkv_ref, kv_norm_ref,
                       w_ukv_nope_ref, w_ukv_v_ref, w_kr_ref,
                       w_o_ref, o_ref, *, eps, n_heads, scale):
    x = x_ref[...]                                         # (S, D)
    h = _rms(x, attn_norm_ref[...], eps)                   # (S, D)

    cq = _rms(_dot(h, w_dq_ref[...]), q_norm_ref[...], eps)     # (S, q_lora)
    ckv = _rms(_dot(h, w_dkv_ref[...]), kv_norm_ref[...], eps)  # (S, kv_lora)

    cos = cos_ref[...]
    sin = sin_ref[...]
    rot = rot_ref[...]
    k_pe = _rope(_dot(h, w_kr_ref[...]), cos, sin, rot)         # (S, rope), shared

    bias = bias_ref[...]                                        # (S, S) additive
    attn_out = jnp.zeros_like(x)
    for hh in range(n_heads):
        q_nope = _dot(cq, w_uq_nope_ref[hh])                    # (S, nope)
        q_pe = _rope(_dot(cq, w_uq_rope_ref[hh]), cos, sin, rot)  # (S, rope)
        k_nope = _dot(ckv, w_ukv_nope_ref[hh])                  # (S, nope)
        v_h = _dot(ckv, w_ukv_v_ref[hh])                        # (S, v)

        # [q_nope|q_pe] @ [k_nope|k_pe]^T == q_nope@k_nope^T + q_pe@k_pe^T
        s = (_dot_nt(q_nope, k_nope) + _dot_nt(q_pe, k_pe)) * scale + bias
        m = jnp.max(s, axis=-1, keepdims=True)
        p = jnp.exp(s - m)
        l = jnp.sum(p, axis=-1, keepdims=True)
        p = p * pl.reciprocal(l, approx=True)
        o_h = _dot(p, v_h)                                      # (S, v)
        attn_out = attn_out + _dot(o_h, w_o_ref[hh])            # (S, D)

    o_ref[...] = x + attn_out


def attention_block(x2, bias, cos, sin, rot, attn_norm, mla, B, S):
    c = CFG
    D, H = c['emb_dim'], c['n_heads']
    nope, rope, vdim = c['qk_nope_dim'], c['qk_rope_dim'], c['v_head_dim']
    ql, kvl = c['q_lora_rank'], c['kv_lora_rank']
    scale = 1.0 / math.sqrt(nope + rope)
    kern = functools.partial(_attn_block_kernel, eps=c['rms_eps'],
                             n_heads=H, scale=scale)

    def rep2(shape):
        return pl.BlockSpec(shape, lambda b: (0, 0))

    def rep3(shape):
        return pl.BlockSpec(shape, lambda b: (0, 0, 0))

    return pl.pallas_call(
        kern,
        out_shape=jax.ShapeDtypeStruct((B * S, D), jnp.float32),
        grid=(B,),
        in_specs=[
            pl.BlockSpec((S, D), lambda b: (b, 0)),       # x (per-batch rows)
            rep2((S, S)),                                 # additive mask bias
            rep2((S, rope)), rep2((S, rope)),             # cos, sin
            rep2((rope, rope)),                           # rotate-half matrix
            rep2((1, D)),                                 # attn_norm
            rep2((D, ql)), rep2((1, ql)),                 # w_dq, q_norm
            rep3((H, ql, nope)), rep3((H, ql, rope)),     # w_uq split per head
            rep2((D, kvl)), rep2((1, kvl)),               # w_dkv, kv_norm
            rep3((H, kvl, nope)), rep3((H, kvl, vdim)),   # w_ukv split per head
            rep2((D, rope)),                              # w_kr
            rep3((H, vdim, D)),                           # w_o split per head
        ],
        out_specs=pl.BlockSpec((S, D), lambda b: (b, 0)),
        compiler_params=pltpu.CompilerParams(
            dimension_semantics=("parallel",)),
    )(x2, bias, cos, sin, rot,
      attn_norm.reshape(1, D), mla['w_dq'], mla['q_norm'].reshape(1, ql),
      mla['w_uq_nope'], mla['w_uq_rope'],
      mla['w_dkv'], mla['kv_norm'].reshape(1, kvl),
      mla['w_ukv_nope'], mla['w_ukv_v'],
      mla['w_kr'], mla['w_o'])


# ----------------------- fused dense FFN block kernel -------------------------

def _ffn_block_kernel(x_ref, norm_ref, wg_ref, wu_ref, wd_ref, o_ref, *, eps):
    x = x_ref[...]
    h = _rms(x, norm_ref[...], eps)
    g = _dot(h, wg_ref[...])
    u = _dot(h, wu_ref[...])
    o_ref[...] = x + _dot(_silu(g) * u, wd_ref[...])


def ffn_block(x2, ffn_norm, ffn, B, S):
    c = CFG
    D = c['emb_dim']
    Hd = ffn['wg'].shape[1]
    kern = functools.partial(_ffn_block_kernel, eps=c['rms_eps'])
    return pl.pallas_call(
        kern,
        out_shape=jax.ShapeDtypeStruct((B * S, D), jnp.float32),
        grid=(B,),
        in_specs=[
            pl.BlockSpec((S, D), lambda b: (b, 0)),
            pl.BlockSpec((1, D), lambda b: (0, 0)),
            pl.BlockSpec((D, Hd), lambda b: (0, 0)),
            pl.BlockSpec((D, Hd), lambda b: (0, 0)),
            pl.BlockSpec((Hd, D), lambda b: (0, 0)),
        ],
        out_specs=pl.BlockSpec((S, D), lambda b: (b, 0)),
        compiler_params=pltpu.CompilerParams(
            dimension_semantics=("parallel",)),
    )(x2, ffn_norm.reshape(1, D), ffn['wg'], ffn['wu'], ffn['wd'])


# ----------------------- fused MoE FFN block kernel ---------------------------

def _moe_block_kernel(x_ref, norm_ref, router_ref,
                      wg_ref, wu_ref, wd_ref,
                      swg_ref, swu_ref, swd_ref, o_ref,
                      *, eps, n_experts, top_k):
    x = x_ref[...]
    h = _rms(x, norm_ref[...], eps)
    logits = _dot(h, router_ref[...])                    # (S, E)
    scores = _sigmoid(logits)

    # In-kernel sigmoid top-k routing (ties -> lower index, matching lax.top_k),
    # implemented with per-column VPU compares (E is tiny and static).
    score_cols = [scores[:, e:e + 1] for e in range(n_experts)]
    gate_cols = []
    for e in range(n_experts):
        cnt = jnp.zeros_like(score_cols[e])
        for j in range(n_experts):
            if j == e:
                continue
            beats = score_cols[j] > score_cols[e]
            if j < e:
                beats = beats | (score_cols[j] == score_cols[e])
            cnt = cnt + beats.astype(jnp.float32)
        gate_cols.append(jnp.where(cnt < float(top_k), score_cols[e], 0.0))
    denom = gate_cols[0]
    for e in range(1, n_experts):
        denom = denom + gate_cols[e]

    # TODO(synk): experts are computed densely and masked by their (possibly zero)
    # gate; routed_scaling_factor / e_score_correction_bias of DeepSeek-V3 omitted.
    acc = jnp.zeros_like(x)
    for e in range(n_experts):
        g = _dot(h, wg_ref[e])
        u = _dot(h, wu_ref[e])
        ex = _dot(_silu(g) * u, wd_ref[e])
        acc = acc + (gate_cols[e] / denom) * ex

    g = _dot(h, swg_ref[...])
    u = _dot(h, swu_ref[...])
    acc = acc + _dot(_silu(g) * u, swd_ref[...])         # shared expert

    o_ref[...] = x + acc


def moe_block(x2, ffn_norm, moe, B, S):
    c = CFG
    D, E, K = c['emb_dim'], c['n_experts'], c['top_k']
    Hm, Hs = c['moe_hidden'], c['shared_hidden']
    kern = functools.partial(_moe_block_kernel, eps=c['rms_eps'],
                             n_experts=E, top_k=K)
    return pl.pallas_call(
        kern,
        out_shape=jax.ShapeDtypeStruct((B * S, D), jnp.float32),
        grid=(B,),
        in_specs=[
            pl.BlockSpec((S, D), lambda b: (b, 0)),
            pl.BlockSpec((1, D), lambda b: (0, 0)),
            pl.BlockSpec((D, E), lambda b: (0, 0)),
            pl.BlockSpec((E, D, Hm), lambda b: (0, 0, 0)),   # stacked expert wg
            pl.BlockSpec((E, D, Hm), lambda b: (0, 0, 0)),   # stacked expert wu
            pl.BlockSpec((E, Hm, D), lambda b: (0, 0, 0)),   # stacked expert wd
            pl.BlockSpec((D, Hs), lambda b: (0, 0)),
            pl.BlockSpec((D, Hs), lambda b: (0, 0)),
            pl.BlockSpec((Hs, D), lambda b: (0, 0)),
        ],
        out_specs=pl.BlockSpec((S, D), lambda b: (b, 0)),
        compiler_params=pltpu.CompilerParams(
            dimension_semantics=("parallel",)),
    )(x2, ffn_norm.reshape(1, D), moe['router'],
      moe['wg'], moe['wu'], moe['wd'],
      moe['shared']['wg'], moe['shared']['wu'], moe['shared']['wd'])


# ----------------------- fused final-norm + LM-head kernel --------------------

def _head_kernel(x_ref, norm_ref, w_ref, o_ref, *, eps):
    h = _rms(x_ref[...], norm_ref[...], eps)
    o_ref[...] = _dot(h, w_ref[...])        # (tile, V) with V=128 -> lane-dense store


def lm_head(x2, final_ln, out_w, T):
    c = CFG
    D, V = c['emb_dim'], c['vocab_size']
    TM = 8
    kern = functools.partial(_head_kernel, eps=c['rms_eps'])
    return pl.pallas_call(
        kern,
        out_shape=jax.ShapeDtypeStruct((T, V), jnp.float32),
        grid=(T // TM,),
        in_specs=[
            pl.BlockSpec((TM, D), lambda i: (i, 0)),
            pl.BlockSpec((1, D), lambda i: (0, 0)),
            pl.BlockSpec((D, V), lambda i: (0, 0)),
        ],
        out_specs=pl.BlockSpec((TM, V), lambda i: (i, 0)),
        compiler_params=pltpu.CompilerParams(
            dimension_semantics=("parallel",)),
    )(x2, final_ln.reshape(1, D), out_w)


# ------------------------------ model glue ----------------------------------

def compute_rope_params(seq_len, rope_dim, theta):
    inv_freq = 1.0 / (theta ** (jnp.arange(0, rope_dim, 2, dtype=jnp.float32)
                                / rope_dim))
    pos = jnp.arange(seq_len, dtype=jnp.float32)
    ang = pos[:, None] * inv_freq[None, :]
    ang = jnp.concatenate([ang, ang], axis=-1)          # (S, rope_dim)
    return jnp.cos(ang), jnp.sin(ang)


def _rotate_half_matrix(r):
    """Constant (r, r) matrix R with  x @ R == concat([-x[:, r/2:], x[:, :r/2]])."""
    half = r // 2
    R = jnp.zeros((r, r), jnp.float32)
    idx = jnp.arange(half)
    R = R.at[idx + half, idx].set(-1.0)
    R = R.at[idx, idx + half].set(1.0)
    return R


def main_model_forward(params, tokens, mask, cos, sin):
    c = CFG
    B, S = tokens.shape
    D = c['emb_dim']
    T = B * S
    # TODO(synk): embedding gather kept as plain-JAX take (no Pallas gather needed at this scale).
    x2 = jnp.take(params['emb'], tokens.reshape(-1), axis=0).astype(jnp.float32)
    # Finite additive mask bias (True == masked), built once and reused by every block.
    bias = jnp.where(mask, jnp.float32(-1e30), jnp.float32(0.0))
    rot = _rotate_half_matrix(c['qk_rope_dim'])
    cos = cos.astype(jnp.float32)
    sin = sin.astype(jnp.float32)

    for bp in params['blocks']:
        x2 = attention_block(x2, bias, cos, sin, rot,
                             bp['attn_norm'], bp['mla'], B, S)
        if 'moe' in bp:
            x2 = moe_block(x2, bp['ffn_norm'], bp['moe'], B, S)
        else:
            x2 = ffn_block(x2, bp['ffn_norm'], bp['ffn'], B, S)

    h_curr = x2.reshape(B, S, D)
    logits = lm_head(x2, params['final_ln'], params['out_w'], T)
    return logits.reshape(B, S, c['vocab_size']), h_curr


# ------------------------------ param init ----------------------------------

def init_params(key):
    c = CFG
    D, H = c['emb_dim'], c['n_heads']
    nope, rope, vdim = c['qk_nope_dim'], c['qk_rope_dim'], c['v_head_dim']
    ql, kvl, E = c['q_lora_rank'], c['kv_lora_rank'], c['n_experts']

    def nrm(k, shape):
        return 0.02 * jax.random.normal(k, shape, jnp.float32)

    keys = iter(jax.random.split(key, 512))
    nk = lambda: next(keys)

    def ffn_params(hidden):
        return dict(wg=nrm(nk(), (D, hidden)),
                    wu=nrm(nk(), (D, hidden)),
                    wd=nrm(nk(), (hidden, D)))

    blocks = []
    for layer in range(c['n_layers']):
        mla = dict(
            w_dq=nrm(nk(), (D, ql)),
            q_norm=jnp.ones((ql,), jnp.float32),
            w_uq_nope=nrm(nk(), (H, ql, nope)),    # per-head, nope part
            w_uq_rope=nrm(nk(), (H, ql, rope)),    # per-head, rope part
            w_dkv=nrm(nk(), (D, kvl)),
            kv_norm=jnp.ones((kvl,), jnp.float32),
            w_ukv_nope=nrm(nk(), (H, kvl, nope)),  # per-head, key-nope part
            w_ukv_v=nrm(nk(), (H, kvl, vdim)),     # per-head, value part
            w_kr=nrm(nk(), (D, rope)),
            w_o=nrm(nk(), (H, vdim, D)),           # per-head output projection
        )
        bp = dict(attn_norm=jnp.ones((D,), jnp.float32),
                  ffn_norm=jnp.ones((D,), jnp.float32),
                  mla=mla)
        if layer < c['first_k_dense']:
            bp['ffn'] = ffn_params(c['dense_hidden'])
        else:
            bp['moe'] = dict(
                router=nrm(nk(), (D, E)),
                wg=nrm(nk(), (E, D, c['moe_hidden'])),
                wu=nrm(nk(), (E, D, c['moe_hidden'])),
                wd=nrm(nk(), (E, c['moe_hidden'], D)),
                shared=ffn_params(c['shared_hidden']),
            )
        blocks.append(bp)

    return dict(
        emb=nrm(nk(), (c['vocab_size'], D)),
        blocks=blocks,
        final_ln=jnp.ones((D,), jnp.float32),
        out_w=nrm(nk(), (D, c['vocab_size'])),
    )


# --------------------------------- main --------------------------------------

if __name__ == "__main__":
    B, S = 2, 8
    key = jax.random.PRNGKey(0)
    kp, kt = jax.random.split(key)

    params = init_params(kp)
    tokens = jax.random.randint(kt, (B, S), 0, CFG['vocab_size'], jnp.int32)
    mask = jnp.triu(jnp.ones((S, S), dtype=jnp.bool_), k=1)     # True == masked
    cos, sin = compute_rope_params(S, CFG['qk_rope_dim'], CFG['rope_theta'])

    fwd = jax.jit(main_model_forward)
    logits, h_curr = fwd(params, tokens, mask, cos, sin)
    jax.block_until_ready((logits, h_curr))

    assert logits.shape == (B, S, CFG['vocab_size'])
    assert h_curr.shape == (B, S, CFG['emb_dim'])
    assert bool(jnp.all(jnp.isfinite(logits)))
    print("KERNEL_OK")
</pallas_src>

<mosaic_0001>
module attributes {stable_mosaic.version = 11 : i64} {
  func.func @_ffn_block_kernel(%arg0: i32, %arg1: memref<8x32xf32, #tpu.memory_space<vmem>>, %arg2: memref<1x32xf32, #tpu.memory_space<vmem>>, %arg3: memref<32x64xf32, #tpu.memory_space<vmem>>, %arg4: memref<32x64xf32, #tpu.memory_space<vmem>>, %arg5: memref<64x32xf32, #tpu.memory_space<vmem>>, %arg6: memref<8x32xf32, #tpu.memory_space<vmem>>) attributes {dimension_semantics = [#tpu.dimension_semantics<parallel>], iteration_bounds = array<i64: 2>, scalar_prefetch = 0 : i64, scratch_operands = 0 : i64, tpu.core_type = #tpu.core_type<tc>, window_params = [{transform_indices = @transform_0, window_bounds = array<i64: 8, 32>}, {pipeline_mode = #tpu.pipeline_mode<synchronous>, transform_indices = @transform_1, window_bounds = array<i64: 1, 32>}, {pipeline_mode = #tpu.pipeline_mode<synchronous>, transform_indices = @transform_2, window_bounds = array<i64: 32, 64>}, {pipeline_mode = #tpu.pipeline_mode<synchronous>, transform_indices = @transform_3, window_bounds = array<i64: 32, 64>}, {pipeline_mode = #tpu.pipeline_mode<synchronous>, transform_indices = @transform_4, window_bounds = array<i64: 64, 32>}, {transform_indices = @transform_5, window_bounds = array<i64: 8, 32>}]} {
    %c0 = arith.constant 0 : index
    %c0_0 = arith.constant 0 : index
    %0 = vector.load %arg1[%c0, %c0_0] : memref<8x32xf32, #tpu.memory_space<vmem>>, vector<8x32xf32>
    %c0_1 = arith.constant 0 : index
    %c0_2 = arith.constant 0 : index
    %1 = vector.load %arg2[%c0_1, %c0_2] : memref<1x32xf32, #tpu.memory_space<vmem>>, vector<1x32xf32>
    %2 = arith.mulf %0, %0 : vector<8x32xf32>
    %cst = arith.constant dense<0.000000e+00> : vector<8xf32>
    %3 = vector.multi_reduction <add>, %2, %cst [1] : vector<8x32xf32> to vector<8xf32>
    %4 = vector.shape_cast %3 : vector<8xf32> to vector<8x1xf32>
    %cst_3 = arith.constant 3.200000e+01 : f32
    %5 = vector.broadcast %cst_3 : f32 to vector<8x1xf32>
    %6 = arith.divf %4, %5 : vector<8x1xf32>
    %cst_4 = arith.constant 9.99999997E-7 : f32
    %7 = vector.broadcast %cst_4 : f32 to vector<8x1xf32>
    %8 = arith.addf %6, %7 : vector<8x1xf32>
    %9 = math.rsqrt %8 : vector<8x1xf32>
    %10 = vector.broadcast %9 : vector<8x1xf32> to vector<8x32xf32>
    %11 = arith.mulf %0, %10 : vector<8x32xf32>
    %12 = vector.broadcast %1 : vector<1x32xf32> to vector<8x32xf32>
    %13 = arith.mulf %11, %12 : vector<8x32xf32>
    %c0_5 = arith.constant 0 : index
    %c0_6 = arith.constant 0 : index
    %14 = vector.load %arg3[%c0_5, %c0_6] : memref<32x64xf32, #tpu.memory_space<vmem>>, vector<32x64xf32>
    %15 = arith.truncf %13 : vector<8x32xf32> to vector<8x32xbf16>
    %16 = arith.truncf %14 : vector<32x64xf32> to vector<32x64xbf16>
    %cst_7 = arith.constant dense<0.000000e+00> : vector<8x64xf32>
    %17 = tpu.matmul %15, %16, %cst_7 {dimension_numbers = #tpu.dot_dimension_numbers<[1], [0], [0], [1], [0, 0, 1, 1], [], []>} : vector<8x32xbf16>, vector<32x64xbf16>, vector<8x64xf32> -> vector<8x64xf32>
    %c0_8 = arith.constant 0 : index
    %c0_9 = arith.constant 0 : index
    %18 = vector.load %arg4[%c0_8, %c0_9] : memref<32x64xf32, #tpu.memory_space<vmem>>, vector<32x64xf32>
    %19 = arith.truncf %13 : vector<8x32xf32> to vector<8x32xbf16>
    %20 = arith.truncf %18 : vector<32x64xf32> to vector<32x64xbf16>
    %cst_10 = arith.constant dense<0.000000e+00> : vector<8x64xf32>
    %21 = tpu.matmul %19, %20, %cst_10 {dimension_numbers = #tpu.dot_dimension_numbers<[1], [0], [0], [1], [0, 0, 1, 1], [], []>} : vector<8x32xbf16>, vector<32x64xbf16>, vector<8x64xf32> -> vector<8x64xf32>
    %cst_11 = arith.constant 0.000000e+00 : f32
    %22 = vector.broadcast %cst_11 : f32 to vector<8x64xf32>
    %23 = arith.subf %22, %17 : vector<8x64xf32>
    %24 = math.exp %23 : vector<8x64xf32>
    %cst_12 = arith.constant 1.000000e+00 : f32
    %25 = vector.broadcast %cst_12 : f32 to vector<8x64xf32>
    %26 = arith.addf %25, %24 : vector<8x64xf32>
    %cst_13 = arith.constant 1.000000e+00 : f32
    %27 = vector.broadcast %cst_13 : f32 to vector<8x64xf32>
    %28 = arith.divf %27, %26 : vector<8x64xf32>
    %29 = arith.mulf %17, %28 : vector<8x64xf32>
    %30 = arith.mulf %29, %21 : vector<8x64xf32>
    %c0_14 = arith.constant 0 : index
    %c0_15 = arith.constant 0 : index
    %31 = vector.load %arg5[%c0_14, %c0_15] : memref<64x32xf32, #tpu.memory_space<vmem>>, vector<64x32xf32>
    %32 = arith.truncf %30 : vector<8x64xf32> to vector<8x64xbf16>
    %33 = arith.truncf %31 : vector<64x32xf32> to vector<64x32xbf16>
    %cst_16 = arith.constant dense<0.000000e+00> : vector<8x32xf32>
    %34 = tpu.matmul %32, %33, %cst_16 {dimension_numbers = #tpu.dot_dimension_numbers<[1], [0], [0], [1], [0, 0, 1, 1], [], []>} : vector<8x64xbf16>, vector<64x32xbf16>, vector<8x32xf32> -> vector<8x32xf32>
    %35 = arith.addf %0, %34 : vector<8x32xf32>
    %c0_17 = arith.constant 0 : index
    %c0_18 = arith.constant 0 : index
    %36 = vector.load %arg6[%c0_17, %c0_18] : memref<8x32xf32, #tpu.memory_space<vmem>>, vector<8x32xf32>
    tpu.vector_store %arg6[%c0_17, %c0_18], %35 {strides = array<i32>} : memref<8x32xf32, #tpu.memory_space<vmem>>, vector<8x32xf32>,
    return
  }
  func.func @transform_0(%arg0: i32) -> (i32, i32) {
    %c0_i32 = arith.constant 0 : i32
    %c0_i32_0 = arith.constant 0 : i32
    return %arg0, %c0_i32 : i32, i32
  }
  func.func @transform_1(%arg0: i32) -> (i32, i32) {
    %c0_i32 = arith.constant 0 : i32
    %c0_i32_0 = arith.constant 0 : i32
    %c0_i32_1 = arith.constant 0 : i32
    return %c0_i32, %c0_i32_0 : i32, i32
  }
  func.func @transform_2(%arg0: i32) -> (i32, i32) {
    %c0_i32 = arith.constant 0 : i32
    %c0_i32_0 = arith.constant 0 : i32
    %c0_i32_1 = arith.constant 0 : i32
    return %c0_i32, %c0_i32_0 : i32, i32
  }
  func.func @transform_3(%arg0: i32) -> (i32, i32) {
    %c0_i32 = arith.constant 0 : i32
    %c0_i32_0 = arith.constant 0 : i32
    %c0_i32_1 = arith.constant 0 : i32
    return %c0_i32, %c0_i32_0 : i32, i32
  }
  func.func @transform_4(%arg0: i32) -> (i32, i32) {
    %c0_i32 = arith.constant 0 : i32
    %c0_i32_0 = arith.constant 0 : i32
    %c0_i32_1 = arith.constant 0 : i32
    return %c0_i32, %c0_i32_0 : i32, i32
  }
  func.func @transform_5(%arg0: i32) -> (i32, i32) {
    %c0_i32 = arith.constant 0 : i32
    %c0_i32_0 = arith.constant 0 : i32
    return %arg0, %c0_i32 : i32, i32
  }
}

module attributes {stable_mosaic.version = 11 : i64} {
  func.func @_attn_block_kernel(%arg0: i32, %arg1: memref<8x32xf32, #tpu.memory_space<vmem>>, %arg2: memref<8x8xf32, #tpu.memory_space<vmem>>, %arg3: memref<8x8xf32, #tpu.memory_space<vmem>>, %arg4: memref<8x8xf32, #tpu.memory_space<vmem>>, %arg5: memref<8x8xf32, #tpu.memory_space<vmem>>, %arg6: memref<1x32xf32, #tpu.memory_space<vmem>>, %arg7: memref<32x24xf32, #tpu.memory_space<vmem>>, %arg8: memref<1x24xf32, #tpu.memory_space<vmem>>, %arg9: memref<2x24x16xf32, #tpu.memory_space<vmem>>, %arg10: memref<2x24x8xf32, #tpu.memory_space<vmem>>, %arg11: memref<32x16xf32, #tpu.memory_space<vmem>>, %arg12: memref<1x16xf32, #tpu.memory_space<vmem>>, %arg13: memref<2x16x16xf32, #tpu.memory_space<vmem>>, %arg14: memref<2x16x16xf32, #tpu.memory_space<vmem>>, %arg15: memref<32x8xf32, #tpu.memory_space<vmem>>, %arg16: memref<2x16x32xf32, #tpu.memory_space<vmem>>, %arg17: memref<8x32xf32, #tpu.memory_space<vmem>>) attributes {dimension_semantics = [#tpu.dimension_semantics<parallel>], iteration_bounds = array<i64: 2>, scalar_prefetch = 0 : i64, scratch_operands = 0 : i64, tpu.core_type = #tpu.core_type<tc>, window_params = [{transform_indices = @transform_0, window_bounds = array<i64: 8, 32>}, {pipeline_mode = #tpu.pipeline_mode<synchronous>, transform_indices = @transform_1, window_bounds = array<i64: 8, 8>}, {pipeline_mode = #tpu.pipeline_mode<synchronous>, transform_indices = @transform_2, window_bounds = array<i64: 8, 8>}, {pipeline_mode = #tpu.pipeline_mode<synchronous>, transform_indices = @transform_3, window_bounds = array<i64: 8, 8>}, {pipeline_mode = #tpu.pipeline_mode<synchronous>, transform_indices = @transform_4, window_bounds = array<i64: 8, 8>}, {pipeline_mode = #tpu.pipeline_mode<synchronous>, transform_indices = @transform_5, window_bounds = array<i64: 1, 32>}, {pipeline_mode = #tpu.pipeline_mode<synchronous>, transform_indices = @transform_6, window_bounds = array<i64: 32, 24>}, {pipeline_mode = #tpu.pipeline_mode<synchronous>, transform_indices = @transform_7, window_bounds = array<i64: 1, 24>}, {pipeline_mode = #tpu.pipeline_mode<synchronous>, transform_indices = @transform_8, window_bounds = array<i64: 2, 24, 16>}, {pipeline_mode = #tpu.pipeline_mode<synchronous>, transform_indices = @transform_9, window_bounds = array<i64: 2, 24, 8>}, {pipeline_mode = #tpu.pipeline_mode<synchronous>, transform_indices = @transform_10, window_bounds = array<i64: 32, 16>}, {pipeline_mode = #tpu.pipeline_mode<synchronous>, transform_indices = @transform_11, window_bounds = array<i64: 1, 16>}, {pipeline_mode = #tpu.pipeline_mode<synchronous>, transform_indices = @transform_12, window_bounds = array<i64: 2, 16, 16>}, {pipeline_mode = #tpu.pipeline_mode<synchronous>, transform_indices = @transform_13, window_bounds = array<i64: 2, 16, 16>}, {pipeline_mode = #tpu.pipeline_mode<synchronous>, transform_indices = @transform_14, window_bounds = array<i64: 32, 8>}, {pipeline_mode = #tpu.pipeline_mode<synchronous>, transform_indices = @transform_15, window_bounds = array<i64: 2, 16, 32>}, {transform_indices = @transform_16, window_bounds = array<i64: 8, 32>}]} {
    %c0 = arith.constant 0 : index
    %c0_0 = arith.constant 0 : index
    %0 = vector.load %arg1[%c0, %c0_0] : memref<8x32xf32, #tpu.memory_space<vmem>>, vector<8x32xf32>
    %c0_1 = arith.constant 0 : index
    %c0_2 = arith.constant 0 : index
    %1 = vector.load %arg6[%c0_1, %c0_2] : memref<1x32xf32, #tpu.memory_space<vmem>>, vector<1x32xf32>
    %2 = arith.mulf %0, %0 : vector<8x32xf32>
    %cst = arith.constant dense<0.000000e+00> : vector<8xf32>
    %3 = vector.multi_reduction <add>, %2, %cst [1] : vector<8x32xf32> to vector<8xf32>
    %4 = vector.shape_cast %3 : vector<8xf32> to vector<8x1xf32>
    %cst_3 = arith.constant 3.200000e+01 : f32
    %5 = vector.broadcast %cst_3 : f32 to vector<8x1xf32>
    %6 = arith.divf %4, %5 : vector<8x1xf32>
    %cst_4 = arith.constant 9.99999997E-7 : f32
    %7 = vector.broadcast %cst_4 : f32 to vector<8x1xf32>
    %8 = arith.addf %6, %7 : vector<8x1xf32>
    %9 = math.rsqrt %8 : vector<8x1xf32>
    %10 = vector.broadcast %9 : vector<8x1xf32> to vector<8x32xf32>
    %11 = arith.mulf %0, %10 : vector<8x32xf32>
    %12 = vector.broadcast %1 : vector<1x32xf32> to vector<8x32xf32>
    %13 = arith.mulf %11, %12 : vector<8x32xf32>
    %c0_5 = arith.constant 0 : index
    %c0_6 = arith.constant 0 : index
    %14 = vector.load %arg7[%c0_5, %c0_6] : memref<32x24xf32, #tpu.memory_space<vmem>>, vector<32x24xf32>
    %15 = arith.truncf %13 : vector<8x32xf32> to vector<8x32xbf16>
    %16 = arith.truncf %14 : vector<32x24xf32> to vector<32x24xbf16>
    %cst_7 = arith.constant dense<0.000000e+00> : vector<8x24xf32>
    %17 = tpu.matmul %15, %16, %cst_7 {dimension_numbers = #tpu.dot_dimension_numbers<[1], [0], [0], [1], [0, 0, 1, 1], [], []>} : vector<8x32xbf16>, vector<32x24xbf16>, vector<8x24xf32> -> vector<8x24xf32>
    %c0_8 = arith.constant 0 : index
    %c0_9 = arith.constant 0 : index
    %18 = vector.load %arg8[%c0_8, %c0_9] : memref<1x24xf32, #tpu.memory_space<vmem>>, vector<1x24xf32>
    %19 = arith.mulf %17, %17 : vector<8x24xf32>
    %cst_10 = arith.constant dense<0.000000e+00> : vector<8xf32>
    %20 = vector.multi_reduction <add>, %19, %cst_10 [1] : vector<8x24xf32> to vector<8xf32>
    %21 = vector.shape_cast %20 : vector<8xf32> to vector<8x1xf32>
    %cst_11 = arith.constant 2.400000e+01 : f32
    %22 = vector.broadcast %cst_11 : f32 to vector<8x1xf32>
    %23 = arith.divf %21, %22 : vector<8x1xf32>
    %cst_12 = arith.constant 9.99999997E-7 : f32
    %24 = vector.broadcast %cst_12 : f32 to vector<8x1xf32>
    %25 = arith.addf %23, %24 : vector<8x1xf32>
    %26 = math.rsqrt %25 : vector<8x1xf32>
    %27 = vector.broadcast %26 : vector<8x1xf32> to vector<8x24xf32>
    %28 = arith.mulf %17, %27 : vector<8x24xf32>
    %29 = vector.broadcast %18 : vector<1x24xf32> to vector<8x24xf32>
    %30 = arith.mulf %28, %29 : vector<8x24xf32>
    %c0_13 = arith.constant 0 : index
    %c0_14 = arith.constant 0 : index
    %31 = vector.load %arg11[%c0_13, %c0_14] : memref<32x16xf32, #tpu.memory_space<vmem>>, vector<32x16xf32>
    %32 = arith.truncf %13 : vector<8x32xf32> to vector<8x32xbf16>
    %33 = arith.truncf %31 : vector<32x16xf32> to vector<32x16xbf16>
    %cst_15 = arith.constant dense<0.000000e+00> : vector<8x16xf32>
    %34 = tpu.matmul %32, %33, %cst_15 {dimension_numbers = #tpu.dot_dimension_numbers<[1], [0], [0], [1], [0, 0, 1, 1], [], []>} : vector<8x32xbf16>, vector<32x16xbf16>, vector<8x16xf32> -> vector<8x16xf32>
    %c0_16 = arith.constant 0 : index
    %c0_17 = arith.constant 0 : index
    %35 = vector.load %arg12[%c0_16, %c0_17] : memref<1x16xf32, #tpu.memory_space<vmem>>, vector<1x16xf32>
    %36 = arith.mulf %34, %34 : vector<8x16xf32>
    %cst_18 = arith.constant dense<0.000000e+00> : vector<8xf32>
    %37 = vector.multi_reduction <add>, %36, %cst_18 [1] : vector<8x16xf32> to vector<8xf32>
    %38 = vector.shape_cast %37 : vector<8xf32> to vector<8x1xf32>
    %cst_19 = arith.constant 1.600000e+01 : f32
    %39 = vector.broadcast %cst_19 : f32 to vector<8x1xf32>
    %40 = arith.divf %38, %39 : vector<8x1xf32>
    %cst_20 = arith.constant 9.99999997E-7 : f32
    %41 = vector.broadcast %cst_20 : f32 to vector<8x1xf32>
    %42 = arith.addf %40, %41 : vector<8x1xf32>
    %43 = math.rsqrt %42 : vector<8x1xf32>
    %44 = vector.broadcast %43 : vector<8x1xf32> to vector<8x16xf32>
    %45 = arith.mulf %34, %44 : vector<8x16xf32>
    %46 = vector.broadcast %35 : vector<1x16xf32> to vector<8x16xf32>
    %47 = arith.mulf %45, %46 : vector<8x16xf32>
    %c0_21 = arith.constant 0 : index
    %c0_22 = arith.constant 0 : index
    %48 = vector.load %arg3[%c0_21, %c0_22] : memref<8x8xf32, #tpu.memory_space<vmem>>, vector<8x8xf32>
    %c0_23 = arith.constant 0 : index
    %c0_24 = arith.constant 0 : index
    %49 = vector.load %arg4[%c0_23, %c0_24] : memref<8x8xf32, #tpu.memory_space<vmem>>, vector<8x8xf32>
    %c0_25 = arith.constant 0 : index
    %c0_26 = arith.constant 0 : index
    %50 = vector.load %arg5[%c0_25, %c0_26] : memref<8x8xf32, #tpu.memory_space<vmem>>, vector<8x8xf32>
    %c0_27 = arith.constant 0 : index
    %c0_28 = arith.constant 0 : index
    %51 = vector.load %arg15[%c0_27, %c0_28] : memref<32x8xf32, #tpu.memory_space<vmem>>, vector<32x8xf32>
    %52 = arith.truncf %13 : vector<8x32xf32> to vector<8x32xbf16>
    %53 = arith.truncf %51 : vector<32x8xf32> to vector<32x8xbf16>
    %cst_29 = arith.constant dense<0.000000e+00> : vector<8x8xf32>
    %54 = tpu.matmul %52, %53, %cst_29 {dimension_numbers = #tpu.dot_dimension_numbers<[1], [0], [0], [1], [0, 0, 1, 1], [], []>} : vector<8x32xbf16>, vector<32x8xbf16>, vector<8x8xf32> -> vector<8x8xf32>
    %cst_30 = arith.constant dense<0.000000e+00> : vector<8x8xf32>
    %55 = tpu.matmul %54, %50, %cst_30 {dimension_numbers = #tpu.dot_dimension_numbers<[1], [0], [0], [1], [0, 0, 1, 1], [], []>} : vector<8x8xf32>, vector<8x8xf32>, vector<8x8xf32> -> vector<8x8xf32>
    %56 = arith.mulf %54, %48 : vector<8x8xf32>
    %57 = arith.mulf %55, %49 : vector<8x8xf32>
    %58 = arith.addf %56, %57 : vector<8x8xf32>
    %c0_31 = arith.constant 0 : index
    %c0_32 = arith.constant 0 : index
    %59 = vector.load %arg2[%c0_31, %c0_32] : memref<8x8xf32, #tpu.memory_space<vmem>>, vector<8x8xf32>
    %cst_33 = arith.constant 0.000000e+00 : f32
    %60 = vector.broadcast %cst_33 : f32 to vector<8x32xf32>
    %c0_34 = arith.constant 0 : index
    %c0_35 = arith.constant 0 : index
    %c0_36 = arith.constant 0 : index
    %61 = vector.load %arg9[%c0_34, %c0_35, %c0_36] : memref<2x24x16xf32, #tpu.memory_space<vmem>>, vector<1x24x16xf32>
    %62 = vector.shape_cast %61 : vector<1x24x16xf32> to vector<24x16xf32>
    %63 = arith.truncf %30 : vector<8x24xf32> to vector<8x24xbf16>
    %64 = arith.truncf %62 : vector<24x16xf32> to vector<24x16xbf16>
    %cst_37 = arith.constant dense<0.000000e+00> : vector<8x16xf32>
    %65 = tpu.matmul %63, %64, %cst_37 {dimension_numbers = #tpu.dot_dimension_numbers<[1], [0], [0], [1], [0, 0, 1, 1], [], []>} : vector<8x24xbf16>, vector<24x16xbf16>, vector<8x16xf32> -> vector<8x16xf32>
    %c0_38 = arith.constant 0 : index
    %c0_39 = arith.constant 0 : index
    %c0_40 = arith.constant 0 : index
    %66 = vector.load %arg10[%c0_38, %c0_39, %c0_40] : memref<2x24x8xf32, #tpu.memory_space<vmem>>, vector<1x24x8xf32>
    %67 = vector.shape_cast %66 : vector<1x24x8xf32> to vector<24x8xf32>
    %68 = arith.truncf %30 : vector<8x24xf32> to vector<8x24xbf16>
    %69 = arith.truncf %67 : vector<24x8xf32> to vector<24x8xbf16>
    %cst_41 = arith.constant dense<0.000000e+00> : vector<8x8xf32>
    %70 = tpu.matmul %68, %69, %cst_41 {dimension_numbers = #tpu.dot_dimension_numbers<[1], [0], [0], [1], [0, 0, 1, 1], [], []>} : vector<8x24xbf16>, vector<24x8xbf16>, vector<8x8xf32> -> vector<8x8xf32>
    %cst_42 = arith.constant dense<0.000000e+00> : vector<8x8xf32>
    %71 = tpu.matmul %70, %50, %cst_42 {dimension_numbers = #tpu.dot_dimension_numbers<[1], [0], [0], [1], [0, 0, 1, 1], [], []>} : vector<8x8xf32>, vector<8x8xf32>, vector<8x8xf32> -> vector<8x8xf32>
    %72 = arith.mulf %70, %48 : vector<8x8xf32>
    %73 = arith.mulf %71, %49 : vector<8x8xf32>
    %74 = arith.addf %72, %73 : vector<8x8xf32>
    %c0_43 = arith.constant 0 : index
    %c0_44 = arith.constant 0 : index
    %c0_45 = arith.constant 0 : index
    %75 = vector.load %arg13[%c0_43, %c0_44, %c0_45] : memref<2x16x16xf32, #tpu.memory_space<vmem>>, vector<1x16x16xf32>
    %76 = vector.shape_cast %75 : vector<1x16x16xf32> to vector<16x16xf32>
    %77 = arith.truncf %47 : vector<8x16xf32> to vector<8x16xbf16>
    %78 = arith.truncf %76 : vector<16x16xf32> to vector<16x16xbf16>
    %cst_46 = arith.constant dense<0.000000e+00> : vector<8x16xf32>
    %79 = tpu.matmul %77, %78, %cst_46 {dimension_numbers = #tpu.dot_dimension_numbers<[1], [0], [0], [1], [0, 0, 1, 1], [], []>} : vector<8x16xbf16>, vector<16x16xbf16>, vector<8x16xf32> -> vector<8x16xf32>
    %c0_47 = arith.constant 0 : index
    %c0_48 = arith.constant 0 : index
    %c0_49 = arith.constant 0 : index
    %80 = vector.load %arg14[%c0_47, %c0_48, %c0_49] : memref<2x16x16xf32, #tpu.memory_space<vmem>>, vector<1x16x16xf32>
    %81 = vector.shape_cast %80 : vector<1x16x16xf32> to vector<16x16xf32>
    %82 = arith.truncf %47 : vector<8x16xf32> to vector<8x16xbf16>
    %83 = arith.truncf %81 : vector<16x16xf32> to vector<16x16xbf16>
    %cst_50 = arith.constant dense<0.000000e+00> : vector<8x16xf32>
    %84 = tpu.matmul %82, %83, %cst_50 {dimension_numbers = #tpu.dot_dimension_numbers<[1], [0], [0], [1], [0, 0, 1, 1], [], []>} : vector<8x16xbf16>, vector<16x16xbf16>, vector<8x16xf32> -> vector<8x16xf32>
    %85 = arith.truncf %65 : vector<8x16xf32> to vector<8x16xbf16>
    %86 = arith.truncf %79 : vector<8x16xf32> to vector<8x16xbf16>
    %cst_51 = arith.constant dense<0.000000e+00> : vector<8x8xf32>
    %87 = tpu.matmul %85, %86, %cst_51 {dimension_numbers = #tpu.dot_dimension_numbers<[1], [1], [0], [0], [0, 0, 1, 0], [], []>} : vector<8x16xbf16>, vector<8x16xbf16>, vector<8x8xf32> -> vector<8x8xf32>
    %88 = arith.truncf %74 : vector<8x8xf32> to vector<8x8xbf16>
    %89 = arith.truncf %58 : vector<8x8xf32> to vector<8x8xbf16>
    %cst_52 = arith.constant dense<0.000000e+00> : vector<8x8xf32>
    %90 = tpu.matmul %88, %89, %cst_52 {dimension_numbers = #tpu.dot_dimension_numbers<[1], [1], [0], [0], [0, 0, 1, 0], [], []>} : vector<8x8xbf16>, vector<8x8xbf16>, vector<8x8xf32> -> vector<8x8xf32>
    %91 = arith.addf %87, %90 : vector<8x8xf32>
    %cst_53 = arith.constant 0.204124153 : f32
    %92 = vector.broadcast %cst_53 : f32 to vector<8x8xf32>
    %93 = arith.mulf %91, %92 : vector<8x8xf32>
    %94 = arith.addf %93, %59 : vector<8x8xf32>
    %cst_54 = arith.constant dense<0xFF800000> : vector<8xf32>
    %95 = vector.multi_reduction <maximumf>, %94, %cst_54 [1] : vector<8x8xf32> to vector<8xf32>
    %96 = vector.shape_cast %95 : vector<8xf32> to vector<8x1xf32>
    %97 = vector.broadcast %96 : vector<8x1xf32> to vector<8x8xf32>
    %98 = arith.subf %94, %97 : vector<8x8xf32>
    %99 = math.exp %98 : vector<8x8xf32>
    %cst_55 = arith.constant dense<0.000000e+00> : vector<8xf32>
    %100 = vector.multi_reduction <add>, %99, %cst_55 [1] : vector<8x8xf32> to vector<8xf32>
    %101 = vector.shape_cast %100 : vector<8xf32> to vector<8x1xf32>
    %102 = tpu.reciprocal %101 {approx = true} : vector<8x1xf32> -> vector<8x1xf32>
    %103 = vector.broadcast %102 : vector<8x1xf32> to vector<8x8xf32>
    %104 = arith.mulf %99, %103 : vector<8x8xf32>
    %105 = arith.truncf %104 : vector<8x8xf32> to vector<8x8xbf16>
    %106 = arith.truncf %84 : vector<8x16xf32> to vector<8x16xbf16>
    %cst_56 = arith.constant dense<0.000000e+00> : vector<8x16xf32>
    %107 = tpu.matmul %105, %106, %cst_56 {dimension_numbers = #tpu.dot_dimension_numbers<[1], [0], [0], [1], [0, 0, 1, 1], [], []>} : vector<8x8xbf16>, vector<8x16xbf16>, vector<8x16xf32> -> vector<8x16xf32>
    %c0_57 = arith.constant 0 : index
    %c0_58 = arith.constant 0 : index
    %c0_59 = arith.constant 0 : index
    %108 = vector.load %arg16[%c0_57, %c0_58, %c0_59] : memref<2x16x32xf32, #tpu.memory_space<vmem>>, vector<1x16x32xf32>
    %109 = vector.shape_cast %108 : vector<1x16x32xf32> to vector<16x32xf32>
    %110 = arith.truncf %107 : vector<8x16xf32> to vector<8x16xbf16>
    %111 = arith.truncf %109 : vector<16x32xf32> to vector<16x32xbf16>
    %cst_60 = arith.constant dense<0.000000e+00> : vector<8x32xf32>
    %112 = tpu.matmul %110, %111, %cst_60 {dimension_numbers = #tpu.dot_dimension_numbers<[1], [0], [0], [1], [0, 0, 1, 1], [], []>} : vector<8x16xbf16>, vector<16x32xbf16>, vector<8x32xf32> -> vector<8x32xf32>
    %113 = arith.addf %60, %112 : vector<8x32xf32>
    %c1 = arith.constant 1 : index
    %c0_61 = arith.constant 0 : index
    %c0_62 = arith.constant 0 : index
    %114 = vector.load %arg9[%c1, %c0_61, %c0_62] : memref<2x24x16xf32, #tpu.memory_space<vmem>>, vector<1x24x16xf32>
    %115 = vector.shape_cast %114 : vector<1x24x16xf32> to vector<24x16xf32>
    %116 = arith.truncf %30 : vector<8x24xf32> to vector<8x24xbf16>
    %117 = arith.truncf %115 : vector<24x16xf32> to vector<24x16xbf16>
    %cst_63 = arith.constant dense<0.000000e+00> : vector<8x16xf32>
    %118 = tpu.matmul %116, %117, %cst_63 {dimension_numbers = #tpu.dot_dimension_numbers<[1], [0], [0], [1], [0, 0, 1, 1], [], []>} : vector<8x24xbf16>, vector<24x16xbf16>, vector<8x16xf32> -> vector<8x16xf32>
    %c1_64 = arith.constant 1 : index
    %c0_65 = arith.constant 0 : index
    %c0_66 = arith.constant 0 : index
    %119 = vector.load %arg10[%c1_64, %c0_65, %c0_66] : memref<2x24x8xf32, #tpu.memory_space<vmem>>, vector<1x24x8xf32>
    %120 = vector.shape_cast %119 : vector<1x24x8xf32> to vector<24x8xf32>
    %121 = arith.truncf %30 : vector<8x24xf32> to vector<8x24xbf16>
    %122 = arith.truncf %120 : vector<24x8xf32> to vector<24x8xbf16>
    %cst_67 = arith.constant dense<0.000000e+00> : vector<8x8xf32>
    %123 = tpu.matmul %121, %122, %cst_67 {dimension_numbers = #tpu.dot_dimension_numbers<[1], [0], [0], [1], [0, 0, 1, 1], [], []>} : vector<8x24xbf16>, vector<24x8xbf16>, vector<8x8xf32> -> vector<8x8xf32>
    %cst_68 = arith.constant dense<0.000000e+00> : vector<8x8xf32>
    %124 = tpu.matmul %123, %50, %cst_68 {dimension_numbers = #tpu.dot_dimension_numbers<[1], [0], [0], [1], [0, 0, 1, 1], [], []>} : vector<8x8xf32>, vector<8x8xf32>, vector<8x8xf32> -> vector<8x8xf32>
    %125 = arith.mulf %123, %48 : vector<8x8xf32>
    %126 = arith.mulf %124, %49 : vector<8x8xf32>
    %127 = arith.addf %125, %126 : vector<8x8xf32>
    %c1_69 = arith.constant 1 : index
    %c0_70 = arith.constant 0 : index
    %c0_71 = arith.constant 0 : index
    %128 = vector.load %arg13[%c1_69, %c0_70, %c0_71] : memref<2x16x16xf32, #tpu.memory_space<vmem>>, vector<1x16x16xf32>
    %129 = vector.shape_cast %128 : vector<1x16x16xf32> to vector<16x16xf32>
    %130 = arith.truncf %47 : vector<8x16xf32> to vector<8x16xbf16>
    %131 = arith.truncf %129 : vector<16x16xf32> to vector<16x16xbf16>
    %cst_72 = arith.constant dense<0.000000e+00> : vector<8x16xf32>
    %132 = tpu.matmul %130, %131, %cst_72 {dimension_numbers = #tpu.dot_dimension_numbers<[1], [0], [0], [1], [0, 0, 1, 1], [], []>} : vector<8x16xbf16>, vector<16x16xbf16>, vector<8x16xf32> -> vector<8x16xf32>
    %c1_73 = arith.constant 1 : index
    %c0_74 = arith.constant 0 : index
    %c0_75 = arith.constant 0 : index
    %133 = vector.load %arg14[%c1_73, %c0_74, %c0_75] : memref<2x16x16xf32, #tpu.memory_space<vmem>>, vector<1x16x16xf32>
    %134 = vector.shape_cast %133 : vector<1x16x16xf32> to vector<16x16xf32>
    %135 = arith.truncf %47 : vector<8x16xf32> to vector<8x16xbf16>
    %136 = arith.truncf %134 : vector<16x16xf32> to vector<16x16xbf16>
    %cst_76 = arith.constant dense<0.000000e+00> : vector<8x16xf32>
    %137 = tpu.matmul %135, %136, %cst_76 {dimension_numbers = #tpu.dot_dimension_numbers<[1], [0], [0], [1], [0, 0, 1, 1], [], []>} : vector<8x16xbf16>, vector<16x16xbf16>, vector<8x16xf32> -> vector<8x16xf32>
    %138 = arith.truncf %118 : vector<8x16xf32> to vector<8x16xbf16>
    %139 = arith.truncf %132 : vector<8x16xf32> to vector<8x16xbf16>
    %cst_77 = arith.constant dense<0.000000e+00> : vector<8x8xf32>
    %140 = tpu.matmul %138, %139, %cst_77 {dimension_numbers = #tpu.dot_dimension_numbers<[1], [1], [0], [0], [0, 0, 1, 0], [], []>} : vector<8x16xbf16>, vector<8x16xbf16>, vector<8x8xf32> -> vector<8x8xf32>
    %141 = arith.truncf %127 : vector<8x8xf32> to vector<8x8xbf16>
    %142 = arith.truncf %58 : vector<8x8xf32> to vector<8x8xbf16>
    %cst_78 = arith.constant dense<0.000000e+00> : vector<8x8xf32>
    %143 = tpu.matmul %141, %142, %cst_78 {dimension_numbers = #tpu.dot_dimension_numbers<[1], [1], [0], [0], [0, 0, 1, 0], [], []>} : vector<8x8xbf16>, vector<8x8xbf16>, vector<8x8xf32> -> vector<8x8xf32>
    %144 = arith.addf %140, %143 : vector<8x8xf32>
    %cst_79 = arith.constant 0.204124153 : f32
    %145 = vector.broadcast %cst_79 : f32 to vector<8x8xf32>
    %146 = arith.mulf %144, %145 : vector<8x8xf32>
    %147 = arith.addf %146, %59 : vector<8x8xf32>
    %cst_80 = arith.constant dense<0xFF800000> : vector<8xf32>
    %148 = vector.multi_reduction <maximumf>, %147, %cst_80 [1] : vector<8x8xf32> to vector<8xf32>
    %149 = vector.shape_cast %148 : vector<8xf32> to vector<8x1xf32>
    %150 = vector.broadcast %149 : vector<8x1xf32> to vector<8x8xf32>
    %151 = arith.subf %147, %150 : vector<8x8xf32>
    %152 = math.exp %151 : vector<8x8xf32>
    %cst_81 = arith.constant dense<0.000000e+00> : vector<8xf32>
    %153 = vector.multi_reduction <add>, %152, %cst_81 [1] : vector<8x8xf32> to vector<8xf32>
    %154 = vector.shape_cast %153 : vector<8xf32> to vector<8x1xf32>
    %155 = tpu.reciprocal %154 {approx = true} : vector<8x1xf32> -> vector<8x1xf32>
    %156 = vector.broadcast %155 : vector<8x1xf32> to vector<8x8xf32>
    %157 = arith.mulf %152, %156 : vector<8x8xf32>
    %158 = arith.truncf %157 : vector<8x8xf32> to vector<8x8xbf16>
    %159 = arith.truncf %137 : vector<8x16xf32> to vector<8x16xbf16>
    %cst_82 = arith.constant dense<0.000000e+00> : vector<8x16xf32>
    %160 = tpu.matmul %158, %159, %cst_82 {dimension_numbers = #tpu.dot_dimension_numbers<[1], [0], [0], [1], [0, 0, 1, 1], [], []>} : vector<8x8xbf16>, vector<8x16xbf16>, vector<8x16xf32> -> vector<8x16xf32>
    %c1_83 = arith.constant 1 : index
    %c0_84 = arith.constant 0 : index
    %c0_85 = arith.constant 0 : index
    %161 = vector.load %arg16[%c1_83, %c0_84, %c0_85] : memref<2x16x32xf32, #tpu.memory_space<vmem>>, vector<1x16x32xf32>
    %162 = vector.shape_cast %161 : vector<1x16x32xf32> to vector<16x32xf32>
    %163 = arith.truncf %160 : vector<8x16xf32> to vector<8x16xbf16>
    %164 = arith.truncf %162 : vector<16x32xf32> to vector<16x32xbf16>
    %cst_86 = arith.constant dense<0.000000e+00> : vector<8x32xf32>
    %165 = tpu.matmul %163, %164, %cst_86 {dimension_numbers = #tpu.dot_dimension_numbers<[1], [0], [0], [1], [0, 0, 1, 1], [], []>} : vector<8x16xbf16>, vector<16x32xbf16>, vector<8x32xf32> -> vector<8x32xf32>
    %166 = arith.addf %113, %165 : vector<8x32xf32>
    %167 = arith.addf %0, %166 : vector<8x32xf32>
    %c0_87 = arith.constant 0 : index
    %c0_88 = arith.constant 0 : index
    %168 = vector.load %arg17[%c0_87, %c0_88] : memref<8x32xf32, #tpu.memory_space<vmem>>, vector<8x32xf32>
    tpu.vector_store %arg17[%c0_87, %c0_88], %167 {strides = array<i32>} : memref<8x32xf32, #tpu.memory_space<vmem>>, vector<8x32xf32>,
    return
  }
  func.func @transform_0(%arg0: i32) -> (i32, i32) {
    %c0_i32 = arith.constant 0 : i32
    %c0_i32_0 = arith.constant 0 : i32
    return %arg0, %c0_i32 : i32, i32
  }
  func.func @transform_1(%arg0: i32) -> (i32, i32) {
    %c0_i32 = arith.constant 0 : i32
    %c0_i32_0 = arith.constant 0 : i32
    %c0_i32_1 = arith.constant 0 : i32
    return %c0_i32, %c0_i32_0 : i32, i32
  }
  func.func @transform_2(%arg0: i32) -> (i32, i32) {
    %c0_i32 = arith.constant 0 : i32
    %c0_i32_0 = arith.constant 0 : i32
    %c0_i32_1 = arith.constant 0 : i32
    return %c0_i32, %c0_i32_0 : i32, i32
  }
  func.func @transform_3(%arg0: i32) -> (i32, i32) {
    %c0_i32 = arith.constant 0 : i32
    %c0_i32_0 = arith.constant 0 : i32
    %c0_i32_1 = arith.constant 0 : i32
    return %c0_i32, %c0_i32_0 : i32, i32
  }
  func.func @transform_4(%arg0: i32) -> (i32, i32) {
    %c0_i32 = arith.constant 0 : i32
    %c0_i32_0 = arith.constant 0 : i32
    %c0_i32_1 = arith.constant 0 : i32
    return %c0_i32, %c0_i32_0 : i32, i32
  }
  func.func @transform_5(%arg0: i32) -> (i32, i32) {
    %c0_i32 = arith.constant 0 : i32
    %c0_i32_0 = arith.constant 0 : i32
    %c0_i32_1 = arith.constant 0 : i32
    return %c0_i32, %c0_i32_0 : i32, i32
  }
  func.func @transform_6(%arg0: i32) -> (i32, i32) {
    %c0_i32 = arith.constant 0 : i32
    %c0_i32_0 = arith.constant 0 : i32
    %c0_i32_1 = arith.constant 0 : i32
    return %c0_i32, %c0_i32_0 : i32, i32
  }
  func.func @transform_7(%arg0: i32) -> (i32, i32) {
    %c0_i32 = arith.constant 0 : i32
    %c0_i32_0 = arith.constant 0 : i32
    %c0_i32_1 = arith.constant 0 : i32
    return %c0_i32, %c0_i32_0 : i32, i32
  }
  func.func @transform_8(%arg0: i32) -> (i32, i32, i32) {
    %c0_i32 = arith.constant 0 : i32
    %c0_i32_0 = arith.constant 0 : i32
    %c0_i32_1 = arith.constant 0 : i32
    %c0_i32_2 = arith.constant 0 : i32
    return %c0_i32, %c0_i32_0, %c0_i32_1 : i32, i32, i32
  }
  func.func @transform_9(%arg0: i32) -> (i32, i32, i32) {
    %c0_i32 = arith.constant 0 : i32
    %c0_i32_0 = arith.constant 0 : i32
    %c0_i32_1 = arith.constant 0 : i32
    %c0_i32_2 = arith.constant 0 : i32
    return %c0_i32, %c0_i32_0, %c0_i32_1 : i32, i32, i32
  }
  func.func @transform_10(%arg0: i32) -> (i32, i32) {
    %c0_i32 = arith.constant 0 : i32
    %c0_i32_0 = arith.constant 0 : i32
    %c0_i32_1 = arith.constant 0 : i32
    return %c0_i32, %c0_i32_0 : i32, i32
  }
  func.func @transform_11(%arg0: i32) -> (i32, i32) {
    %c0_i32 = arith.constant 0 : i32
    %c0_i32_0 = arith.constant 0 : i32
    %c0_i32_1 = arith.constant 0 : i32
    return %c0_i32, %c0_i32_0 : i32, i32
  }
  func.func @transform_12(%arg0: i32) -> (i32, i32, i32) {
    %c0_i32 = arith.constant 0 : i32
    %c0_i32_0 = arith.constant 0 : i32
    %c0_i32_1 = arith.constant 0 : i32
    %c0_i32_2 = arith.constant 0 : i32
    return %c0_i32, %c0_i32_0, %c0_i32_1 : i32, i32, i32
  }
  func.func @transform_13(%arg0: i32) -> (i32, i32, i32) {
    %c0_i32 = arith.constant 0 : i32
    %c0_i32_0 = arith.constant 0 : i32
    %c0_i32_1 = arith.constant 0 : i32
    %c0_i32_2 = arith.constant 0 : i32
    return %c0_i32, %c0_i32_0, %c0_i32_1 : i32, i32, i32
  }
  func.func @transform_14(%arg0: i32) -> (i32, i32) {
    %c0_i32 = arith.constant 0 : i32
    %c0_i32_0 = arith.constant 0 : i32
    %c0_i32_1 = arith.constant 0 : i32
    return %c0_i32, %c0_i32_0 : i32, i32
  }
  func.func @transform_15(%arg0: i32) -> (i32, i32, i32) {
    %c0_i32 = arith.constant 0 : i32
    %c0_i32_0 = arith.constant 0 : i32
    %c0_i32_1 = arith.constant 0 : i32
    %c0_i32_2 = arith.constant 0 : i32
    return %c0_i32, %c0_i32_0, %c0_i32_1 : i32, i32, i32
  }
  func.func @transform_16(%arg0: i32) -> (i32, i32) {
    %c0_i32 = arith.constant 0 : i32
    %c0_i32_0 = arith.constant 0 : i32
    return %arg0, %c0_i32 : i32, i32
  }
}

module attributes {stable_mosaic.version = 11 : i64} {
  func.func @_moe_block_kernel(%arg0: i32, %arg1: memref<8x32xf32, #tpu.memory_space<vmem>>, %arg2: memref<1x32xf32, #tpu.memory_space<vmem>>, %arg3: memref<32x4xf32, #tpu.memory_space<vmem>>, %arg4: memref<4x32x32xf32, #tpu.memory_space<vmem>>, %arg5: memref<4x32x32xf32, #tpu.memory_space<vmem>>, %arg6: memref<4x32x32xf32, #tpu.memory_space<vmem>>, %arg7: memref<32x32xf32, #tpu.memory_space<vmem>>, %arg8: memref<32x32xf32, #tpu.memory_space<vmem>>, %arg9: memref<32x32xf32, #tpu.memory_space<vmem>>, %arg10: memref<8x32xf32, #tpu.memory_space<vmem>>) attributes {dimension_semantics = [#tpu.dimension_semantics<parallel>], iteration_bounds = array<i64: 2>, scalar_prefetch = 0 : i64, scratch_operands = 0 : i64, tpu.core_type = #tpu.core_type<tc>, window_params = [{transform_indices = @transform_0, window_bounds = array<i64: 8, 32>}, {pipeline_mode = #tpu.pipeline_mode<synchronous>, transform_indices = @transform_1, window_bounds = array<i64: 1, 32>}, {pipeline_mode = #tpu.pipeline_mode<synchronous>, transform_indices = @transform_2, window_bounds = array<i64: 32, 4>}, {pipeline_mode = #tpu.pipeline_mode<synchronous>, transform_indices = @transform_3, window_bounds = array<i64: 4, 32, 32>}, {pipeline_mode = #tpu.pipeline_mode<synchronous>, transform_indices = @transform_4, window_bounds = array<i64: 4, 32, 32>}, {pipeline_mode = #tpu.pipeline_mode<synchronous>, transform_indices = @transform_5, window_bounds = array<i64: 4, 32, 32>}, {pipeline_mode = #tpu.pipeline_mode<synchronous>, transform_indices = @transform_6, window_bounds = array<i64: 32, 32>}, {pipeline_mode = #tpu.pipeline_mode<synchronous>, transform_indices = @transform_7, window_bounds = array<i64: 32, 32>}, {pipeline_mode = #tpu.pipeline_mode<synchronous>, transform_indices = @transform_8, window_bounds = array<i64: 32, 32>}, {transform_indices = @transform_9, window_bounds = array<i64: 8, 32>}]} {
    %c0 = arith.constant 0 : index
    %c0_0 = arith.constant 0 : index
    %0 = vector.load %arg1[%c0, %c0_0] : memref<8x32xf32, #tpu.memory_space<vmem>>, vector<8x32xf32>
    %c0_1 = arith.constant 0 : index
    %c0_2 = arith.constant 0 : index
    %1 = vector.load %arg2[%c0_1, %c0_2] : memref<1x32xf32, #tpu.memory_space<vmem>>, vector<1x32xf32>
    %2 = arith.mulf %0, %0 : vector<8x32xf32>
    %cst = arith.constant dense<0.000000e+00> : vector<8xf32>
    %3 = vector.multi_reduction <add>, %2, %cst [1] : vector<8x32xf32> to vector<8xf32>
    %4 = vector.shape_cast %3 : vector<8xf32> to vector<8x1xf32>
    %cst_3 = arith.constant 3.200000e+01 : f32
    %5 = vector.broadcast %cst_3 : f32 to vector<8x1xf32>
    %6 = arith.divf %4, %5 : vector<8x1xf32>
    %cst_4 = arith.constant 9.99999997E-7 : f32
    %7 = vector.broadcast %cst_4 : f32 to vector<8x1xf32>
    %8 = arith.addf %6, %7 : vector<8x1xf32>
    %9 = math.rsqrt %8 : vector<8x1xf32>
    %10 = vector.broadcast %9 : vector<8x1xf32> to vector<8x32xf32>
    %11 = arith.mulf %0, %10 : vector<8x32xf32>
    %12 = vector.broadcast %1 : vector<1x32xf32> to vector<8x32xf32>
    %13 = arith.mulf %11, %12 : vector<8x32xf32>
    %c0_5 = arith.constant 0 : index
    %c0_6 = arith.constant 0 : index
    %14 = vector.load %arg3[%c0_5, %c0_6] : memref<32x4xf32, #tpu.memory_space<vmem>>, vector<32x4xf32>
    %15 = arith.truncf %13 : vector<8x32xf32> to vector<8x32xbf16>
    %16 = arith.truncf %14 : vector<32x4xf32> to vector<32x4xbf16>
    %cst_7 = arith.constant dense<0.000000e+00> : vector<8x4xf32>
    %17 = tpu.matmul %15, %16, %cst_7 {dimension_numbers = #tpu.dot_dimension_numbers<[1], [0], [0], [1], [0, 0, 1, 1], [], []>} : vector<8x32xbf16>, vector<32x4xbf16>, vector<8x4xf32> -> vector<8x4xf32>
    %cst_8 = arith.constant 0.000000e+00 : f32
    %18 = vector.broadcast %cst_8 : f32 to vector<8x4xf32>
    %19 = arith.subf %18, %17 : vector<8x4xf32>
    %20 = math.exp %19 : vector<8x4xf32>
    %cst_9 = arith.constant 1.000000e+00 : f32
    %21 = vector.broadcast %cst_9 : f32 to vector<8x4xf32>
    %22 = arith.addf %21, %20 : vector<8x4xf32>
    %cst_10 = arith.constant 1.000000e+00 : f32
    %23 = vector.broadcast %cst_10 : f32 to vector<8x4xf32>
    %24 = arith.divf %23, %22 : vector<8x4xf32>
    %25 = vector.extract_strided_slice %24 {offsets = [0, 0], sizes = [8, 1], strides = [1, 1]} : vector<8x4xf32> to vector<8x1xf32>
    %26 = vector.extract_strided_slice %24 {offsets = [0, 1], sizes = [8, 1], strides = [1, 1]} : vector<8x4xf32> to vector<8x1xf32>
    %27 = vector.extract_strided_slice %24 {offsets = [0, 2], sizes = [8, 1], strides = [1, 1]} : vector<8x4xf32> to vector<8x1xf32>
    %28 = vector.extract_strided_slice %24 {offsets = [0, 3], sizes = [8, 1], strides = [1, 1]} : vector<8x4xf32> to vector<8x1xf32>
    %cst_11 = arith.constant 0.000000e+00 : f32
    %29 = vector.broadcast %cst_11 : f32 to vector<8x1xf32>
    %30 = arith.cmpf ogt, %26, %25 : vector<8x1xf32>
    %31 = arith.extui %30 : vector<8x1xi1> to vector<8x1xi32>
    %32 = arith.sitofp %31 : vector<8x1xi32> to vector<8x1xf32>
    %33 = arith.addf %29, %32 : vector<8x1xf32>
    %34 = arith.cmpf ogt, %27, %25 : vector<8x1xf32>
    %35 = arith.extui %34 : vector<8x1xi1> to vector<8x1xi32>
    %36 = arith.sitofp %35 : vector<8x1xi32> to vector<8x1xf32>
    %37 = arith.addf %33, %36 : vector<8x1xf32>
    %38 = arith.cmpf ogt, %28, %25 : vector<8x1xf32>
    %39 = arith.extui %38 : vector<8x1xi1> to vector<8x1xi32>
    %40 = arith.sitofp %39 : vector<8x1xi32> to vector<8x1xf32>
    %41 = arith.addf %37, %40 : vector<8x1xf32>
    %cst_12 = arith.constant 2.000000e+00 : f32
    %42 = vector.broadcast %cst_12 : f32 to vector<8x1xf32>
    %43 = arith.cmpf olt, %41, %42 : vector<8x1xf32>
    %cst_13 = arith.constant 0.000000e+00 : f32
    %44 = vector.broadcast %cst_13 : f32 to vector<8x1xf32>
    %45 = arith.select %43, %25, %44 : vector<8x1xi1>, vector<8x1xf32>
    %cst_14 = arith.constant 0.000000e+00 : f32
    %46 = vector.broadcast %cst_14 : f32 to vector<8x1xf32>
    %47 = arith.cmpf ogt, %25, %26 : vector<8x1xf32>
    %48 = arith.cmpf oeq, %25, %26 : vector<8x1xf32>
    %49 = arith.ori %47, %48 : vector<8x1xi1>
    %50 = arith.extui %49 : vector<8x1xi1> to vector<8x1xi32>
    %51 = arith.sitofp %50 : vector<8x1xi32> to vector<8x1xf32>
    %52 = arith.addf %46, %51 : vector<8x1xf32>
    %53 = arith.cmpf ogt, %27, %26 : vector<8x1xf32>
    %54 = arith.extui %53 : vector<8x1xi1> to vector<8x1xi32>
    %55 = arith.sitofp %54 : vector<8x1xi32> to vector<8x1xf32>
    %56 = arith.addf %52, %55 : vector<8x1xf32>
    %57 = arith.cmpf ogt, %28, %26 : vector<8x1xf32>
    %58 = arith.extui %57 : vector<8x1xi1> to vector<8x1xi32>
    %59 = arith.sitofp %58 : vector<8x1xi32> to vector<8x1xf32>
    %60 = arith.addf %56, %59 : vector<8x1xf32>
    %cst_15 = arith.constant 2.000000e+00 : f32
    %61 = vector.broadcast %cst_15 : f32 to vector<8x1xf32>
    %62 = arith.cmpf olt, %60, %61 : vector<8x1xf32>
    %cst_16 = arith.constant 0.000000e+00 : f32
    %63 = vector.broadcast %cst_16 : f32 to vector<8x1xf32>
    %64 = arith.select %62, %26, %63 : vector<8x1xi1>, vector<8x1xf32>
    %cst_17 = arith.constant 0.000000e+00 : f32
    %65 = vector.broadcast %cst_17 : f32 to vector<8x1xf32>
    %66 = arith.cmpf ogt, %25, %27 : vector<8x1xf32>
    %67 = arith.cmpf oeq, %25, %27 : vector<8x1xf32>
    %68 = arith.ori %66, %67 : vector<8x1xi1>
    %69 = arith.extui %68 : vector<8x1xi1> to vector<8x1xi32>
    %70 = arith.sitofp %69 : vector<8x1xi32> to vector<8x1xf32>
    %71 = arith.addf %65, %70 : vector<8x1xf32>
    %72 = arith.cmpf ogt, %26, %27 : vector<8x1xf32>
    %73 = arith.cmpf oeq, %26, %27 : vector<8x1xf32>
    %74 = arith.ori %72, %73 : vector<8x1xi1>
    %75 = arith.extui %74 : vector<8x1xi1> to vector<8x1xi32>
    %76 = arith.sitofp %75 : vector<8x1xi32> to vector<8x1xf32>
    %77 = arith.addf %71, %76 : vector<8x1xf32>
    %78 = arith.cmpf ogt, %28, %27 : vector<8x1xf32>
    %79 = arith.extui %78 : vector<8x1xi1> to vector<8x1xi32>
    %80 = arith.sitofp %79 : vector<8x1xi32> to vector<8x1xf32>
    %81 = arith.addf %77, %80 : vector<8x1xf32>
    %cst_18 = arith.constant 2.000000e+00 : f32
    %82 = vector.broadcast %cst_18 : f32 to vector<8x1xf32>
    %83 = arith.cmpf olt, %81, %82 : vector<8x1xf32>
    %cst_19 = arith.constant 0.000000e+00 : f32
    %84 = vector.broadcast %cst_19 : f32 to vector<8x1xf32>
    %85 = arith.select %83, %27, %84 : vector<8x1xi1>, vector<8x1xf32>
    %cst_20 = arith.constant 0.000000e+00 : f32
    %86 = vector.broadcast %cst_20 : f32 to vector<8x1xf32>
    %87 = arith.cmpf ogt, %25, %28 : vector<8x1xf32>
    %88 = arith.cmpf oeq, %25, %28 : vector<8x1xf32>
    %89 = arith.ori %87, %88 : vector<8x1xi1>
    %90 = arith.extui %89 : vector<8x1xi1> to vector<8x1xi32>
    %91 = arith.sitofp %90 : vector<8x1xi32> to vector<8x1xf32>
    %92 = arith.addf %86, %91 : vector<8x1xf32>
    %93 = arith.cmpf ogt, %26, %28 : vector<8x1xf32>
    %94 = arith.cmpf oeq, %26, %28 : vector<8x1xf32>
    %95 = arith.ori %93, %94 : vector<8x1xi1>
    %96 = arith.extui %95 : vector<8x1xi1> to vector<8x1xi32>
    %97 = arith.sitofp %96 : vector<8x1xi32> to vector<8x1xf32>
    %98 = arith.addf %92, %97 : vector<8x1xf32>
    %99 = arith.cmpf ogt, %27, %28 : vector<8x1xf32>
    %100 = arith.cmpf oeq, %27, %28 : vector<8x1xf32>
    %101 = arith.ori %99, %100 : vector<8x1xi1>
    %102 = arith.extui %101 : vector<8x1xi1> to vector<8x1xi32>
    %103 = arith.sitofp %102 : vector<8x1xi32> to vector<8x1xf32>
    %104 = arith.addf %98, %103 : vector<8x1xf32>
    %cst_21 = arith.constant 2.000000e+00 : f32
    %105 = vector.broadcast %cst_21 : f32 to vector<8x1xf32>
    %106 = arith.cmpf olt, %104, %105 : vector<8x1xf32>
    %cst_22 = arith.constant 0.000000e+00 : f32
    %107 = vector.broadcast %cst_22 : f32 to vector<8x1xf32>
    %108 = arith.select %106, %28, %107 : vector<8x1xi1>, vector<8x1xf32>
    %109 = arith.addf %45, %64 : vector<8x1xf32>
    %110 = arith.addf %109, %85 : vector<8x1xf32>
    %111 = arith.addf %110, %108 : vector<8x1xf32>
    %cst_23 = arith.constant 0.000000e+00 : f32
    %112 = vector.broadcast %cst_23 : f32 to vector<8x32xf32>
    %c0_24 = arith.constant 0 : index
    %c0_25 = arith.constant 0 : index
    %c0_26 = arith.constant 0 : index
    %113 = vector.load %arg4[%c0_24, %c0_25, %c0_26] : memref<4x32x32xf32, #tpu.memory_space<vmem>>, vector<1x32x32xf32>
    %114 = vector.shape_cast %113 : vector<1x32x32xf32> to vector<32x32xf32>
    %115 = arith.truncf %13 : vector<8x32xf32> to vector<8x32xbf16>
    %116 = arith.truncf %114 : vector<32x32xf32> to vector<32x32xbf16>
    %cst_27 = arith.constant dense<0.000000e+00> : vector<8x32xf32>
    %117 = tpu.matmul %115, %116, %cst_27 {dimension_numbers = #tpu.dot_dimension_numbers<[1], [0], [0], [1], [0, 0, 1, 1], [], []>} : vector<8x32xbf16>, vector<32x32xbf16>, vector<8x32xf32> -> vector<8x32xf32>
    %c0_28 = arith.constant 0 : index
    %c0_29 = arith.constant 0 : index
    %c0_30 = arith.constant 0 : index
    %118 = vector.load %arg5[%c0_28, %c0_29, %c0_30] : memref<4x32x32xf32, #tpu.memory_space<vmem>>, vector<1x32x32xf32>
    %119 = vector.shape_cast %118 : vector<1x32x32xf32> to vector<32x32xf32>
    %120 = arith.truncf %13 : vector<8x32xf32> to vector<8x32xbf16>
    %121 = arith.truncf %119 : vector<32x32xf32> to vector<32x32xbf16>
    %cst_31 = arith.constant dense<0.000000e+00> : vector<8x32xf32>
    %122 = tpu.matmul %120, %121, %cst_31 {dimension_numbers = #tpu.dot_dimension_numbers<[1], [0], [0], [1], [0, 0, 1, 1], [], []>} : vector<8x32xbf16>, vector<32x32xbf16>, vector<8x32xf32> -> vector<8x32xf32>
    %cst_32 = arith.constant 0.000000e+00 : f32
    %123 = vector.broadcast %cst_32 : f32 to vector<8x32xf32>
    %124 = arith.subf %123, %117 : vector<8x32xf32>
    %125 = math.exp %124 : vector<8x32xf32>
    %cst_33 = arith.constant 1.000000e+00 : f32
    %126 = vector.broadcast %cst_33 : f32 to vector<8x32xf32>
    %127 = arith.addf %126, %125 : vector<8x32xf32>
    %cst_34 = arith.constant 1.000000e+00 : f32
    %128 = vector.broadcast %cst_34 : f32 to vector<8x32xf32>
    %129 = arith.divf %128, %127 : vector<8x32xf32>
    %130 = arith.mulf %117, %129 : vector<8x32xf32>
    %131 = arith.mulf %130, %122 : vector<8x32xf32>
    %c0_35 = arith.constant 0 : index
    %c0_36 = arith.constant 0 : index
    %c0_37 = arith.constant 0 : index
    %132 = vector.load %arg6[%c0_35, %c0_36, %c0_37] : memref<4x32x32xf32, #tpu.memory_space<vmem>>, vector<1x32x32xf32>
    %133 = vector.shape_cast %132 : vector<1x32x32xf32> to vector<32x32xf32>
    %134 = arith.truncf %131 : vector<8x32xf32> to vector<8x32xbf16>
    %135 = arith.truncf %133 : vector<32x32xf32> to vector<32x32xbf16>
    %cst_38 = arith.constant dense<0.000000e+00> : vector<8x32xf32>
    %136 = tpu.matmul %134, %135, %cst_38 {dimension_numbers = #tpu.dot_dimension_numbers<[1], [0], [0], [1], [0, 0, 1, 1], [], []>} : vector<8x32xbf16>, vector<32x32xbf16>, vector<8x32xf32> -> vector<8x32xf32>
    %137 = arith.divf %45, %111 : vector<8x1xf32>
    %138 = vector.broadcast %137 : vector<8x1xf32> to vector<8x32xf32>
    %139 = arith.mulf %138, %136 : vector<8x32xf32>
    %140 = arith.addf %112, %139 : vector<8x32xf32>
    %c1 = arith.constant 1 : index
    %c0_39 = arith.constant 0 : index
    %c0_40 = arith.constant 0 : index
    %141 = vector.load %arg4[%c1, %c0_39, %c0_40] : memref<4x32x32xf32, #tpu.memory_space<vmem>>, vector<1x32x32xf32>
    %142 = vector.shape_cast %141 : vector<1x32x32xf32> to vector<32x32xf32>
    %143 = arith.truncf %13 : vector<8x32xf32> to vector<8x32xbf16>
    %144 = arith.truncf %142 : vector<32x32xf32> to vector<32x32xbf16>
    %cst_41 = arith.constant dense<0.000000e+00> : vector<8x32xf32>
    %145 = tpu.matmul %143, %144, %cst_41 {dimension_numbers = #tpu.dot_dimension_numbers<[1], [0], [0], [1], [0, 0, 1, 1], [], []>} : vector<8x32xbf16>, vector<32x32xbf16>, vector<8x32xf32> -> vector<8x32xf32>
    %c1_42 = arith.constant 1 : index
    %c0_43 = arith.constant 0 : index
    %c0_44 = arith.constant 0 : index
    %146 = vector.load %arg5[%c1_42, %c0_43, %c0_44] : memref<4x32x32xf32, #tpu.memory_space<vmem>>, vector<1x32x32xf32>
    %147 = vector.shape_cast %146 : vector<1x32x32xf32> to vector<32x32xf32>
    %148 = arith.truncf %13 : vector<8x32xf32> to vector<8x32xbf16>
    %149 = arith.truncf %147 : vector<32x32xf32> to vector<32x32xbf16>
    %cst_45 = arith.constant dense<0.000000e+00> : vector<8x32xf32>
    %150 = tpu.matmul %148, %149, %cst_45 {dimension_numbers = #tpu.dot_dimension_numbers<[1], [0], [0], [1], [0, 0, 1, 1], [], []>} : vector<8x32xbf16>, vector<32x32xbf16>, vector<8x32xf32> -> vector<8x32xf32>
    %cst_46 = arith.constant 0.000000e+00 : f32
    %151 = vector.broadcast %cst_46 : f32 to vector<8x32xf32>
    %152 = arith.subf %151, %145 : vector<8x32xf32>
    %153 = math.exp %152 : vector<8x32xf32>
    %cst_47 = arith.constant 1.000000e+00 : f32
    %154 = vector.broadcast %cst_47 : f32 to vector<8x32xf32>
    %155 = arith.addf %154, %153 : vector<8x32xf32>
    %cst_48 = arith.constant 1.000000e+00 : f32
    %156 = vector.broadcast %cst_48 : f32 to vector<8x32xf32>
    %157 = arith.divf %156, %155 : vector<8x32xf32>
    %158 = arith.mulf %145, %157 : vector<8x32xf32>
    %159 = arith.mulf %158, %150 : vector<8x32xf32>
    %c1_49 = arith.constant 1 : index
    %c0_50 = arith.constant 0 : index
    %c0_51 = arith.constant 0 : index
    %160 = vector.load %arg6[%c1_49, %c0_50, %c0_51] : memref<4x32x32xf32, #tpu.memory_space<vmem>>, vector<1x32x32xf32>
    %161 = vector.shape_cast %160 : vector<1x32x32xf32> to vector<32x32xf32>
    %162 = arith.truncf %159 : vector<8x32xf32> to vector<8x32xbf16>
    %163 = arith.truncf %161 : vector<32x32xf32> to vector<32x32xbf16>
    %cst_52 = arith.constant dense<0.000000e+00> : vector<8x32xf32>
    %164 = tpu.matmul %162, %163, %cst_52 {dimension_numbers = #tpu.dot_dimension_numbers<[1], [0], [0], [1], [0, 0, 1, 1], [], []>} : vector<8x32xbf16>, vector<32x32xbf16>, vector<8x32xf32> -> vector<8x32xf32>
    %165 = arith.divf %64, %111 : vector<8x1xf32>
    %166 = vector.broadcast %165 : vector<8x1xf32> to vector<8x32xf32>
    %167 = arith.mulf %166, %164 : vector<8x32xf32>
    %168 = arith.addf %140, %167 : vector<8x32xf32>
    %c2 = arith.constant 2 : index
    %c0_53 = arith.constant 0 : index
    %c0_54 = arith.constant 0 : index
    %169 = vector.load %arg4[%c2, %c0_53, %c0_54] : memref<4x32x32xf32, #tpu.memory_space<vmem>>, vector<1x32x32xf32>
    %170 = vector.shape_cast %169 : vector<1x32x32xf32> to vector<32x32xf32>
    %171 = arith.truncf %13 : vector<8x32xf32> to vector<8x32xbf16>
    %172 = arith.truncf %170 : vector<32x32xf32> to vector<32x32xbf16>
    %cst_55 = arith.constant dense<0.000000e+00> : vector<8x32xf32>
    %173 = tpu.matmul %171, %172, %cst_55 {dimension_numbers = #tpu.dot_dimension_numbers<[1], [0], [0], [1], [0, 0, 1, 1], [], []>} : vector<8x32xbf16>, vector<32x32xbf16>, vector<8x32xf32> -> vector<8x32xf32>
    %c2_56 = arith.constant 2 : index
    %c0_57 = arith.constant 0 : index
    %c0_58 = arith.constant 0 : index
    %174 = vector.load %arg5[%c2_56, %c0_57, %c0_58] : memref<4x32x32xf32, #tpu.memory_space<vmem>>, vector<1x32x32xf32>
    %175 = vector.shape_cast %174 : vector<1x32x32xf32> to vector<32x32xf32>
    %176 = arith.truncf %13 : vector<8x32xf32> to vector<8x32xbf16>
    %177 = arith.truncf %175 : vector<32x32xf32> to vector<32x32xbf16>
    %cst_59 = arith.constant dense<0.000000e+00> : vector<8x32xf32>
    %178 = tpu.matmul %176, %177, %cst_59 {dimension_numbers = #tpu.dot_dimension_numbers<[1], [0], [0], [1], [0, 0, 1, 1], [], []>} : vector<8x32xbf16>, vector<32x32xbf16>, vector<8x32xf32> -> vector<8x32xf32>
    %cst_60 = arith.constant 0.000000e+00 : f32
    %179 = vector.broadcast %cst_60 : f32 to vector<8x32xf32>
    %180 = arith.subf %179, %173 : vector<8x32xf32>
    %181 = math.exp %180 : vector<8x32xf32>
    %cst_61 = arith.constant 1.000000e+00 : f32
    %182 = vector.broadcast %cst_61 : f32 to vector<8x32xf32>
    %183 = arith.addf %182, %181 : vector<8x32xf32>
    %cst_62 = arith.constant 1.000000e+00 : f32
    %184 = vector.broadcast %cst_62 : f32 to vector<8x32xf32>
    %185 = arith.divf %184, %183 : vector<8x32xf32>
    %186 = arith.mulf %173, %185 : vector<8x32xf32>
    %187 = arith.mulf %186, %178 : vector<8x32xf32>
    %c2_63 = arith.constant 2 : index
    %c0_64 = arith.constant 0 : index
    %c0_65 = arith.constant 0 : index
    %188 = vector.load %arg6[%c2_63, %c0_64, %c0_65] : memref<4x32x32xf32, #tpu.memory_space<vmem>>, vector<1x32x32xf32>
    %189 = vector.shape_cast %188 : vector<1x32x32xf32> to vector<32x32xf32>
    %190 = arith.truncf %187 : vector<8x32xf32> to vector<8x32xbf16>
    %191 = arith.truncf %189 : vector<32x32xf32> to vector<32x32xbf16>
    %cst_66 = arith.constant dense<0.000000e+00> : vector<8x32xf32>
    %192 = tpu.matmul %190, %191, %cst_66 {dimension_numbers = #tpu.dot_dimension_numbers<[1], [0], [0], [1], [0, 0, 1, 1], [], []>} : vector<8x32xbf16>, vector<32x32xbf16>, vector<8x32xf32> -> vector<8x32xf32>
    %193 = arith.divf %85, %111 : vector<8x1xf32>
    %194 = vector.broadcast %193 : vector<8x1xf32> to vector<8x32xf32>
    %195 = arith.mulf %194, %192 : vector<8x32xf32>
    %196 = arith.addf %168, %195 : vector<8x32xf32>
    %c3 = arith.constant 3 : index
    %c0_67 = arith.constant 0 : index
    %c0_68 = arith.constant 0 : index
    %197 = vector.load %arg4[%c3, %c0_67, %c0_68] : memref<4x32x32xf32, #tpu.memory_space<vmem>>, vector<1x32x32xf32>
    %198 = vector.shape_cast %197 : vector<1x32x32xf32> to vector<32x32xf32>
    %199 = arith.truncf %13 : vector<8x32xf32> to vector<8x32xbf16>
    %200 = arith.truncf %198 : vector<32x32xf32> to vector<32x32xbf16>
    %cst_69 = arith.constant dense<0.000000e+00> : vector<8x32xf32>
    %201 = tpu.matmul %199, %200, %cst_69 {dimension_numbers = #tpu.dot_dimension_numbers<[1], [0], [0], [1], [0, 0, 1, 1], [], []>} : vector<8x32xbf16>, vector<32x32xbf16>, vector<8x32xf32> -> vector<8x32xf32>
    %c3_70 = arith.constant 3 : index
    %c0_71 = arith.constant 0 : index
    %c0_72 = arith.constant 0 : index
    %202 = vector.load %arg5[%c3_70, %c0_71, %c0_72] : memref<4x32x32xf32, #tpu.memory_space<vmem>>, vector<1x32x32xf32>
    %203 = vector.shape_cast %202 : vector<1x32x32xf32> to vector<32x32xf32>
    %204 = arith.truncf %13 : vector<8x32xf32> to vector<8x32xbf16>
    %205 = arith.truncf %203 : vector<32x32xf32> to vector<32x32xbf16>
    %cst_73 = arith.constant dense<0.000000e+00> : vector<8x32xf32>
    %206 = tpu.matmul %204, %205, %cst_73 {dimension_numbers = #tpu.dot_dimension_numbers<[1], [0], [0], [1], [0, 0, 1, 1], [], []>} : vector<8x32xbf16>, vector<32x32xbf16>, vector<8x32xf32> -> vector<8x32xf32>
    %cst_74 = arith.constant 0.000000e+00 : f32
    %207 = vector.broadcast %cst_74 : f32 to vector<8x32xf32>
    %208 = arith.subf %207, %201 : vector<8x32xf32>
    %209 = math.exp %208 : vector<8x32xf32>
    %cst_75 = arith.constant 1.000000e+00 : f32
    %210 = vector.broadcast %cst_75 : f32 to vector<8x32xf32>
    %211 = arith.addf %210, %209 : vector<8x32xf32>
    %cst_76 = arith.constant 1.000000e+00 : f32
    %212 = vector.broadcast %cst_76 : f32 to vector<8x32xf32>
    %213 = arith.divf %212, %211 : vector<8x32xf32>
    %214 = arith.mulf %201, %213 : vector<8x32xf32>
    %215 = arith.mulf %214, %206 : vector<8x32xf32>
    %c3_77 = arith.constant 3 : index
    %c0_78 = arith.constant 0 : index
    %c0_79 = arith.constant 0 : index
    %216 = vector.load %arg6[%c3_77, %c0_78, %c0_79] : memref<4x32x32xf32, #tpu.memory_space<vmem>>, vector<1x32x32xf32>
    %217 = vector.shape_cast %216 : vector<1x32x32xf32> to vector<32x32xf32>
    %218 = arith.truncf %215 : vector<8x32xf32> to vector<8x32xbf16>
    %219 = arith.truncf %217 : vector<32x32xf32> to vector<32x32xbf16>
    %cst_80 = arith.constant dense<0.000000e+00> : vector<8x32xf32>
    %220 = tpu.matmul %218, %219, %cst_80 {dimension_numbers = #tpu.dot_dimension_numbers<[1], [0], [0], [1], [0, 0, 1, 1], [], []>} : vector<8x32xbf16>, vector<32x32xbf16>, vector<8x32xf32> -> vector<8x32xf32>
    %221 = arith.divf %108, %111 : vector<8x1xf32>
    %222 = vector.broadcast %221 : vector<8x1xf32> to vector<8x32xf32>
    %223 = arith.mulf %222, %220 : vector<8x32xf32>
    %224 = arith.addf %196, %223 : vector<8x32xf32>
    %c0_81 = arith.constant 0 : index
    %c0_82 = arith.constant 0 : index
    %225 = vector.load %arg7[%c0_81, %c0_82] : memref<32x32xf32, #tpu.memory_space<vmem>>, vector<32x32xf32>
    %226 = arith.truncf %13 : vector<8x32xf32> to vector<8x32xbf16>
    %227 = arith.truncf %225 : vector<32x32xf32> to vector<32x32xbf16>
    %cst_83 = arith.constant dense<0.000000e+00> : vector<8x32xf32>
    %228 = tpu.matmul %226, %227, %cst_83 {dimension_numbers = #tpu.dot_dimension_numbers<[1], [0], [0], [1], [0, 0, 1, 1], [], []>} : vector<8x32xbf16>, vector<32x32xbf16>, vector<8x32xf32> -> vector<8x32xf32>
    %c0_84 = arith.constant 0 : index
    %c0_85 = arith.constant 0 : index
    %229 = vector.load %arg8[%c0_84, %c0_85] : memref<32x32xf32, #tpu.memory_space<vmem>>, vector<32x32xf32>
    %230 = arith.truncf %13 : vector<8x32xf32> to vector<8x32xbf16>
    %231 = arith.truncf %229 : vector<32x32xf32> to vector<32x32xbf16>
    %cst_86 = arith.constant dense<0.000000e+00> : vector<8x32xf32>
    %232 = tpu.matmul %230, %231, %cst_86 {dimension_numbers = #tpu.dot_dimension_numbers<[1], [0], [0], [1], [0, 0, 1, 1], [], []>} : vector<8x32xbf16>, vector<32x32xbf16>, vector<8x32xf32> -> vector<8x32xf32>
    %cst_87 = arith.constant 0.000000e+00 : f32
    %233 = vector.broadcast %cst_87 : f32 to vector<8x32xf32>
    %234 = arith.subf %233, %228 : vector<8x32xf32>
    %235 = math.exp %234 : vector<8x32xf32>
    %cst_88 = arith.constant 1.000000e+00 : f32
    %236 = vector.broadcast %cst_88 : f32 to vector<8x32xf32>
    %237 = arith.addf %236, %235 : vector<8x32xf32>
    %cst_89 = arith.constant 1.000000e+00 : f32
    %238 = vector.broadcast %cst_89 : f32 to vector<8x32xf32>
    %239 = arith.divf %238, %237 : vector<8x32xf32>
    %240 = arith.mulf %228, %239 : vector<8x32xf32>
    %241 = arith.mulf %240, %232 : vector<8x32xf32>
    %c0_90 = arith.constant 0 : index
    %c0_91 = arith.constant 0 : index
    %242 = vector.load %arg9[%c0_90, %c0_91] : memref<32x32xf32, #tpu.memory_space<vmem>>, vector<32x32xf32>
    %243 = arith.truncf %241 : vector<8x32xf32> to vector<8x32xbf16>
    %244 = arith.truncf %242 : vector<32x32xf32> to vector<32x32xbf16>
    %cst_92 = arith.constant dense<0.000000e+00> : vector<8x32xf32>
    %245 = tpu.matmul %243, %244, %cst_92 {dimension_numbers = #tpu.dot_dimension_numbers<[1], [0], [0], [1], [0, 0, 1, 1], [], []>} : vector<8x32xbf16>, vector<32x32xbf16>, vector<8x32xf32> -> vector<8x32xf32>
    %246 = arith.addf %224, %245 : vector<8x32xf32>
    %247 = arith.addf %0, %246 : vector<8x32xf32>
    %c0_93 = arith.constant 0 : index
    %c0_94 = arith.constant 0 : index
    %248 = vector.load %arg10[%c0_93, %c0_94] : memref<8x32xf32, #tpu.memory_space<vmem>>, vector<8x32xf32>
    tpu.vector_store %arg10[%c0_93, %c0_94], %247 {strides = array<i32>} : memref<8x32xf32, #tpu.memory_space<vmem>>, vector<8x32xf32>,
    return
  }
  func.func @transform_0(%arg0: i32) -> (i32, i32) {
    %c0_i32 = arith.constant 0 : i32
    %c0_i32_0 = arith.constant 0 : i32
    return %arg0, %c0_i32 : i32, i32
  }
  func.func @transform_1(%arg0: i32) -> (i32, i32) {
    %c0_i32 = arith.constant 0 : i32
    %c0_i32_0 = arith.constant 0 : i32
    %c0_i32_1 = arith.constant 0 : i32
    return %c0_i32, %c0_i32_0 : i32, i32
  }
  func.func @transform_2(%arg0: i32) -> (i32, i32) {
    %c0_i32 = arith.constant 0 : i32
    %c0_i32_0 = arith.constant 0 : i32
    %c0_i32_1 = arith.constant 0 : i32
    return %c0_i32, %c0_i32_0 : i32, i32
  }
  func.func @transform_3(%arg0: i32) -> (i32, i32, i32) {
    %c0_i32 = arith.constant 0 : i32
    %c0_i32_0 = arith.constant 0 : i32
    %c0_i32_1 = arith.constant 0 : i32
    %c0_i32_2 = arith.constant 0 : i32
    return %c0_i32, %c0_i32_0, %c0_i32_1 : i32, i32, i32
  }
  func.func @transform_4(%arg0: i32) -> (i32, i32, i32) {
    %c0_i32 = arith.constant 0 : i32
    %c0_i32_0 = arith.constant 0 : i32
    %c0_i32_1 = arith.constant 0 : i32
    %c0_i32_2 = arith.constant 0 : i32
    return %c0_i32, %c0_i32_0, %c0_i32_1 : i32, i32, i32
  }
  func.func @transform_5(%arg0: i32) -> (i32, i32, i32) {
    %c0_i32 = arith.constant 0 : i32
    %c0_i32_0 = arith.constant 0 : i32
    %c0_i32_1 = arith.constant 0 : i32
    %c0_i32_2 = arith.constant 0 : i32
    return %c0_i32, %c0_i32_0, %c0_i32_1 : i32, i32, i32
  }
  func.func @transform_6(%arg0: i32) -> (i32, i32) {
    %c0_i32 = arith.constant 0 : i32
    %c0_i32_0 = arith.constant 0 : i32
    %c0_i32_1 = arith.constant 0 : i32
    return %c0_i32, %c0_i32_0 : i32, i32
  }
  func.func @transform_7(%arg0: i32) -> (i32, i32) {
    %c0_i32 = arith.constant 0 : i32
    %c0_i32_0 = arith.constant 0 : i32
    %c0_i32_1 = arith.constant 0 : i32
    return %c0_i32, %c0_i32_0 : i32, i32
  }
  func.func @transform_8(%arg0: i32) -> (i32, i32) {
    %c0_i32 = arith.constant 0 : i32
    %c0_i32_0 = arith.constant 0 : i32
    %c0_i32_1 = arith.constant 0 : i32
    return %c0_i32, %c0_i32_0 : i32, i32
  }
  func.func @transform_9(%arg0: i32) -> (i32, i32) {
    %c0_i32 = arith.constant 0 : i32
    %c0_i32_0 = arith.constant 0 : i32
    return %arg0, %c0_i32 : i32, i32
  }
}

module attributes {stable_mosaic.version = 11 : i64} {
  func.func @_head_kernel(%arg0: i32, %arg1: memref<8x32xf32, #tpu.memory_space<vmem>>, %arg2: memref<1x32xf32, #tpu.memory_space<vmem>>, %arg3: memref<32x128xf32, #tpu.memory_space<vmem>>, %arg4: memref<8x128xf32, #tpu.memory_space<vmem>>) attributes {dimension_semantics = [#tpu.dimension_semantics<parallel>], iteration_bounds = array<i64: 2>, scalar_prefetch = 0 : i64, scratch_operands = 0 : i64, tpu.core_type = #tpu.core_type<tc>, window_params = [{transform_indices = @transform_0, window_bounds = array<i64: 8, 32>}, {pipeline_mode = #tpu.pipeline_mode<synchronous>, transform_indices = @transform_1, window_bounds = array<i64: 1, 32>}, {pipeline_mode = #tpu.pipeline_mode<synchronous>, transform_indices = @transform_2, window_bounds = array<i64: 32, 128>}, {transform_indices = @transform_3, window_bounds = array<i64: 8, 128>}]} {
    %c0 = arith.constant 0 : index
    %c0_0 = arith.constant 0 : index
    %0 = vector.load %arg1[%c0, %c0_0] : memref<8x32xf32, #tpu.memory_space<vmem>>, vector<8x32xf32>
    %c0_1 = arith.constant 0 : index
    %c0_2 = arith.constant 0 : index
    %1 = vector.load %arg2[%c0_1, %c0_2] : memref<1x32xf32, #tpu.memory_space<vmem>>, vector<1x32xf32>
    %2 = arith.mulf %0, %0 : vector<8x32xf32>
    %cst = arith.constant dense<0.000000e+00> : vector<8xf32>
    %3 = vector.multi_reduction <add>, %2, %cst [1] : vector<8x32xf32> to vector<8xf32>
    %4 = vector.shape_cast %3 : vector<8xf32> to vector<8x1xf32>
    %cst_3 = arith.constant 3.200000e+01 : f32
    %5 = vector.broadcast %cst_3 : f32 to vector<8x1xf32>
    %6 = arith.divf %4, %5 : vector<8x1xf32>
    %cst_4 = arith.constant 9.99999997E-7 : f32
    %7 = vector.broadcast %cst_4 : f32 to vector<8x1xf32>
    %8 = arith.addf %6, %7 : vector<8x1xf32>
    %9 = math.rsqrt %8 : vector<8x1xf32>
    %10 = vector.broadcast %9 : vector<8x1xf32> to vector<8x32xf32>
    %11 = arith.mulf %0, %10 : vector<8x32xf32>
    %12 = vector.broadcast %1 : vector<1x32xf32> to vector<8x32xf32>
    %13 = arith.mulf %11, %12 : vector<8x32xf32>
    %c0_5 = arith.constant 0 : index
    %c0_6 = arith.constant 0 : index
    %14 = vector.load %arg3[%c0_5, %c0_6] : memref<32x128xf32, #tpu.memory_space<vmem>>, vector<32x128xf32>
    %15 = arith.truncf %13 : vector<8x32xf32> to vector<8x32xbf16>
    %16 = arith.truncf %14 : vector<32x128xf32> to vector<32x128xbf16>
    %cst_7 = arith.constant dense<0.000000e+00> : vector<8x128xf32>
    %17 = tpu.matmul %15, %16, %cst_7 {dimension_numbers = #tpu.dot_dimension_numbers<[1], [0], [0], [1], [0, 0, 1, 1], [], []>} : vector<8x32xbf16>, vector<32x128xbf16>, vector<8x128xf32> -> vector<8x128xf32>
    %c0_8 = arith.constant 0 : index
    %c0_9 = arith.constant 0 : index
    %18 = vector.load %arg4[%c0_8, %c0_9] : memref<8x128xf32, #tpu.memory_space<vmem>>, vector<8x128xf32>
    tpu.vector_store %arg4[%c0_8, %c0_9], %17 {strides = array<i32>} : memref<8x128xf32, #tpu.memory_space<vmem>>, vector<8x128xf32>,
    return
  }
  func.func @transform_0(%arg0: i32) -> (i32, i32) {
    %c0_i32 = arith.constant 0 : i32
    %c0_i32_0 = arith.constant 0 : i32
    return %arg0, %c0_i32 : i32, i32
  }
  func.func @transform_1(%arg0: i32) -> (i32, i32) {
    %c0_i32 = arith.constant 0 : i32
    %c0_i32_0 = arith.constant 0 : i32
    %c0_i32_1 = arith.constant 0 : i32
    return %c0_i32, %c0_i32_0 : i32, i32
  }
  func.func @transform_2(%arg0: i32) -> (i32, i32) {
    %c0_i32 = arith.constant 0 : i32
    %c0_i32_0 = arith.constant 0 : i32
    %c0_i32_1 = arith.constant 0 : i32
    return %c0_i32, %c0_i32_0 : i32, i32
  }
  func.func @transform_3(%arg0: i32) -> (i32, i32) {
    %c0_i32 = arith.constant 0 : i32
    %c0_i32_0 = arith.constant 0 : i32
    return %arg0, %c0_i32 : i32, i32
  }
}

</mosaic_0001>

<llo_original>
// kernel: main_model_forward.6
$region0: #{main_model_forward.6}
  #allocation0 [shape = 'u32[]', space=smem, size = 0x4, offset = 0x4, fixed_abs, tag = 'smem constant byte address 0x4 - core index']
  #allocation1 [shape = 'u32[72,128]{1,0:T(1,128)}', space=vmem, size = 0x9000, scoped, tag = 'internal scratch']
  %s0 = inlined_call_operand.vmem [shape: f32[16,32], index: 0, kind: input, shape index: {}]
  %s1 = inlined_call_operand.vmem [shape: f32[1,32], index: 1, kind: input, shape index: {}]
  %s2 = inlined_call_operand.vmem [shape: f32[32,64], index: 2, kind: input, shape index: {}]
  %s3 = inlined_call_operand.vmem [shape: f32[32,64], index: 3, kind: input, shape index: {}]
  %s4 = inlined_call_operand.vmem [shape: f32[64,32], index: 4, kind: input, shape index: {}]
  %s5 = inlined_call_operand.vmem [shape: f32[16,32], index: 5, kind: output, shape index: {}]
  %s6 = sld [smem:[#allocation0]]
  $region53: #{main_model_forward.6} parent=0
    _
  %s8 = ssub.s32 1, %s6
  %s9 = scalar_select 0, %s8, %s6
  loop: start=0, step=1, limit=4
  $region2: #{main_model_forward.6} parent=0 // loop_pre_header
    _
  $region3: #{main_model_forward.6} parent=0 // loop_header
    %s11 = sphi 0, %s15
    %p12 = scmp.ge.s32.totalorder %s11, 4
    %s21 = sphi 0, %s23
    %s24 = sphi 0, %s21
    %s25 = sphi 0, %s24
    %s41 = sphi 0, %s25
    %s45 = sphi 0, %s45
    %s47 = sphi 0, %s45
    %s48 = sphi 0, %s47
    %s62 = sphi 0, %s48
    %s66 = sphi 0, %s66
    %s68 = sphi 0, %s66
    %s69 = sphi 0, %s68
    %s83 = sphi 0, %s69
    %s87 = sphi 0, %s87
    %s89 = sphi 0, %s87
    %s90 = sphi 0, %s89
    %s104 = sphi 0, %s90
    %s108 = sphi 0, %s108
    %s110 = sphi 0, %s108
    %s111 = sphi 0, %s110
    %s125 = sphi 0, %s111
    %s131 = sphi 0, %s133
    %s134 = sphi 0, %s131
    %s135 = sphi 0, %s134
    %s151 = sphi 0, %s135
  $region4: #{main_model_forward.6} parent=0 // loop_header_branch
    %14 = sbr.rel (%p12) target = $region8
  $region5: #{main_model_forward.6} parent=0 // loop_body
    %s16 = ssub.s32 %s11, 1
    %s17 = ssub.s32 %s11, 2
    %s18 = sadd.s32 %s11, 1
    %s19 = ssub.s32 %s11, %s18
    %p20 = scmp.eq.s32.totalorder %s19, 0
    %s22 = sadd.s32 %s21, 1
    %s23 = scalar_select %p20, %s21, %s22
    %p26 = pneg %p20
    %p27 = scmp.eq.s32.totalorder %s11, 1
    %p28 = por %p26, %p27
    %p29 = scmp.ne.s32.totalorder %s21, %s24
    %p30 = scmp.eq.s32.totalorder %s11, 0
    %p31 = por %p29, %p30
    %p32 = scmp.ne.s32.totalorder %s21, %s24
    %p33 = scmp.eq.s32.totalorder %s16, 1
    %p34 = por %p32, %p33
    %p35 = scmp.ne.s32.totalorder %s24, %s25
    %p36 = scmp.eq.s32.totalorder %s16, 0
    %p37 = por %p35, %p36
    %p38 = scmp.ne.s32.totalorder %s24, %s25
    %p39 = scmp.eq.s32.totalorder %s17, 1
    %p40 = por %p38, %p39
    %p42 = scmp.ne.s32.totalorder %s25, %s41
    %p43 = scmp.eq.s32.totalorder %s17, 0
    %p44 = por %p42, %p43
    %s46 = sadd.s32 %s45, 1
    %p49 = scmp.eq.s32.totalorder %s11, 1
    %p50 = scmp.ne.s32.totalorder %s45, %s47
    %p51 = scmp.eq.s32.totalorder %s11, 0
    %p52 = por %p50, %p51
    %p53 = scmp.ne.s32.totalorder %s45, %s47
    %p54 = scmp.eq.s32.totalorder %s16, 1
    %p55 = por %p53, %p54
    %p56 = scmp.ne.s32.totalorder %s47, %s48
    %p57 = scmp.eq.s32.totalorder %s16, 0
    %p58 = por %p56, %p57
    %p59 = scmp.ne.s32.totalorder %s47, %s48
    %p60 = scmp.eq.s32.totalorder %s17, 1
    %p61 = por %p59, %p60
    %p63 = scmp.ne.s32.totalorder %s48, %s62
    %p64 = scmp.eq.s32.totalorder %s17, 0
    %p65 = por %p63, %p64
    %s67 = sadd.s32 %s66, 1
    %p70 = scmp.eq.s32.totalorder %s11, 1
    %p71 = scmp.ne.s32.totalorder %s66, %s68
    %p72 = scmp.eq.s32.totalorder %s11, 0
    %p73 = por %p71, %p72
    %p74 = scmp.ne.s32.totalorder %s66, %s68
    %p75 = scmp.eq.s32.totalorder %s16, 1
    %p76 = por %p74, %p75
    %p77 = scmp.ne.s32.totalorder %s68, %s69
    %p78 = scmp.eq.s32.totalorder %s16, 0
    %p79 = por %p77, %p78
    %p80 = scmp.ne.s32.totalorder %s68, %s69
    %p81 = scmp.eq.s32.totalorder %s17, 1
    %p82 = por %p80, %p81
    %p84 = scmp.ne.s32.totalorder %s69, %s83
    %p85 = scmp.eq.s32.totalorder %s17, 0
    %p86 = por %p84, %p85
    %s88 = sadd.s32 %s87, 1
    %p91 = scmp.eq.s32.totalorder %s11, 1
    %p92 = scmp.ne.s32.totalorder %s87, %s89
    %p93 = scmp.eq.s32.totalorder %s11, 0
    %p94 = por %p92, %p93
    %p95 = scmp.ne.s32.totalorder %s87, %s89
    %p96 = scmp.eq.s32.totalorder %s16, 1
    %p97 = por %p95, %p96
    %p98 = scmp.ne.s32.totalorder %s89, %s90
    %p99 = scmp.eq.s32.totalorder %s16, 0
    %p100 = por %p98, %p99
    %p101 = scmp.ne.s32.totalorder %s89, %s90
    %p102 = scmp.eq.s32.totalorder %s17, 1
    %p103 = por %p101, %p102
    %p105 = scmp.ne.s32.totalorder %s90, %s104
    %p106 = scmp.eq.s32.totalorder %s17, 0
    %p107 = por %p105, %p106
    %s109 = sadd.s32 %s108, 1
    %p112 = scmp.eq.s32.totalorder %s11, 1
    %p113 = scmp.ne.s32.totalorder %s108, %s110
    %p114 = scmp.eq.s32.totalorder %s11, 0
    %p115 = por %p113, %p114
    %p116 = scmp.ne.s32.totalorder %s108, %s110
    %p117 = scmp.eq.s32.totalorder %s16, 1
    %p118 = por %p116, %p117
    %p119 = scmp.ne.s32.totalorder %s110, %s111
    %p120 = scmp.eq.s32.totalorder %s16, 0
    %p121 = por %p119, %p120
    %p122 = scmp.ne.s32.totalorder %s110, %s111
    %p123 = scmp.eq.s32.totalorder %s17, 1
    %p124 = por %p122, %p123
    %p126 = scmp.ne.s32.totalorder %s111, %s125
    %p127 = scmp.eq.s32.totalorder %s17, 0
    %p128 = por %p126, %p127
    %s129 = ssub.s32 %s11, %s18
    %p130 = scmp.eq.s32.totalorder %s129, 0
    %s132 = sadd.s32 %s131, 1
    %s133 = scalar_select %p130, %s131, %s132
    %p136 = pneg %p130
    %p137 = scmp.eq.s32.totalorder %s11, 1
    %p138 = por %p136, %p137
    %p139 = scmp.ne.s32.totalorder %s131, %s134
    %p140 = scmp.eq.s32.totalorder %s11, 0
    %p141 = por %p139, %p140
    %p142 = scmp.ne.s32.totalorder %s131, %s134
    %p143 = scmp.eq.s32.totalorder %s16, 1
    %p144 = por %p142, %p143
    %p145 = scmp.ne.s32.totalorder %s134, %s135
    %p146 = scmp.eq.s32.totalorder %s16, 0
    %p147 = por %p145, %p146
    %p148 = scmp.ne.s32.totalorder %s134, %s135
    %p149 = scmp.eq.s32.totalorder %s17, 1
    %p150 = por %p148, %p149
    %p152 = scmp.ne.s32.totalorder %s135, %s151
    %p153 = scmp.eq.s32.totalorder %s17, 0
    %p154 = por %p152, %p153
    %p155 = scmp.le.s32.totalorder 1, %s11
    %p156 = scmp.lt.s32.totalorder %s11, 3
    %p157 = pnand %p155, %p156
    %p158 = pneg %p157
    // Predicated region
    $region9: #{main_model_forward.6} parent=5 // pred_check
      _
    $region10: #{main_model_forward.6} parent=5 // pred_check_branch
      %160 = sbr.rel (%p157) target = $region12
    $region11: #{main_model_forward.6} parent=5 // pred_region
      %s161 = ssub.s32 %s11, 1
      // Predicated region
      $region13: #{main_model_forward.6} parent=11 // pred_check
        %p162 = pneg %p58
      $region14: #{main_model_forward.6} parent=11 // pred_check_branch
        %164 = sbr.rel (%p162) target = $region16
      $region15: #{main_model_forward.6} parent=11 // pred_region
        _
      $region16: #{main_model_forward.6} parent=11 // pred_fallthru
        _
      // Predicated region
      $region17: #{main_model_forward.6} parent=11 // pred_check
        %p165 = pneg %p79
      $region18: #{main_model_forward.6} parent=11 // pred_check_branch
        %167 = sbr.rel (%p165) target = $region20
      $region19: #{main_model_forward.6} parent=11 // pred_region
        _
      $region20: #{main_model_forward.6} parent=11 // pred_fallthru
        _
      // Predicated region
      $region21: #{main_model_forward.6} parent=11 // pred_check
        %p168 = pneg %p100
      $region22: #{main_model_forward.6} parent=11 // pred_check_branch
        %170 = sbr.rel (%p168) target = $region24
      $region23: #{main_model_forward.6} parent=11 // pred_region
        _
      $region24: #{main_model_forward.6} parent=11 // pred_fallthru
        _
      // Predicated region
      $region25: #{main_model_forward.6} parent=11 // pred_check
        %p171 = pneg %p121
      $region26: #{main_model_forward.6} parent=11 // pred_check_branch
        %173 = sbr.rel (%p171) target = $region28
      $region27: #{main_model_forward.6} parent=11 // pred_region
        _
      $region28: #{main_model_forward.6} parent=11 // pred_fallthru
        _
    $region12: #{main_model_forward.6} parent=5 // pred_fallthru
      _
    %p174 = scmp.lt.s32.totalorder %s11, 2
    // Predicated region
    $region29: #{main_model_forward.6} parent=5 // pred_check
      %p175 = pneg %p174
    $region30: #{main_model_forward.6} parent=5 // pred_check_branch
      %177 = sbr.rel (%p175) target = $region32
    $region31: #{main_model_forward.6} parent=5 // pred_region
      // Predicated region
      $region33: #{main_model_forward.6} parent=31 // pred_check
        %p178 = pneg %p31
      $region34: #{main_model_forward.6} parent=31 // pred_check_branch
        %180 = sbr.rel (%p178) target = $region36
      $region35: #{main_model_forward.6} parent=31 // pred_region
        %p181 = scmp.lt.s32.totalorder %s11, 1
        %s182 = scalar_select %p181, %s11, 1
        %s183 = smul.addr %s182, 8
        %s184 = scalar_lea.vmem %s0, %s183
      $region36: #{main_model_forward.6} parent=31 // pred_fallthru
        _
    $region32: #{main_model_forward.6} parent=5 // pred_fallthru
      _
    %p185 = scmp.le.s32.totalorder 1, %s11
    %p186 = scmp.lt.s32.totalorder %s11, 3
    %p187 = pnand %p185, %p186
    %p188 = pneg %p187
    // Predicated region
    $region37: #{main_model_forward.6} parent=5 // pred_check
      _
    $region38: #{main_model_forward.6} parent=5 // pred_check_branch
      %190 = sbr.rel (%p187) target = $region40
    $region39: #{main_model_forward.6} parent=5 // pred_region
      %s191 = ssub.s32 %s11, 1
      %p192 = scmp.lt.s32.totalorder %s16, 1
      %s193 = scalar_select %p192, %s16, 1
      %s194 = smul.addr %s193, 8
      %s195 = scalar_lea.vmem %s0, %s194
      %p196 = pneg %p37
      %p197 = pneg %p34
      %p198 = pneg %p58
      %p199 = pneg %p55
      %p200 = pneg %p79
      %p201 = pneg %p76
      %p202 = pneg %p100
      %p203 = pneg %p97
      %p204 = pneg %p121
      %p205 = pneg %p118
      %p206 = pneg %p147
      %p207 = pneg %p144
      %p208 = scmp.lt.s32.totalorder %s16, 1
      %s209 = scalar_select %p208, %s16, 1
      %s210 = smul.addr %s209, 8
      %s211 = scalar_lea.vmem %s5, %s210
      %p212 = scmp.lt.s32.totalorder %s16, 1
      %s213 = scalar_select %p212, %s16, 1
      %s214 = smul.addr %s213, 8
      %s215 = scalar_lea.vmem %s0, %s214
      %p216 = scmp.lt.s32.totalorder %s16, 1
      %s217 = scalar_select %p216, %s16, 1
      %s218 = smul.addr %s217, 8
      %s219 = scalar_lea.vmem %s5, %s218
      %v221 = vld [vmem:[%s215] sm:$0xff]
      %v222 = vld [vmem:[%s1] sm:$0x1]
      %v223 = vmul.f32 %v221, %v221
      %vm224 = vcmask 261120
      %v225 = vsel %vm224, %v223, 0.0
      %226 = vadd.xlane.f32.xlu0 %v225
      %v227 = vpop.xlane.xlu0 %226
      %v228 = vrcp.pop 32.0
      %v229 = vmul.f32 32.0, %v228
      %v230 = vsub.f32 1.0, %v229
      %v231 = vmul.f32 %v228, %v230
      %v232 = vadd.f32 %v228, %v231
      %vm233 = vweird.f32 %v228
      %v234 = vsel %vm233, %v228, %v232
      %v235 = vmul.f32 %v227, %v234
      %v236 = vadd.f32 %v235, 1e-06
      %v237 = vrsqrt.pop %v236
      %v238 = vmul.f32 %v237, %v236
      %v239 = vmul.f32 %v238, %v237
      %v240 = vmul.f32 0.5, %v239
      %v241 = vsub.f32 1.5, %v240
      %v242 = vmul.f32 %v237, %v241
      %vm243 = vweird.f32 %v236
      %vm244 = vweird.f32 %v237
      %vm245 = vmor %vm243, %vm244
      %v246 = vsel %vm245, %v237, %v242
      %v247 = vmul.f32 %v221, %v246
      %v249 = vperm.slane %v222, 0
      %v251 = vmul.f32 %v247, %v249
      %v252 = vld [vmem:[%s2] sm:$0xff]
      %v253 = vld [vmem:[%s2 + $0x8] sm:$0xff]
      %v254 = vld [vmem:[%s2 + $0x10] sm:$0xff]
      %v255 = vld [vmem:[%s2 + $0x18] sm:$0xff]
      %v256 = vpack.c.bf16 %v251, %v251
      %v257 = vpack.c.bf16 %v253, %v252
      %v258 = vpack.c.bf16 %v255, %v254
      %v260 = vsel %vm224, %v256, 0
      %262 = vmatpush.bf16.msra.mxu0 0
      %263 = vmatpush.bf16.msra.mxu0 0
      %264 = vmatpush.bf16.msra.mxu0 0
      %265 = vmatpush.bf16.msra.mxu0 0
      %266 = vmatpush.bf16.msra.mxu0 0
      %267 = vmatpush.bf16.msra.mxu0 0
      %268 = vmatpush.bf16.msra.mxu0 %v258
      %269 = vmatpush.bf16.msra.mxu0 %v257
      %270 = vmatmul.bf16.gmra.mxu0 %v260
      %v271 = vpop.f32.mrf.mxu0
      %v272 = vadd.f32 0.0, %v271
      %v273 = vpop.f32.mrf.mxu0
      %274 = vdwg.mxu0
      %v275 = vld [vmem:[%s3] sm:$0xff]
      %v276 = vld [vmem:[%s3 + $0x8] sm:$0xff]
      %v277 = vld [vmem:[%s3 + $0x10] sm:$0xff]
      %v278 = vld [vmem:[%s3 + $0x18] sm:$0xff]
      %v279 = vpack.c.bf16 %v276, %v275
      %v280 = vpack.c.bf16 %v278, %v277
      %281 = vmatpush.bf16.msra.mxu0 0
      %282 = vmatpush.bf16.msra.mxu0 0
      %283 = vmatpush.bf16.msra.mxu0 0
      %284 = vmatpush.bf16.msra.mxu0 0
      %285 = vmatpush.bf16.msra.mxu0 0
      %286 = vmatpush.bf16.msra.mxu0 0
      %287 = vmatpush.bf16.msra.mxu0 %v280
      %288 = vmatpush.bf16.msra.mxu0 %v279
      %289 = vmatmul.bf16.gmra.mxu0 %v260
      %v290 = vpop.f32.mrf.mxu0
      %v291 = vadd.f32 0.0, %v290
      %v292 = vpop.f32.mrf.mxu0
      %293 = vdwg.mxu0
      %v294 = vsub.f32 0.0, %v272
      %v295 = vmul.f32 %v294, 1.442695
      %v296 = vpow.pop %v295
      %v297 = vadd.f32 %v296, 1.0
      %v298 = vrcp.pop %v297
      %v299 = vmul.f32 %v297, %v298
      %v300 = vsub.f32 1.0, %v299
      %v301 = vmul.f32 %v298, %v300
      %v302 = vadd.f32 %v298, %v301
      %vm303 = vweird.f32 %v297
      %vm304 = vweird.f32 %v298
      %vm305 = vmor %vm303, %vm304
      %v306 = vsel %vm305, %v298, %v302
      %v307 = vand.u32 2147483647, %v297
      %vm308 = vcmp.eq.f32.partialorder %v307, 8.507059e+37
      %v309 = vand.u32 %v297, 2147483648
      %v310 = vor.u32 1.1754944e-38, %v309
      %v311 = vsel %vm308, %v310, %v306
      %v312 = vmul.f32 1.0, %v311
      %v313 = vmul.f32 %v272, %v312
      %v314 = vmul.f32 %v313, %v291
      %v315 = vld [vmem:[%s4] sm:$0xff]
      %v316 = vld [vmem:[%s4 + $0x8] sm:$0xff]
      %v317 = vld [vmem:[%s4 + $0x10] sm:$0xff]
      %v318 = vld [vmem:[%s4 + $0x18] sm:$0xff]
      %v319 = vld [vmem:[%s4 + $0x20] sm:$0xff]
      %v320 = vld [vmem:[%s4 + $0x28] sm:$0xff]
      %v321 = vld [vmem:[%s4 + $0x30] sm:$0xff]
      %v322 = vld [vmem:[%s4 + $0x38] sm:$0xff]
      %v323 = vpack.c.bf16 %v314, %v314
      %v324 = vpack.c.bf16 %v316, %v315
      %v325 = vpack.c.bf16 %v318, %v317
      %v326 = vpack.c.bf16 %v320, %v319
      %v327 = vpack.c.bf16 %v322, %v321
      %vm328 = vcmask 523264
      %v330 = vsel %vm328, %v323, 0
      %332 = vmatpush.bf16.msra.mxu0 0
      %333 = vmatpush.bf16.msra.mxu0 0
      %334 = vmatpush.bf16.msra.mxu0 0
      %335 = vmatpush.bf16.msra.mxu0 0
      %336 = vmatpush.bf16.msra.mxu0 %v327
      %337 = vmatpush.bf16.msra.mxu0 %v326
      %338 = vmatpush.bf16.msra.mxu0 %v325
      %339 = vmatpush.bf16.msra.mxu0 %v324
      %340 = vmatmul.bf16.gmra.mxu0 %v330
      %v341 = vpop.f32.mrf.mxu0
      %v342 = vadd.f32 0.0, %v341
      %v343 = vpop.f32.mrf.mxu0
      %344 = vdwg.mxu0
      %v345 = vadd.f32 %v221, %v342
      %346 = vst.msk [vmem:[%s219] sm:$0xff] %vm224, %v345
      %p347 = scmp.lt.s32.totalorder %s16, 1
      %s348 = scalar_select %p347, %s16, 1
      %s349 = smul.addr %s348, 8
      %s350 = scalar_lea.vmem %s5, %s349
      // Predicated region
      $region41: #{main_model_forward.6} parent=39 // pred_check
        %p351 = pneg %p144
      $region42: #{main_model_forward.6} parent=39 // pred_check_branch
        %353 = sbr.rel (%p351) target = $region44
      $region43: #{main_model_forward.6} parent=39 // pred_region
        _
      $region44: #{main_model_forward.6} parent=39 // pred_fallthru
        _
    $region40: #{main_model_forward.6} parent=5 // pred_fallthru
      _
    %p354 = scmp.le.s32.totalorder 2, %s11
    // Predicated region
    $region45: #{main_model_forward.6} parent=5 // pred_check
      %p355 = pneg %p354
    $region46: #{main_model_forward.6} parent=5 // pred_check_branch
      %357 = sbr.rel (%p355) target = $region48
    $region47: #{main_model_forward.6} parent=5 // pred_region
      %s358 = ssub.s32 %s11, 2
      // Predicated region
      $region49: #{main_model_forward.6} parent=47 // pred_check
        %p359 = pneg %p150
      $region50: #{main_model_forward.6} parent=47 // pred_check_branch
        %361 = sbr.rel (%p359) target = $region52
      $region51: #{main_model_forward.6} parent=47 // pred_region
        %p362 = scmp.lt.s32.totalorder %s17, 1
        %s363 = scalar_select %p362, %s17, 1
        %s364 = smul.addr %s363, 8
        %s365 = scalar_lea.vmem %s5, %s364
      $region52: #{main_model_forward.6} parent=47 // pred_fallthru
        _
    $region48: #{main_model_forward.6} parent=5 // pred_fallthru
      _
  $region6: #{main_model_forward.6} parent=0 // loop_footer
    %s15 = sadd.s32 1, %s11
  $region7: #{main_model_forward.6} parent=0 // loop_footer_branch
    %10 = sbr.rel target = $region3
  $region8: #{main_model_forward.6} parent=0 // loop_exit
    _

// kernel: main_model_forward.9
$region0: #{main_model_forward.9}
  #allocation0 [shape = 'u32[]', space=smem, size = 0x4, offset = 0x4, fixed_abs, tag = 'smem constant byte address 0x4 - core index']
  #allocation1 [shape = 'u32[72,128]{1,0:T(1,128)}', space=vmem, size = 0x9000, scoped, tag = 'internal scratch']
  %s0 = inlined_call_operand.vmem [shape: f32[16,32], index: 0, kind: input, shape index: {}]
  %s1 = inlined_call_operand.vmem [shape: f32[1,32], index: 1, kind: input, shape index: {}]
  %s2 = inlined_call_operand.vmem [shape: f32[32,128], index: 2, kind: input, shape index: {}]
  %s3 = inlined_call_operand.hbm [shape: f32[16,128], index: 3, kind: output, shape index: {}]
  %s4 = sld [smem:[#allocation0]]
  $region45: #{main_model_forward.9} parent=0
    _
  %s6 = ssub.s32 1, %s4
  %s7 = scalar_select 0, %s6, %s4
  $region1: #{main_model_forward.9} parent=0
    #allocation2 [shape = 'u8[8192]{0}', space=vmem, size = 0x2000, scoped, tag = 'output window, operand 0']
    #allocation3 [shape = 's32[2]{0}', space=sflag, size = 0x8, scoped, tag = 'scoped memory for main_model_forward.9']
    %8 = vsyncpa [#allocation3], 0
    %s9 = scalar_lea.sflag [#allocation3], 1
    %10 = vsyncpa %s9, 0
    loop: start=0, step=1, limit=4
    $region2: #{main_model_forward.9} parent=1 // loop_pre_header
      _
    $region3: #{main_model_forward.9} parent=1 // loop_header
      %s12 = sphi 0, %s16
      %p13 = scmp.ge.s32.totalorder %s12, 4
      %s22 = sphi 0, %s24
      %s25 = sphi 0, %s22
      %s26 = sphi 0, %s25
      %s42 = sphi 0, %s26
      %s46 = sphi 0, %s46
      %s48 = sphi 0, %s46
      %s49 = sphi 0, %s48
      %s63 = sphi 0, %s49
      %s67 = sphi 0, %s67
      %s69 = sphi 0, %s67
      %s70 = sphi 0, %s69
      %s84 = sphi 0, %s70
      %s90 = sphi 0, %s92
      %s93 = sphi 0, %s90
      %s94 = sphi 0, %s93
      %s110 = sphi 0, %s94
    $region4: #{main_model_forward.9} parent=1 // loop_header_branch
      %15 = sbr.rel (%p13) target = $region8
    $region5: #{main_model_forward.9} parent=1 // loop_body
      %s17 = ssub.s32 %s12, 1
      %s18 = ssub.s32 %s12, 2
      %s19 = sadd.s32 %s12, 1
      %s20 = ssub.s32 %s12, %s19
      %p21 = scmp.eq.s32.totalorder %s20, 0
      %s23 = sadd.s32 %s22, 1
      %s24 = scalar_select %p21, %s22, %s23
      %p27 = pneg %p21
      %p28 = scmp.eq.s32.totalorder %s12, 1
      %p29 = por %p27, %p28
      %p30 = scmp.ne.s32.totalorder %s22, %s25
      %p31 = scmp.eq.s32.totalorder %s12, 0
      %p32 = por %p30, %p31
      %p33 = scmp.ne.s32.totalorder %s22, %s25
      %p34 = scmp.eq.s32.totalorder %s17, 1
      %p35 = por %p33, %p34
      %p36 = scmp.ne.s32.totalorder %s25, %s26
      %p37 = scmp.eq.s32.totalorder %s17, 0
      %p38 = por %p36, %p37
      %p39 = scmp.ne.s32.totalorder %s25, %s26
      %p40 = scmp.eq.s32.totalorder %s18, 1
      %p41 = por %p39, %p40
      %p43 = scmp.ne.s32.totalorder %s26, %s42
      %p44 = scmp.eq.s32.totalorder %s18, 0
      %p45 = por %p43, %p44
      %s47 = sadd.s32 %s46, 1
      %p50 = scmp.eq.s32.totalorder %s12, 1
      %p51 = scmp.ne.s32.totalorder %s46, %s48
      %p52 = scmp.eq.s32.totalorder %s12, 0
      %p53 = por %p51, %p52
      %p54 = scmp.ne.s32.totalorder %s46, %s48
      %p55 = scmp.eq.s32.totalorder %s17, 1
      %p56 = por %p54, %p55
      %p57 = scmp.ne.s32.totalorder %s48, %s49
      %p58 = scmp.eq.s32.totalorder %s17, 0
      %p59 = por %p57, %p58
      %p60 = scmp.ne.s32.totalorder %s48, %s49
      %p61 = scmp.eq.s32.totalorder %s18, 1
      %p62 = por %p60, %p61
      %p64 = scmp.ne.s32.totalorder %s49, %s63
      %p65 = scmp.eq.s32.totalorder %s18, 0
      %p66 = por %p64, %p65
      %s68 = sadd.s32 %s67, 1
      %p71 = scmp.eq.s32.totalorder %s12, 1
      %p72 = scmp.ne.s32.totalorder %s67, %s69
      %p73 = scmp.eq.s32.totalorder %s12, 0
      %p74 = por %p72, %p73
      %p75 = scmp.ne.s32.totalorder %s67, %s69
      %p76 = scmp.eq.s32.totalorder %s17, 1
      %p77 = por %p75, %p76
      %p78 = scmp.ne.s32.totalorder %s69, %s70
      %p79 = scmp.eq.s32.totalorder %s17, 0
      %p80 = por %p78, %p79
      %p81 = scmp.ne.s32.totalorder %s69, %s70
      %p82 = scmp.eq.s32.totalorder %s18, 1
      %p83 = por %p81, %p82
      %p85 = scmp.ne.s32.totalorder %s70, %s84
      %p86 = scmp.eq.s32.totalorder %s18, 0
      %p87 = por %p85, %p86
      %s88 = ssub.s32 %s12, %s19
      %p89 = scmp.eq.s32.totalorder %s88, 0
      %s91 = sadd.s32 %s90, 1
      %s92 = scalar_select %p89, %s90, %s91
      %p95 = pneg %p89
      %p96 = scmp.eq.s32.totalorder %s12, 1
      %p97 = por %p95, %p96
      %p98 = scmp.ne.s32.totalorder %s90, %s93
      %p99 = scmp.eq.s32.totalorder %s12, 0
      %p100 = por %p98, %p99
      %p101 = scmp.ne.s32.totalorder %s90, %s93
      %p102 = scmp.eq.s32.totalorder %s17, 1
      %p103 = por %p101, %p102
      %p104 = scmp.ne.s32.totalorder %s93, %s94
      %p105 = scmp.eq.s32.totalorder %s17, 0
      %p106 = por %p104, %p105
      %p107 = scmp.ne.s32.totalorder %s93, %s94
      %p108 = scmp.eq.s32.totalorder %s18, 1
      %p109 = por %p107, %p108
      %p111 = scmp.ne.s32.totalorder %s94, %s110
      %p112 = scmp.eq.s32.totalorder %s18, 0
      %p113 = por %p111, %p112
      %p114 = scmp.le.s32.totalorder 1, %s12
      %p115 = scmp.lt.s32.totalorder %s12, 3
      %p116 = pnand %p114, %p115
      %p117 = pneg %p116
      // Predicated region
      $region9: #{main_model_forward.9} parent=5 // pred_check
        _
      $region10: #{main_model_forward.9} parent=5 // pred_check_branch
        %119 = sbr.rel (%p116) target = $region12
      $region11: #{main_model_forward.9} parent=5 // pred_region
        %s120 = ssub.s32 %s12, 1
        // Predicated region
        $region13: #{main_model_forward.9} parent=11 // pred_check
          %p121 = pneg %p59
        $region14: #{main_model_forward.9} parent=11 // pred_check_branch
          %123 = sbr.rel (%p121) target = $region16
        $region15: #{main_model_forward.9} parent=11 // pred_region
          _
        $region16: #{main_model_forward.9} parent=11 // pred_fallthru
          _
        // Predicated region
        $region17: #{main_model_forward.9} parent=11 // pred_check
          %p124 = pneg %p80
        $region18: #{main_model_forward.9} parent=11 // pred_check_branch
          %126 = sbr.rel (%p124) target = $region20
        $region19: #{main_model_forward.9} parent=11 // pred_region
          _
        $region20: #{main_model_forward.9} parent=11 // pred_fallthru
          _
      $region12: #{main_model_forward.9} parent=5 // pred_fallthru
        _
      %p127 = scmp.lt.s32.totalorder %s12, 2
      // Predicated region
      $region21: #{main_model_forward.9} parent=5 // pred_check
        %p128 = pneg %p127
      $region22: #{main_model_forward.9} parent=5 // pred_check_branch
        %130 = sbr.rel (%p128) target = $region24
      $region23: #{main_model_forward.9} parent=5 // pred_region
        // Predicated region
        $region25: #{main_model_forward.9} parent=23 // pred_check
          %p131 = pneg %p32
        $region26: #{main_model_forward.9} parent=23 // pred_check_branch
          %133 = sbr.rel (%p131) target = $region28
        $region27: #{main_model_forward.9} parent=23 // pred_region
          %p134 = scmp.lt.s32.totalorder %s12, 1
          %s135 = scalar_select %p134, %s12, 1
          %s136 = smul.addr %s135, 8
          %s137 = scalar_lea.vmem %s0, %s136
        $region28: #{main_model_forward.9} parent=23 // pred_fallthru
          _
      $region24: #{main_model_forward.9} parent=5 // pred_fallthru
        _
      %p138 = scmp.le.s32.totalorder 1, %s12
      %p139 = scmp.lt.s32.totalorder %s12, 3
      %p140 = pnand %p138, %p139
      %p141 = pneg %p140
      // Predicated region
      $region29: #{main_model_forward.9} parent=5 // pred_check
        _
      $region30: #{main_model_forward.9} parent=5 // pred_check_branch
        %143 = sbr.rel (%p140) target = $region32
      $region31: #{main_model_forward.9} parent=5 // pred_region
        %s144 = ssub.s32 %s12, 1
        %p145 = scmp.lt.s32.totalorder %s17, 1
        %s146 = scalar_select %p145, %s17, 1
        %s147 = smul.addr %s146, 8
        %s148 = scalar_lea.vmem %s0, %s147
        %p149 = pneg %p38
        %p150 = pneg %p35
        %p151 = pneg %p59
        %p152 = pneg %p56
        %p153 = pneg %p80
        %p154 = pneg %p77
        %p155 = pneg %p106
        %p156 = pneg %p103
        %s157 = sand.u32 %s93, 1
        %s158 = scalar_lea.sflag [#allocation3], %s157
        %s159 = sand.u32 %s93, 1
        %s160 = smul.addr %s159, 8
        %s161 = scalar_lea.vmem [#allocation2], %s160
        %p162 = scmp.lt.s32.totalorder %s17, 1
        %s163 = scalar_select %p162, %s17, 1
        %s164 = smul.addr %s163, 8
        %s165 = scalar_lea.vmem %s0, %s164
        %v167 = vld [vmem:[%s165] sm:$0xff]
        %v168 = vld [vmem:[%s1] sm:$0x1]
        %v169 = vmul.f32 %v167, %v167
        %vm170 = vcmask 261120
        %v171 = vsel %vm170, %v169, 0.0
        %172 = vadd.xlane.f32.xlu0 %v171
        %v173 = vpop.xlane.xlu0 %172
        %v174 = vrcp.pop 32.0
        %v175 = vmul.f32 32.0, %v174
        %v176 = vsub.f32 1.0, %v175
        %v177 = vmul.f32 %v174, %v176
        %v178 = vadd.f32 %v174, %v177
        %vm179 = vweird.f32 %v174
        %v180 = vsel %vm179, %v174, %v178
        %v181 = vmul.f32 %v173, %v180
        %v182 = vadd.f32 %v181, 1e-06
        %v183 = vrsqrt.pop %v182
        %v184 = vmul.f32 %v183, %v182
        %v185 = vmul.f32 %v184, %v183
        %v186 = vmul.f32 0.5, %v185
        %v187 = vsub.f32 1.5, %v186
        %v188 = vmul.f32 %v183, %v187
        %vm189 = vweird.f32 %v182
        %vm190 = vweird.f32 %v183
        %vm191 = vmor %vm189, %vm190
        %v192 = vsel %vm191, %v183, %v188
        %v193 = vmul.f32 %v167, %v192
        %v195 = vperm.slane %v168, 0
        %v197 = vmul.f32 %v193, %v195
        %v198 = vld [vmem:[%s2] sm:$0xff]
        %v199 = vld [vmem:[%s2 + $0x8] sm:$0xff]
        %v200 = vld [vmem:[%s2 + $0x10] sm:$0xff]
        %v201 = vld [vmem:[%s2 + $0x18] sm:$0xff]
        %v202 = vpack.c.bf16 %v197, %v197
        %v203 = vpack.c.bf16 %v199, %v198
        %v204 = vpack.c.bf16 %v201, %v200
        %v206 = vsel %vm170, %v202, 0
        %208 = vmatpush.bf16.msra.mxu0 0
        %209 = vmatpush.bf16.msra.mxu0 0
        %210 = vmatpush.bf16.msra.mxu0 0
        %211 = vmatpush.bf16.msra.mxu0 0
        %212 = vmatpush.bf16.msra.mxu0 0
        %213 = vmatpush.bf16.msra.mxu0 0
        %214 = vmatpush.bf16.msra.mxu0 %v204
        %215 = vmatpush.bf16.msra.mxu0 %v203
        %216 = vmatmul.bf16.gmra.mxu0 %v206
        %v217 = vpop.f32.mrf.mxu0
        %v218 = vadd.f32 0.0, %v217
        %v219 = vpop.f32.mrf.mxu0
        %220 = vdwg.mxu0
        %221 = vst [vmem:[%s161] sm:$0xff] %v218
        %s222 = sand.u32 %s93, 1
        %s223 = scalar_lea.sflag [#allocation3], %s222
        %s224 = sand.u32 %s93, 1
        %s225 = smul.addr %s224, 8
        %s226 = scalar_lea.vmem [#allocation2], %s225
        // Predicated region
        $region33: #{main_model_forward.9} parent=31 // pred_check
          %p227 = pneg %p103
        $region34: #{main_model_forward.9} parent=31 // pred_check_branch
          %229 = sbr.rel (%p227) target = $region36
        $region35: #{main_model_forward.9} parent=31 // pred_region
          %231 = vsyncadd %s223, 0
          %s232 = smul.addr %s17, 8
          %s233 = scalar_lea.hbm %s3, %s232
          %s235 = sshll.u32 %s226, 4
          %s236 = int_to_ptr.vmem [resolvable:$true] %s235
          %s237 = sshll.u32 %s233, 4
          %s238 = int_to_ptr.hbm [resolvable:$true] %s237
          %240 = dma.vmem_to_hbm [thread:$0]  %s236, 128, %s238, %s223
        $region36: #{main_model_forward.9} parent=31 // pred_fallthru
          _
      $region32: #{main_model_forward.9} parent=5 // pred_fallthru
        _
      %p241 = scmp.le.s32.totalorder 2, %s12
      // Predicated region
      $region37: #{main_model_forward.9} parent=5 // pred_check
        %p242 = pneg %p241
      $region38: #{main_model_forward.9} parent=5 // pred_check_branch
        %244 = sbr.rel (%p242) target = $region40
      $region39: #{main_model_forward.9} parent=5 // pred_region
        %s245 = ssub.s32 %s12, 2
        // Predicated region
        $region41: #{main_model_forward.9} parent=39 // pred_check
          %p246 = pneg %p109
        $region42: #{main_model_forward.9} parent=39 // pred_check_branch
          %248 = sbr.rel (%p246) target = $region44
        $region43: #{main_model_forward.9} parent=39 // pred_region
          %s249 = sand.u32 %s94, 1
          %s250 = scalar_lea.sflag [#allocation3], %s249
          %s251 = sand.u32 %s94, 1
          %s252 = smul.addr %s251, 8
          %s253 = scalar_lea.vmem [#allocation2], %s252
          %255 = dma.done %s250, 128
        $region44: #{main_model_forward.9} parent=39 // pred_fallthru
          _
      $region40: #{main_model_forward.9} parent=5 // pred_fallthru
        _
    $region6: #{main_model_forward.9} parent=1 // loop_footer
      %s16 = sadd.s32 1, %s12
    $region7: #{main_model_forward.9} parent=1 // loop_footer_branch
      %11 = sbr.rel target = $region3
    $region8: #{main_model_forward.9} parent=1 // loop_exit
      _
    %256 = vsyncpa [#allocation3], 1
    %s257 = scalar_lea.sflag [#allocation3], 1
    %258 = vsyncpa %s257, 1

// kernel: main_model_forward.5
$region0: #{main_model_forward.5}
  #allocation0 [shape = 'u32[]', space=smem, size = 0x4, offset = 0x4, fixed_abs, tag = 'smem constant byte address 0x4 - core index']
  #allocation1 [shape = 'u32[72,128]{1,0:T(1,128)}', space=vmem, size = 0x9000, scoped, tag = 'internal scratch']
  %s0 = inlined_call_operand.vmem [shape: f32[16,32], index: 0, kind: input, shape index: {}]
  %s1 = inlined_call_operand.vmem [shape: f32[8,8], index: 1, kind: input, shape index: {}]
  %s2 = inlined_call_operand.vmem [shape: f32[8,8], index: 2, kind: input, shape index: {}]
  %s3 = inlined_call_operand.vmem [shape: f32[8,8], index: 3, kind: input, shape index: {}]
  %s4 = inlined_call_operand.vmem [shape: f32[8,8], index: 4, kind: input, shape index: {}]
  %s5 = inlined_call_operand.vmem [shape: f32[1,32], index: 5, kind: input, shape index: {}]
  %s6 = inlined_call_operand.vmem [shape: f32[32,24], index: 6, kind: input, shape index: {}]
  %s7 = inlined_call_operand.vmem [shape: f32[1,24], index: 7, kind: input, shape index: {}]
  %s8 = inlined_call_operand.vmem [shape: f32[2,24,16], index: 8, kind: input, shape index: {}]
  %s9 = inlined_call_operand.vmem [shape: f32[2,24,8], index: 9, kind: input, shape index: {}]
  %s10 = inlined_call_operand.vmem [shape: f32[32,16], index: 10, kind: input, shape index: {}]
  %s11 = inlined_call_operand.vmem [shape: f32[1,16], index: 11, kind: input, shape index: {}]
  %s12 = inlined_call_operand.vmem [shape: f32[2,16,16], index: 12, kind: input, shape index: {}]
  %s13 = inlined_call_operand.vmem [shape: f32[2,16,16], index: 13, kind: input, shape index: {}]
  %s14 = inlined_call_operand.vmem [shape: f32[32,8], index: 14, kind: input, shape index: {}]
  %s15 = inlined_call_operand.vmem [shape: f32[2,16,32], index: 15, kind: input, shape index: {}]
  %s16 = inlined_call_operand.vmem [shape: f32[16,32], index: 16, kind: output, shape index: {}]
  %s17 = sld [smem:[#allocation0]]
  $region97: #{main_model_forward.5} parent=0
    _
  %s19 = ssub.s32 1, %s17
  %s20 = scalar_select 0, %s19, %s17
  loop: start=0, step=1, limit=4
  $region2: #{main_model_forward.5} parent=0 // loop_pre_header
    _
  $region3: #{main_model_forward.5} parent=0 // loop_header
    %s22 = sphi 0, %s26
    %p23 = scmp.ge.s32.totalorder %s22, 4
    %s32 = sphi 0, %s34
    %s35 = sphi 0, %s32
    %s36 = sphi 0, %s35
    %s52 = sphi 0, %s36
    %s56 = sphi 0, %s56
    %s58 = sphi 0, %s56
    %s59 = sphi 0, %s58
    %s73 = sphi 0, %s59
    %s77 = sphi 0, %s77
    %s79 = sphi 0, %s77
    %s80 = sphi 0, %s79
    %s94 = sphi 0, %s80
    %s98 = sphi 0, %s98
    %s100 = sphi 0, %s98
    %s101 = sphi 0, %s100
    %s115 = sphi 0, %s101
    %s119 = sphi 0, %s119
    %s121 = sphi 0, %s119
    %s122 = sphi 0, %s121
    %s136 = sphi 0, %s122
    %s140 = sphi 0, %s140
    %s142 = sphi 0, %s140
    %s143 = sphi 0, %s142
    %s157 = sphi 0, %s143
    %s161 = sphi 0, %s161
    %s163 = sphi 0, %s161
    %s164 = sphi 0, %s163
    %s178 = sphi 0, %s164
    %s182 = sphi 0, %s182
    %s184 = sphi 0, %s182
    %s185 = sphi 0, %s184
    %s199 = sphi 0, %s185
    %s203 = sphi 0, %s203
    %s205 = sphi 0, %s203
    %s206 = sphi 0, %s205
    %s220 = sphi 0, %s206
    %s224 = sphi 0, %s224
    %s226 = sphi 0, %s224
    %s227 = sphi 0, %s226
    %s241 = sphi 0, %s227
    %s245 = sphi 0, %s245
    %s247 = sphi 0, %s245
    %s248 = sphi 0, %s247
    %s262 = sphi 0, %s248
    %s266 = sphi 0, %s266
    %s268 = sphi 0, %s266
    %s269 = sphi 0, %s268
    %s283 = sphi 0, %s269
    %s287 = sphi 0, %s287
    %s289 = sphi 0, %s287
    %s290 = sphi 0, %s289
    %s304 = sphi 0, %s290
    %s308 = sphi 0, %s308
    %s310 = sphi 0, %s308
    %s311 = sphi 0, %s310
    %s325 = sphi 0, %s311
    %s329 = sphi 0, %s329
    %s331 = sphi 0, %s329
    %s332 = sphi 0, %s331
    %s346 = sphi 0, %s332
    %s350 = sphi 0, %s350
    %s352 = sphi 0, %s350
    %s353 = sphi 0, %s352
    %s367 = sphi 0, %s353
    %s373 = sphi 0, %s375
    %s376 = sphi 0, %s373
    %s377 = sphi 0, %s376
    %s393 = sphi 0, %s377
  $region4: #{main_model_forward.5} parent=0 // loop_header_branch
    %25 = sbr.rel (%p23) target = $region8
  $region5: #{main_model_forward.5} parent=0 // loop_body
    %s27 = ssub.s32 %s22, 1
    %s28 = ssub.s32 %s22, 2
    %s29 = sadd.s32 %s22, 1
    %s30 = ssub.s32 %s22, %s29
    %p31 = scmp.eq.s32.totalorder %s30, 0
    %s33 = sadd.s32 %s32, 1
    %s34 = scalar_select %p31, %s32, %s33
    %p37 = pneg %p31
    %p38 = scmp.eq.s32.totalorder %s22, 1
    %p39 = por %p37, %p38
    %p40 = scmp.ne.s32.totalorder %s32, %s35
    %p41 = scmp.eq.s32.totalorder %s22, 0
    %p42 = por %p40, %p41
    %p43 = scmp.ne.s32.totalorder %s32, %s35
    %p44 = scmp.eq.s32.totalorder %s27, 1
    %p45 = por %p43, %p44
    %p46 = scmp.ne.s32.totalorder %s35, %s36
    %p47 = scmp.eq.s32.totalorder %s27, 0
    %p48 = por %p46, %p47
    %p49 = scmp.ne.s32.totalorder %s35, %s36
    %p50 = scmp.eq.s32.totalorder %s28, 1
    %p51 = por %p49, %p50
    %p53 = scmp.ne.s32.totalorder %s36, %s52
    %p54 = scmp.eq.s32.totalorder %s28, 0
    %p55 = por %p53, %p54
    %s57 = sadd.s32 %s56, 1
    %p60 = scmp.eq.s32.totalorder %s22, 1
    %p61 = scmp.ne.s32.totalorder %s56, %s58
    %p62 = scmp.eq.s32.totalorder %s22, 0
    %p63 = por %p61, %p62
    %p64 = scmp.ne.s32.totalorder %s56, %s58
    %p65 = scmp.eq.s32.totalorder %s27, 1
    %p66 = por %p64, %p65
    %p67 = scmp.ne.s32.totalorder %s58, %s59
    %p68 = scmp.eq.s32.totalorder %s27, 0
    %p69 = por %p67, %p68
    %p70 = scmp.ne.s32.totalorder %s58, %s59
    %p71 = scmp.eq.s32.totalorder %s28, 1
    %p72 = por %p70, %p71
    %p74 = scmp.ne.s32.totalorder %s59, %s73
    %p75 = scmp.eq.s32.totalorder %s28, 0
    %p76 = por %p74, %p75
    %s78 = sadd.s32 %s77, 1
    %p81 = scmp.eq.s32.totalorder %s22, 1
    %p82 = scmp.ne.s32.totalorder %s77, %s79
    %p83 = scmp.eq.s32.totalorder %s22, 0
    %p84 = por %p82, %p83
    %p85 = scmp.ne.s32.totalorder %s77, %s79
    %p86 = scmp.eq.s32.totalorder %s27, 1
    %p87 = por %p85, %p86
    %p88 = scmp.ne.s32.totalorder %s79, %s80
    %p89 = scmp.eq.s32.totalorder %s27, 0
    %p90 = por %p88, %p89
    %p91 = scmp.ne.s32.totalorder %s79, %s80
    %p92 = scmp.eq.s32.totalorder %s28, 1
    %p93 = por %p91, %p92
    %p95 = scmp.ne.s32.totalorder %s80, %s94
    %p96 = scmp.eq.s32.totalorder %s28, 0
    %p97 = por %p95, %p96
    %s99 = sadd.s32 %s98, 1
    %p102 = scmp.eq.s32.totalorder %s22, 1
    %p103 = scmp.ne.s32.totalorder %s98, %s100
    %p104 = scmp.eq.s32.totalorder %s22, 0
    %p105 = por %p103, %p104
    %p106 = scmp.ne.s32.totalorder %s98, %s100
    %p107 = scmp.eq.s32.totalorder %s27, 1
    %p108 = por %p106, %p107
    %p109 = scmp.ne.s32.totalorder %s100, %s101
    %p110 = scmp.eq.s32.totalorder %s27, 0
    %p111 = por %p109, %p110
    %p112 = scmp.ne.s32.totalorder %s100, %s101
    %p113 = scmp.eq.s32.totalorder %s28, 1
    %p114 = por %p112, %p113
    %p116 = scmp.ne.s32.totalorder %s101, %s115
    %p117 = scmp.eq.s32.totalorder %s28, 0
    %p118 = por %p116, %p117
    %s120 = sadd.s32 %s119, 1
    %p123 = scmp.eq.s32.totalorder %s22, 1
    %p124 = scmp.ne.s32.totalorder %s119, %s121
    %p125 = scmp.eq.s32.totalorder %s22, 0
    %p126 = por %p124, %p125
    %p127 = scmp.ne.s32.totalorder %s119, %s121
    %p128 = scmp.eq.s32.totalorder %s27, 1
    %p129 = por %p127, %p128
    %p130 = scmp.ne.s32.totalorder %s121, %s122
    %p131 = scmp.eq.s32.totalorder %s27, 0
    %p132 = por %p130, %p131
    %p133 = scmp.ne.s32.totalorder %s121, %s122
    %p134 = scmp.eq.s32.totalorder %s28, 1
    %p135 = por %p133, %p134
    %p137 = scmp.ne.s32.totalorder %s122, %s136
    %p138 = scmp.eq.s32.totalorder %s28, 0
    %p139 = por %p137, %p138
    %s141 = sadd.s32 %s140, 1
    %p144 = scmp.eq.s32.totalorder %s22, 1
    %p145 = scmp.ne.s32.totalorder %s140, %s142
    %p146 = scmp.eq.s32.totalorder %s22, 0
    %p147 = por %p145, %p146
    %p148 = scmp.ne.s32.totalorder %s140, %s142
    %p149 = scmp.eq.s32.totalorder %s27, 1
    %p150 = por %p148, %p149
    %p151 = scmp.ne.s32.totalorder %s142, %s143
    %p152 = scmp.eq.s32.totalorder %s27, 0
    %p153 = por %p151, %p152
    %p154 = scmp.ne.s32.totalorder %s142, %s143
    %p155 = scmp.eq.s32.totalorder %s28, 1
    %p156 = por %p154, %p155
    %p158 = scmp.ne.s32.totalorder %s143, %s157
    %p159 = scmp.eq.s32.totalorder %s28, 0
    %p160 = por %p158, %p159
    %s162 = sadd.s32 %s161, 1
    %p165 = scmp.eq.s32.totalorder %s22, 1
    %p166 = scmp.ne.s32.totalorder %s161, %s163
    %p167 = scmp.eq.s32.totalorder %s22, 0
    %p168 = por %p166, %p167
    %p169 = scmp.ne.s32.totalorder %s161, %s163
    %p170 = scmp.eq.s32.totalorder %s27, 1
    %p171 = por %p169, %p170
    %p172 = scmp.ne.s32.totalorder %s163, %s164
    %p173 = scmp.eq.s32.totalorder %s27, 0
    %p174 = por %p172, %p173
    %p175 = scmp.ne.s32.totalorder %s163, %s164
    %p176 = scmp.eq.s32.totalorder %s28, 1
    %p177 = por %p175, %p176
    %p179 = scmp.ne.s32.totalorder %s164, %s178
    %p180 = scmp.eq.s32.totalorder %s28, 0
    %p181 = por %p179, %p180
    %s183 = sadd.s32 %s182, 1
    %p186 = scmp.eq.s32.totalorder %s22, 1
    %p187 = scmp.ne.s32.totalorder %s182, %s184
    %p188 = scmp.eq.s32.totalorder %s22, 0
    %p189 = por %p187, %p188
    %p190 = scmp.ne.s32.totalorder %s182, %s184
    %p191 = scmp.eq.s32.totalorder %s27, 1
    %p192 = por %p190, %p191
    %p193 = scmp.ne.s32.totalorder %s184, %s185
    %p194 = scmp.eq.s32.totalorder %s27, 0
    %p195 = por %p193, %p194
    %p196 = scmp.ne.s32.totalorder %s184, %s185
    %p197 = scmp.eq.s32.totalorder %s28, 1
    %p198 = por %p196, %p197
    %p200 = scmp.ne.s32.totalorder %s185, %s199
    %p201 = scmp.eq.s32.totalorder %s28, 0
    %p202 = por %p200, %p201
    %s204 = sadd.s32 %s203, 1
    %p207 = scmp.eq.s32.totalorder %s22, 1
    %p208 = scmp.ne.s32.totalorder %s203, %s205
    %p209 = scmp.eq.s32.totalorder %s22, 0
    %p210 = por %p208, %p209
    %p211 = scmp.ne.s32.totalorder %s203, %s205
    %p212 = scmp.eq.s32.totalorder %s27, 1
    %p213 = por %p211, %p212
    %p214 = scmp.ne.s32.totalorder %s205, %s206
    %p215 = scmp.eq.s32.totalorder %s27, 0
    %p216 = por %p214, %p215
    %p217 = scmp.ne.s32.totalorder %s205, %s206
    %p218 = scmp.eq.s32.totalorder %s28, 1
    %p219 = por %p217, %p218
    %p221 = scmp.ne.s32.totalorder %s206, %s220
    %p222 = scmp.eq.s32.totalorder %s28, 0
    %p223 = por %p221, %p222
    %s225 = sadd.s32 %s224, 1
    %p228 = scmp.eq.s32.totalorder %s22, 1
    %p229 = scmp.ne.s32.totalorder %s224, %s226
    %p230 = scmp.eq.s32.totalorder %s22, 0
    %p231 = por %p229, %p230
    %p232 = scmp.ne.s32.totalorder %s224, %s226
    %p233 = scmp.eq.s32.totalorder %s27, 1
    %p234 = por %p232, %p233
    %p235 = scmp.ne.s32.totalorder %s226, %s227
    %p236 = scmp.eq.s32.totalorder %s27, 0
    %p237 = por %p235, %p236
    %p238 = scmp.ne.s32.totalorder %s226, %s227
    %p239 = scmp.eq.s32.totalorder %s28, 1
    %p240 = por %p238, %p239
    %p242 = scmp.ne.s32.totalorder %s227, %s241
    %p243 = scmp.eq.s32.totalorder %s28, 0
    %p244 = por %p242, %p243
    %s246 = sadd.s32 %s245, 1
    %p249 = scmp.eq.s32.totalorder %s22, 1
    %p250 = scmp.ne.s32.totalorder %s245, %s247
    %p251 = scmp.eq.s32.totalorder %s22, 0
    %p252 = por %p250, %p251
    %p253 = scmp.ne.s32.totalorder %s245, %s247
    %p254 = scmp.eq.s32.totalorder %s27, 1
    %p255 = por %p253, %p254
    %p256 = scmp.ne.s32.totalorder %s247, %s248
    %p257 = scmp.eq.s32.totalorder %s27, 0
    %p258 = por %p256, %p257
    %p259 = scmp.ne.s32.totalorder %s247, %s248
    %p260 = scmp.eq.s32.totalorder %s28, 1
    %p261 = por %p259, %p260
    %p263 = scmp.ne.s32.totalorder %s248, %s262
    %p264 = scmp.eq.s32.totalorder %s28, 0
    %p265 = por %p263, %p264
    %s267 = sadd.s32 %s266, 1
    %p270 = scmp.eq.s32.totalorder %s22, 1
    %p271 = scmp.ne.s32.totalorder %s266, %s268
    %p272 = scmp.eq.s32.totalorder %s22, 0
    %p273 = por %p271, %p272
    %p274 = scmp.ne.s32.totalorder %s266, %s268
    %p275 = scmp.eq.s32.totalorder %s27, 1
    %p276 = por %p274, %p275
    %p277 = scmp.ne.s32.totalorder %s268, %s269
    %p278 = scmp.eq.s32.totalorder %s27, 0
    %p279 = por %p277, %p278
    %p280 = scmp.ne.s32.totalorder %s268, %s269
    %p281 = scmp.eq.s32.totalorder %s28, 1
    %p282 = por %p280, %p281
    %p284 = scmp.ne.s32.totalorder %s269, %s283
    %p285 = scmp.eq.s32.totalorder %s28, 0
    %p286 = por %p284, %p285
    %s288 = sadd.s32 %s287, 1
    %p291 = scmp.eq.s32.totalorder %s22, 1
    %p292 = scmp.ne.s32.totalorder %s287, %s289
    %p293 = scmp.eq.s32.totalorder %s22, 0
    %p294 = por %p292, %p293
    %p295 = scmp.ne.s32.totalorder %s287, %s289
    %p296 = scmp.eq.s32.totalorder %s27, 1
    %p297 = por %p295, %p296
    %p298 = scmp.ne.s32.totalorder %s289, %s290
    %p299 = scmp.eq.s32.totalorder %s27, 0
    %p300 = por %p298, %p299
    %p301 = scmp.ne.s32.totalorder %s289, %s290
    %p302 = scmp.eq.s32.totalorder %s28, 1
    %p303 = por %p301, %p302
    %p305 = scmp.ne.s32.totalorder %s290, %s304
    %p306 = scmp.eq.s32.totalorder %s28, 0
    %p307 = por %p305, %p306
    %s309 = sadd.s32 %s308, 1
    %p312 = scmp.eq.s32.totalorder %s22, 1
    %p313 = scmp.ne.s32.totalorder %s308, %s310
    %p314 = scmp.eq.s32.totalorder %s22, 0
    %p315 = por %p313, %p314
    %p316 = scmp.ne.s32.totalorder %s308, %s310
    %p317 = scmp.eq.s32.totalorder %s27, 1
    %p318 = por %p316, %p317
    %p319 = scmp.ne.s32.totalorder %s310, %s311
    %p320 = scmp.eq.s32.totalorder %s27, 0
    %p321 = por %p319, %p320
    %p322 = scmp.ne.s32.totalorder %s310, %s311
    %p323 = scmp.eq.s32.totalorder %s28, 1
    %p324 = por %p322, %p323
    %p326 = scmp.ne.s32.totalorder %s311, %s325
    %p327 = scmp.eq.s32.totalorder %s28, 0
    %p328 = por %p326, %p327
    %s330 = sadd.s32 %s329, 1
    %p333 = scmp.eq.s32.totalorder %s22, 1
    %p334 = scmp.ne.s32.totalorder %s329, %s331
    %p335 = scmp.eq.s32.totalorder %s22, 0
    %p336 = por %p334, %p335
    %p337 = scmp.ne.s32.totalorder %s329, %s331
    %p338 = scmp.eq.s32.totalorder %s27, 1
    %p339 = por %p337, %p338
    %p340 = scmp.ne.s32.totalorder %s331, %s332
    %p341 = scmp.eq.s32.totalorder %s27, 0
    %p342 = por %p340, %p341
    %p343 = scmp.ne.s32.totalorder %s331, %s332
    %p344 = scmp.eq.s32.totalorder %s28, 1
    %p345 = por %p343, %p344
    %p347 = scmp.ne.s32.totalorder %s332, %s346
    %p348 = scmp.eq.s32.totalorder %s28, 0
    %p349 = por %p347, %p348
    %s351 = sadd.s32 %s350, 1
    %p354 = scmp.eq.s32.totalorder %s22, 1
    %p355 = scmp.ne.s32.totalorder %s350, %s352
    %p356 = scmp.eq.s32.totalorder %s22, 0
    %p357 = por %p355, %p356
    %p358 = scmp.ne.s32.totalorder %s350, %s352
    %p359 = scmp.eq.s32.totalorder %s27, 1
    %p360 = por %p358, %p359
    %p361 = scmp.ne.s32.totalorder %s352, %s353
    %p362 = scmp.eq.s32.totalorder %s27, 0
    %p363 = por %p361, %p362
    %p364 = scmp.ne.s32.totalorder %s352, %s353
    %p365 = scmp.eq.s32.totalorder %s28, 1
    %p366 = por %p364, %p365
    %p368 = scmp.ne.s32.totalorder %s353, %s367
    %p369 = scmp.eq.s32.totalorder %s28, 0
    %p370 = por %p368, %p369
    %s371 = ssub.s32 %s22, %s29
    %p372 = scmp.eq.s32.totalorder %s371, 0
    %s374 = sadd.s32 %s373, 1
    %s375 = scalar_select %p372, %s373, %s374
    %p378 = pneg %p372
    %p379 = scmp.eq.s32.totalorder %s22, 1
    %p380 = por %p378, %p379
    %p381 = scmp.ne.s32.totalorder %s373, %s376
    %p382 = scmp.eq.s32.totalorder %s22, 0
    %p383 = por %p381, %p382
    %p384 = scmp.ne.s32.totalorder %s373, %s376
    %p385 = scmp.eq.s32.totalorder %s27, 1
    %p386 = por %p384, %p385
    %p387 = scmp.ne.s32.totalorder %s376, %s377
    %p388 = scmp.eq.s32.totalorder %s27, 0
    %p389 = por %p387, %p388
    %p390 = scmp.ne.s32.totalorder %s376, %s377
    %p391 = scmp.eq.s32.totalorder %s28, 1
    %p392 = por %p390, %p391
    %p394 = scmp.ne.s32.totalorder %s377, %s393
    %p395 = scmp.eq.s32.totalorder %s28, 0
    %p396 = por %p394, %p395
    %p397 = scmp.le.s32.totalorder 1, %s22
    %p398 = scmp.lt.s32.totalorder %s22, 3
    %p399 = pnand %p397, %p398
    %p400 = pneg %p399
    // Predicated region
    $region9: #{main_model_forward.5} parent=5 // pred_check
      _
    $region10: #{main_model_forward.5} parent=5 // pred_check_branch
      %402 = sbr.rel (%p399) target = $region12
    $region11: #{main_model_forward.5} parent=5 // pred_region
      %s403 = ssub.s32 %s22, 1
      // Predicated region
      $region13: #{main_model_forward.5} parent=11 // pred_check
        %p404 = pneg %p69
      $region14: #{main_model_forward.5} parent=11 // pred_check_branch
        %406 = sbr.rel (%p404) target = $region16
      $region15: #{main_model_forward.5} parent=11 // pred_region
        _
      $region16: #{main_model_forward.5} parent=11 // pred_fallthru
        _
      // Predicated region
      $region17: #{main_model_forward.5} parent=11 // pred_check
        %p407 = pneg %p90
      $region18: #{main_model_forward.5} parent=11 // pred_check_branch
        %409 = sbr.rel (%p407) target = $region20
      $region19: #{main_model_forward.5} parent=11 // pred_region
        _
      $region20: #{main_model_forward.5} parent=11 // pred_fallthru
        _
      // Predicated region
      $region21: #{main_model_forward.5} parent=11 // pred_check
        %p410 = pneg %p111
      $region22: #{main_model_forward.5} parent=11 // pred_check_branch
        %412 = sbr.rel (%p410) target = $region24
      $region23: #{main_model_forward.5} parent=11 // pred_region
        _
      $region24: #{main_model_forward.5} parent=11 // pred_fallthru
        _
      // Predicated region
      $region25: #{main_model_forward.5} parent=11 // pred_check
        %p413 = pneg %p132
      $region26: #{main_model_forward.5} parent=11 // pred_check_branch
        %415 = sbr.rel (%p413) target = $region28
      $region27: #{main_model_forward.5} parent=11 // pred_region
        _
      $region28: #{main_model_forward.5} parent=11 // pred_fallthru
        _
      // Predicated region
      $region29: #{main_model_forward.5} parent=11 // pred_check
        %p416 = pneg %p153
      $region30: #{main_model_forward.5} parent=11 // pred_check_branch
        %418 = sbr.rel (%p416) target = $region32
      $region31: #{main_model_forward.5} parent=11 // pred_region
        _
      $region32: #{main_model_forward.5} parent=11 // pred_fallthru
        _
      // Predicated region
      $region33: #{main_model_forward.5} parent=11 // pred_check
        %p419 = pneg %p174
      $region34: #{main_model_forward.5} parent=11 // pred_check_branch
        %421 = sbr.rel (%p419) target = $region36
      $region35: #{main_model_forward.5} parent=11 // pred_region
        _
      $region36: #{main_model_forward.5} parent=11 // pred_fallthru
        _
      // Predicated region
      $region37: #{main_model_forward.5} parent=11 // pred_check
        %p422 = pneg %p195
      $region38: #{main_model_forward.5} parent=11 // pred_check_branch
        %424 = sbr.rel (%p422) target = $region40
      $region39: #{main_model_forward.5} parent=11 // pred_region
        _
      $region40: #{main_model_forward.5} parent=11 // pred_fallthru
        _
      // Predicated region
      $region41: #{main_model_forward.5} parent=11 // pred_check
        %p425 = pneg %p216
      $region42: #{main_model_forward.5} parent=11 // pred_check_branch
        %427 = sbr.rel (%p425) target = $region44
      $region43: #{main_model_forward.5} parent=11 // pred_region
        _
      $region44: #{main_model_forward.5} parent=11 // pred_fallthru
        _
      // Predicated region
      $region45: #{main_model_forward.5} parent=11 // pred_check
        %p428 = pneg %p237
      $region46: #{main_model_forward.5} parent=11 // pred_check_branch
        %430 = sbr.rel (%p428) target = $region48
      $region47: #{main_model_forward.5} parent=11 // pred_region
        _
      $region48: #{main_model_forward.5} parent=11 // pred_fallthru
        _
      // Predicated region
      $region49: #{main_model_forward.5} parent=11 // pred_check
        %p431 = pneg %p258
      $region50: #{main_model_forward.5} parent=11 // pred_check_branch
        %433 = sbr.rel (%p431) target = $region52
      $region51: #{main_model_forward.5} parent=11 // pred_region
        _
      $region52: #{main_model_forward.5} parent=11 // pred_fallthru
        _
      // Predicated region
      $region53: #{main_model_forward.5} parent=11 // pred_check
        %p434 = pneg %p279
      $region54: #{main_model_forward.5} parent=11 // pred_check_branch
        %436 = sbr.rel (%p434) target = $region56
      $region55: #{main_model_forward.5} parent=11 // pred_region
        _
      $region56: #{main_model_forward.5} parent=11 // pred_fallthru
        _
      // Predicated region
      $region57: #{main_model_forward.5} parent=11 // pred_check
        %p437 = pneg %p300
      $region58: #{main_model_forward.5} parent=11 // pred_check_branch
        %439 = sbr.rel (%p437) target = $region60
      $region59: #{main_model_forward.5} parent=11 // pred_region
        _
      $region60: #{main_model_forward.5} parent=11 // pred_fallthru
        _
      // Predicated region
      $region61: #{main_model_forward.5} parent=11 // pred_check
        %p440 = pneg %p321
      $region62: #{main_model_forward.5} parent=11 // pred_check_branch
        %442 = sbr.rel (%p440) target = $region64
      $region63: #{main_model_forward.5} parent=11 // pred_region
        _
      $region64: #{main_model_forward.5} parent=11 // pred_fallthru
        _
      // Predicated region
      $region65: #{main_model_forward.5} parent=11 // pred_check
        %p443 = pneg %p342
      $region66: #{main_model_forward.5} parent=11 // pred_check_branch
        %445 = sbr.rel (%p443) target = $region68
      $region67: #{main_model_forward.5} parent=11 // pred_region
        _
      $region68: #{main_model_forward.5} parent=11 // pred_fallthru
        _
      // Predicated region
      $region69: #{main_model_forward.5} parent=11 // pred_check
        %p446 = pneg %p363
      $region70: #{main_model_forward.5} parent=11 // pred_check_branch
        %448 = sbr.rel (%p446) target = $region72
      $region71: #{main_model_forward.5} parent=11 // pred_region
        _
      $region72: #{main_model_forward.5} parent=11 // pred_fallthru
        _
    $region12: #{main_model_forward.5} parent=5 // pred_fallthru
      _
    %p449 = scmp.lt.s32.totalorder %s22, 2
    // Predicated region
    $region73: #{main_model_forward.5} parent=5 // pred_check
      %p450 = pneg %p449
    $region74: #{main_model_forward.5} parent=5 // pred_check_branch
      %452 = sbr.rel (%p450) target = $region76
    $region75: #{main_model_forward.5} parent=5 // pred_region
      // Predicated region
      $region77: #{main_model_forward.5} parent=75 // pred_check
        %p453 = pneg %p42
      $region78: #{main_model_forward.5} parent=75 // pred_check_branch
        %455 = sbr.rel (%p453) target = $region80
      $region79: #{main_model_forward.5} parent=75 // pred_region
        %p456 = scmp.lt.s32.totalorder %s22, 1
        %s457 = scalar_select %p456, %s22, 1
        %s458 = smul.addr %s457, 8
        %s459 = scalar_lea.vmem %s0, %s458
      $region80: #{main_model_forward.5} parent=75 // pred_fallthru
        _
    $region76: #{main_model_forward.5} parent=5 // pred_fallthru
      _
    %p460 = scmp.le.s32.totalorder 1, %s22
    %p461 = scmp.lt.s32.totalorder %s22, 3
    %p462 = pnand %p460, %p461
    %p463 = pneg %p462
    // Predicated region
    $region81: #{main_model_forward.5} parent=5 // pred_check
      _
    $region82: #{main_model_forward.5} parent=5 // pred_check_branch
      %465 = sbr.rel (%p462) target = $region84
    $region83: #{main_model_forward.5} parent=5 // pred_region
      %s466 = ssub.s32 %s22, 1
      %p467 = scmp.lt.s32.totalorder %s27, 1
      %s468 = scalar_select %p467, %s27, 1
      %s469 = smul.addr %s468, 8
      %s470 = scalar_lea.vmem %s0, %s469
      %p471 = pneg %p48
      %p472 = pneg %p45
      %p473 = pneg %p69
      %p474 = pneg %p66
      %p475 = pneg %p90
      %p476 = pneg %p87
      %p477 = pneg %p111
      %p478 = pneg %p108
      %p479 = pneg %p132
      %p480 = pneg %p129
      %p481 = pneg %p153
      %p482 = pneg %p150
      %p483 = pneg %p174
      %p484 = pneg %p171
      %p485 = pneg %p195
      %p486 = pneg %p192
      %p487 = pneg %p216
      %p488 = pneg %p213
      %p489 = pneg %p237
      %p490 = pneg %p234
      %p491 = pneg %p258
      %p492 = pneg %p255
      %p493 = pneg %p279
      %p494 = pneg %p276
      %p495 = pneg %p300
      %p496 = pneg %p297
      %p497 = pneg %p321
      %p498 = pneg %p318
      %p499 = pneg %p342
      %p500 = pneg %p339
      %p501 = pneg %p363
      %p502 = pneg %p360
      %p503 = pneg %p389
      %p504 = pneg %p386
      %p505 = scmp.lt.s32.totalorder %s27, 1
      %s506 = scalar_select %p505, %s27, 1
      %s507 = smul.addr %s506, 8
      %s508 = scalar_lea.vmem %s16, %s507
      %p509 = scmp.lt.s32.totalorder %s27, 1
      %s510 = scalar_select %p509, %s27, 1
      %s511 = smul.addr %s510, 8
      %s512 = scalar_lea.vmem %s0, %s511
      %p513 = scmp.lt.s32.totalorder %s27, 1
      %s514 = scalar_select %p513, %s27, 1
      %s515 = smul.addr %s514, 8
      %s516 = scalar_lea.vmem %s16, %s515
      %v518 = vld [vmem:[%s512] sm:$0xff]
      %v519 = vld [vmem:[%s5] sm:$0x1]
      %v520 = vmul.f32 %v518, %v518
      %vm521 = vcmask 261120
      %v522 = vsel %vm521, %v520, 0.0
      %523 = vadd.xlane.f32.xlu0 %v522
      %v524 = vpop.xlane.xlu0 %523
      %v525 = vrcp.pop 32.0
      %v526 = vmul.f32 32.0, %v525
      %v527 = vsub.f32 1.0, %v526
      %v528 = vmul.f32 %v525, %v527
      %v529 = vadd.f32 %v525, %v528
      %vm530 = vweird.f32 %v525
      %v531 = vsel %vm530, %v525, %v529
      %v532 = vmul.f32 %v524, %v531
      %v533 = vadd.f32 %v532, 1e-06
      %v534 = vrsqrt.pop %v533
      %v535 = vmul.f32 %v534, %v533
      %v536 = vmul.f32 %v535, %v534
      %v537 = vmul.f32 0.5, %v536
      %v538 = vsub.f32 1.5, %v537
      %v539 = vmul.f32 %v534, %v538
      %vm540 = vweird.f32 %v533
      %vm541 = vweird.f32 %v534
      %vm542 = vmor %vm540, %vm541
      %v543 = vsel %vm542, %v534, %v539
      %v544 = vmul.f32 %v518, %v543
      %v546 = vperm.slane %v519, 0
      %v548 = vmul.f32 %v544, %v546
      %v549 = vld [vmem:[%s6] sm:$0xff]
      %v550 = vld [vmem:[%s6 + $0x8] sm:$0xff]
      %v551 = vld [vmem:[%s6 + $0x10] sm:$0xff]
      %v552 = vld [vmem:[%s6 + $0x18] sm:$0xff]
      %v553 = vpack.c.bf16 %v548, %v548
      %v554 = vpack.c.bf16 %v550, %v549
      %v555 = vpack.c.bf16 %v552, %v551
      %v557 = vsel %vm521, %v553, 0
      %559 = vmatpush.bf16.msra.mxu0 0
      %560 = vmatpush.bf16.msra.mxu0 0
      %561 = vmatpush.bf16.msra.mxu0 0
      %562 = vmatpush.bf16.msra.mxu0 0
      %563 = vmatpush.bf16.msra.mxu0 0
      %564 = vmatpush.bf16.msra.mxu0 0
      %565 = vmatpush.bf16.msra.mxu0 %v555
      %566 = vmatpush.bf16.msra.mxu0 %v554
      %567 = vmatmul.bf16.gmra.mxu0 %v557
      %v568 = vpop.f32.mrf.mxu0
      %v569 = vadd.f32 0.0, %v568
      %v570 = vpop.f32.mrf.mxu0
      %571 = vdwg.mxu0
      %v572 = vld [vmem:[%s7] sm:$0x1]
      %v573 = vmul.f32 %v569, %v569
      %vm574 = vcmask 195584
      %v575 = vsel %vm574, %v573, 0.0
      %576 = vadd.xlane.f32.xlu0 %v575
      %v577 = vpop.xlane.xlu0 %576
      %v578 = vrcp.pop 24.0
      %v579 = vmul.f32 24.0, %v578
      %v580 = vsub.f32 1.0, %v579
      %v581 = vmul.f32 %v578, %v580
      %v582 = vadd.f32 %v578, %v581
      %vm583 = vweird.f32 %v578
      %v584 = vsel %vm583, %v578, %v582
      %v585 = vmul.f32 %v577, %v584
      %v586 = vadd.f32 %v585, 1e-06
      %v587 = vrsqrt.pop %v586
      %v588 = vmul.f32 %v587, %v586
      %v589 = vmul.f32 %v588, %v587
      %v590 = vmul.f32 0.5, %v589
      %v591 = vsub.f32 1.5, %v590
      %v592 = vmul.f32 %v587, %v591
      %vm593 = vweird.f32 %v586
      %vm594 = vweird.f32 %v587
      %vm595 = vmor %vm593, %vm594
      %v596 = vsel %vm595, %v587, %v592
      %v597 = vmul.f32 %v569, %v596
      %v599 = vperm.slane %v572, 0
      %v601 = vmul.f32 %v597, %v599
      %v602 = vld [vmem:[%s10] sm:$0xff]
      %v603 = vld [vmem:[%s10 + $0x8] sm:$0xff]
      %v604 = vld [vmem:[%s10 + $0x10] sm:$0xff]
      %v605 = vld [vmem:[%s10 + $0x18] sm:$0xff]
      %v606 = vpack.c.bf16 %v603, %v602
      %v607 = vpack.c.bf16 %v605, %v604
      %608 = vmatpush.bf16.msra.mxu0 0
      %609 = vmatpush.bf16.msra.mxu0 0
      %610 = vmatpush.bf16.msra.mxu0 0
      %611 = vmatpush.bf16.msra.mxu0 0
      %612 = vmatpush.bf16.msra.mxu0 0
      %613 = vmatpush.bf16.msra.mxu0 0
      %614 = vmatpush.bf16.msra.mxu0 %v607
      %615 = vmatpush.bf16.msra.mxu0 %v606
      %616 = vmatmul.bf16.gmra.mxu0 %v557
      %v617 = vpop.f32.mrf.mxu0
      %v618 = vadd.f32 0.0, %v617
      %v619 = vpop.f32.mrf.mxu0
      %620 = vdwg.mxu0
      %v621 = vld [vmem:[%s11] sm:$0x1]
      %v622 = vmul.f32 %v618, %v618
      %vm623 = vcmask 130048
      %v624 = vsel %vm623, %v622, 0.0
      %625 = vadd.xlane.f32.xlu0 %v624
      %v626 = vpop.xlane.xlu0 %625
      %v627 = vrcp.pop 16.0
      %v628 = vmul.f32 16.0, %v627
      %v629 = vsub.f32 1.0, %v628
      %v630 = vmul.f32 %v627, %v629
      %v631 = vadd.f32 %v627, %v630
      %vm632 = vweird.f32 %v627
      %v633 = vsel %vm632, %v627, %v631
      %v634 = vmul.f32 %v626, %v633
      %v635 = vadd.f32 %v634, 1e-06
      %v636 = vrsqrt.pop %v635
      %v637 = vmul.f32 %v636, %v635
      %v638 = vmul.f32 %v637, %v636
      %v639 = vmul.f32 0.5, %v638
      %v640 = vsub.f32 1.5, %v639
      %v641 = vmul.f32 %v636, %v640
      %vm642 = vweird.f32 %v635
      %vm643 = vweird.f32 %v636
      %vm644 = vmor %vm642, %vm643
      %v645 = vsel %vm644, %v636, %v641
      %v646 = vmul.f32 %v618, %v645
      %v648 = vperm.slane %v621, 0
      %v650 = vmul.f32 %v646, %v648
      %v651 = vld [vmem:[%s2] sm:$0xff]
      %v652 = vld [vmem:[%s3] sm:$0xff]
      %v653 = vld [vmem:[%s4] sm:$0xff]
      %v654 = vld [vmem:[%s14] sm:$0xff]
      %v655 = vld [vmem:[%s14 + $0x8] sm:$0xff]
      %v656 = vld [vmem:[%s14 + $0x10] sm:$0xff]
      %v657 = vld [vmem:[%s14 + $0x18] sm:$0xff]
      %v658 = vpack.c.bf16 %v655, %v654
      %v659 = vpack.c.bf16 %v657, %v656
      %660 = vmatpush.bf16.msra.mxu0 0
      %661 = vmatpush.bf16.msra.mxu0 0
      %662 = vmatpush.bf16.msra.mxu0 0
      %663 = vmatpush.bf16.msra.mxu0 0
      %664 = vmatpush.bf16.msra.mxu0 0
      %665 = vmatpush.bf16.msra.mxu0 0
      %666 = vmatpush.bf16.msra.mxu0 %v659
      %667 = vmatpush.bf16.msra.mxu0 %v658
      %668 = vmatmul.bf16.gmra.mxu0 %v557
      %v669 = vpop.f32.mrf.mxu0
      %v670 = vadd.f32 0.0, %v669
      %v671 = vpop.f32.mrf.mxu0
      %672 = vdwg.mxu0
      %vm673 = vcmask 64512
      %v675 = vsel %vm673, %v670, 0
      %677 = vmatpush.msra.mxu0 0.0
      %678 = vmatpush.msra.mxu0 0.0
      %679 = vmatpush.msra.mxu0 0.0
      %680 = vmatpush.msra.mxu0 0.0
      %681 = vmatpush.msra.mxu0 0.0
      %682 = vmatpush.msra.mxu0 0.0
      %683 = vmatpush.msra.mxu0 0.0
      %684 = vmatpush.msra.mxu0 0.0
      %685 = vmatpush.msra.mxu0 0.0
      %686 = vmatpush.msra.mxu0 0.0
      %687 = vmatpush.msra.mxu0 0.0
      %688 = vmatpush.msra.mxu0 0.0
      %689 = vmatpush.msra.mxu0 0.0
      %690 = vmatpush.msra.mxu0 0.0
      %691 = vmatpush.msra.mxu0 0.0
      %692 = vmatpush.msra.mxu0 %v653
      %693 = vmatmul.f32.gmra.mxu0 %v675
      %v694 = vpop.f32.mrf.mxu0
      %v695 = vadd.f32 0.0, %v694
      %696 = vdwg.mxu0
      %v697 = vmul.f32 %v670, %v651
      %v698 = vmul.f32 %v695, %v652
      %v699 = vadd.f32 %v697, %v698
      %v700 = vld [vmem:[%s1] sm:$0xff]
      %v701 = vld [vmem:[%s8] sm:$0xff]
      %v702 = vld [vmem:[%s8 + $0x8] sm:$0xff]
      %v703 = vld [vmem:[%s8 + $0x10] sm:$0xff]
      %v704 = vpack.c.bf16 %v601, %v601
      %v705 = vpack.c.bf16 %v702, %v701
      %v706 = vpack.c.bf16 %v703, %v703
      %v708 = vsel %vm574, %v704, 0
      %vm710 = vcmask 1043456
      %v712 = vsel %vm710, %v706, 0
      %714 = vmatpush.bf16.msra.mxu0 0
      %715 = vmatpush.bf16.msra.mxu0 0
      %716 = vmatpush.bf16.msra.mxu0 0
      %717 = vmatpush.bf16.msra.mxu0 0
      %718 = vmatpush.bf16.msra.mxu0 0
      %719 = vmatpush.bf16.msra.mxu0 0
      %720 = vmatpush.bf16.msra.mxu0 %v712
      %721 = vmatpush.bf16.msra.mxu0 %v705
      %722 = vmatmul.bf16.gmra.mxu0 %v708
      %v723 = vpop.f32.mrf.mxu0
      %v724 = vadd.f32 0.0, %v723
      %v725 = vpop.f32.mrf.mxu0
      %726 = vdwg.mxu0
      %v727 = vld [vmem:[%s9] sm:$0xff]
      %v728 = vld [vmem:[%s9 + $0x8] sm:$0xff]
      %v729 = vld [vmem:[%s9 + $0x10] sm:$0xff]
      %v730 = vpack.c.bf16 %v728, %v727
      %v731 = vpack.c.bf16 %v729, %v729
      %v733 = vsel %vm710, %v731, 0
      %735 = vmatpush.bf16.msra.mxu0 0
      %736 = vmatpush.bf16.msra.mxu0 0
      %737 = vmatpush.bf16.msra.mxu0 0
      %738 = vmatpush.bf16.msra.mxu0 0
      %739 = vmatpush.bf16.msra.mxu0 0
      %740 = vmatpush.bf16.msra.mxu0 0
      %741 = vmatpush.bf16.msra.mxu0 %v733
      %742 = vmatpush.bf16.msra.mxu0 %v730
      %743 = vmatmul.bf16.gmra.mxu0 %v708
      %v744 = vpop.f32.mrf.mxu0
      %v745 = vadd.f32 0.0, %v744
      %v746 = vpop.f32.mrf.mxu0
      %747 = vdwg.mxu0
      %v749 = vsel %vm673, %v745, 0
      %751 = vmatpush.msra.mxu0 0.0
      %752 = vmatpush.msra.mxu0 0.0
      %753 = vmatpush.msra.mxu0 0.0
      %754 = vmatpush.msra.mxu0 0.0
      %755 = vmatpush.msra.mxu0 0.0
      %756 = vmatpush.msra.mxu0 0.0
      %757 = vmatpush.msra.mxu0 0.0
      %758 = vmatpush.msra.mxu0 0.0
      %759 = vmatpush.msra.mxu0 0.0
      %760 = vmatpush.msra.mxu0 0.0
      %761 = vmatpush.msra.mxu0 0.0
      %762 = vmatpush.msra.mxu0 0.0
      %763 = vmatpush.msra.mxu0 0.0
      %764 = vmatpush.msra.mxu0 0.0
      %765 = vmatpush.msra.mxu0 0.0
      %766 = vmatpush.msra.mxu0 %v653
      %767 = vmatmul.f32.gmra.mxu0 %v749
      %v768 = vpop.f32.mrf.mxu0
      %v769 = vadd.f32 0.0, %v768
      %770 = vdwg.mxu0
      %v771 = vmul.f32 %v745, %v651
      %v772 = vmul.f32 %v769, %v652
      %v773 = vadd.f32 %v771, %v772
      %v774 = vld [vmem:[%s12] sm:$0xff]
      %v775 = vld [vmem:[%s12 + $0x8] sm:$0xff]
      %v776 = vpack.c.bf16 %v650, %v650
      %v777 = vpack.c.bf16 %v775, %v774
      %v779 = vsel %vm623, %v776, 0
      %781 = vmatpush.bf16.msra.mxu0 0
      %782 = vmatpush.bf16.msra.mxu0 0
      %783 = vmatpush.bf16.msra.mxu0 0
      %784 = vmatpush.bf16.msra.mxu0 0
      %785 = vmatpush.bf16.msra.mxu0 0
      %786 = vmatpush.bf16.msra.mxu0 0
      %787 = vmatpush.bf16.msra.mxu0 0
      %788 = vmatpush.bf16.msra.mxu0 %v777
      %789 = vmatmul.bf16.gmra.mxu0 %v779
      %v790 = vpop.f32.mrf.mxu0
      %v791 = vadd.f32 0.0, %v790
      %v792 = vpop.f32.mrf.mxu0
      %793 = vdwg.mxu0
      %v794 = vld [vmem:[%s13] sm:$0xff]
      %v795 = vld [vmem:[%s13 + $0x8] sm:$0xff]
      %v796 = vpack.c.bf16 %v795, %v794
      %797 = vmatpush.bf16.msra.mxu0 0
      %798 = vmatpush.bf16.msra.mxu0 0
      %799 = vmatpush.bf16.msra.mxu0 0
      %800 = vmatpush.bf16.msra.mxu0 0
      %801 = vmatpush.bf16.msra.mxu0 0
      %802 = vmatpush.bf16.msra.mxu0 0
      %803 = vmatpush.bf16.msra.mxu0 0
      %804 = vmatpush.bf16.msra.mxu0 %v796
      %805 = vmatmul.bf16.gmra.mxu0 %v779
      %v806 = vpop.f32.mrf.mxu0
      %v807 = vadd.f32 0.0, %v806
      %v808 = vpop.f32.mrf.mxu0
      %809 = vdwg.mxu0
      %v810 = vpack.c.bf16 %v724, %v724
      %v811 = vpack.c.bf16 %v791, %v791
      %v812 = vpack.c.bf16 %v773, %v773
      %v813 = vpack.c.bf16 %v699, %v699
      %v815 = vsel %vm673, %v812, 0
      %v818 = vsel %vm673, %v813, 0
      %820 = vmatpush.bf16.xpose.msra.mxu0 0
      %821 = vmatpush.bf16.xpose.msra.mxu0 0
      %822 = vmatpush.bf16.xpose.msra.mxu0 0
      %823 = vmatpush.bf16.xpose.msra.mxu0 0
      %824 = vmatpush.bf16.xpose.msra.mxu0 0
      %825 = vmatpush.bf16.xpose.msra.mxu0 0
      %826 = vmatpush.bf16.xpose.msra.mxu0 0
      %827 = vmatpush.bf16.xpose.msra.mxu0 %v818
      %828 = vmatmul.bf16.gmra.mxu0 %v815
      %v829 = vpop.f32.mrf.mxu0
      %v830 = vadd.f32 0.0, %v829
      %v831 = vpop.f32.mrf.mxu0
      %832 = vdwg.mxu0
      %v834 = vsel %vm623, %v810, 0
      %v837 = vsel %vm623, %v811, 0
      %839 = vmatpush.bf16.xpose.msra.mxu0 0
      %840 = vmatpush.bf16.xpose.msra.mxu0 0
      %841 = vmatpush.bf16.xpose.msra.mxu0 0
      %842 = vmatpush.bf16.xpose.msra.mxu0 0
      %843 = vmatpush.bf16.xpose.msra.mxu0 0
      %844 = vmatpush.bf16.xpose.msra.mxu0 0
      %845 = vmatpush.bf16.xpose.msra.mxu0 0
      %846 = vmatpush.bf16.xpose.msra.mxu0 %v837
      %847 = vmatmul.bf16.gmra.mxu0 %v834
      %v848 = vpop.f32.mrf.mxu0
      %v849 = vadd.f32 %v830, %v848
      %v850 = vpop.f32.mrf.mxu0
      %851 = vdwg.mxu0
      %v852 = vmul.f32 %v849, 0.20412415
      %v853 = vadd.f32 %v852, %v700
      %v854 = vsel %vm673, %v853, -inf
      %855 = vmax.xlane.f32.xlu0 %v854
      %v856 = vpop.xlane.xlu0 %855
      %v857 = vsub.f32 %v853, %v856
      %v858 = vmul.f32 %v857, 1.442695
      %v859 = vpow.pop %v858
      %v860 = vsel %vm673, %v859, 0.0
      %861 = vadd.xlane.f32.xlu0 %v860
      %v862 = vpop.xlane.xlu0 %861
      %v863 = vrcp.pop %v862
      %v864 = vmul.f32 %v859, %v863
      %v865 = vpack.c.bf16 %v864, %v864
      %v866 = vpack.c.bf16 %v807, %v807
      %v868 = vsel %vm673, %v865, 0
      %v871 = vsel %vm710, %v866, 0
      %873 = vmatpush.bf16.msra.mxu0 0
      %874 = vmatpush.bf16.msra.mxu0 0
      %875 = vmatpush.bf16.msra.mxu0 0
      %876 = vmatpush.bf16.msra.mxu0 0
      %877 = vmatpush.bf16.msra.mxu0 0
      %878 = vmatpush.bf16.msra.mxu0 0
      %879 = vmatpush.bf16.msra.mxu0 0
      %880 = vmatpush.bf16.msra.mxu0 %v871
      %881 = vmatmul.bf16.gmra.mxu0 %v868
      %v882 = vpop.f32.mrf.mxu0
      %v883 = vadd.f32 0.0, %v882
      %v884 = vpop.f32.mrf.mxu0
      %885 = vdwg.mxu0
      %v886 = vld [vmem:[%s15] sm:$0xff]
      %v887 = vld [vmem:[%s15 + $0x8] sm:$0xff]
      %v888 = vpack.c.bf16 %v883, %v883
      %v889 = vpack.c.bf16 %v887, %v886
      %s890 = scalar_lea.vmem %s8, 24
      %v891 = vld [vmem:[%s890] sm:$0xff]
      %v892 = vld [vmem:[%s890 + $0x8] sm:$0xff]
      %v893 = vld [vmem:[%s890 + $0x10] sm:$0xff]
      %v894 = vpack.c.bf16 %v892, %v891
      %v895 = vpack.c.bf16 %v893, %v893
      %v897 = vsel %vm710, %v895, 0
      %899 = vmatpush.bf16.msra.mxu0 0
      %900 = vmatpush.bf16.msra.mxu0 0
      %901 = vmatpush.bf16.msra.mxu0 0
      %902 = vmatpush.bf16.msra.mxu0 0
      %903 = vmatpush.bf16.msra.mxu0 0
      %904 = vmatpush.bf16.msra.mxu0 0
      %905 = vmatpush.bf16.msra.mxu0 %v897
      %906 = vmatpush.bf16.msra.mxu0 %v894
      %907 = vmatmul.bf16.gmra.mxu0 %v708
      %v908 = vpop.f32.mrf.mxu0
      %v909 = vadd.f32 0.0, %v908
      %v910 = vpop.f32.mrf.mxu0
      %911 = vdwg.mxu0
      %s912 = scalar_lea.vmem %s9, 24
      %v913 = vld [vmem:[%s912] sm:$0xff]
      %v914 = vld [vmem:[%s912 + $0x8] sm:$0xff]
      %v915 = vld [vmem:[%s912 + $0x10] sm:$0xff]
      %v916 = vpack.c.bf16 %v914, %v913
      %v917 = vpack.c.bf16 %v915, %v915
      %v919 = vsel %vm710, %v917, 0
      %921 = vmatpush.bf16.msra.mxu0 0
      %922 = vmatpush.bf16.msra.mxu0 0
      %923 = vmatpush.bf16.msra.mxu0 0
      %924 = vmatpush.bf16.msra.mxu0 0
      %925 = vmatpush.bf16.msra.mxu0 0
      %926 = vmatpush.bf16.msra.mxu0 0
      %927 = vmatpush.bf16.msra.mxu0 %v919
      %928 = vmatpush.bf16.msra.mxu0 %v916
      %929 = vmatmul.bf16.gmra.mxu0 %v708
      %v930 = vpop.f32.mrf.mxu0
      %v931 = vadd.f32 0.0, %v930
      %v932 = vpop.f32.mrf.mxu0
      %933 = vdwg.mxu0
      %v935 = vsel %vm673, %v931, 0
      %937 = vmatpush.msra.mxu0 0.0
      %938 = vmatpush.msra.mxu0 0.0
      %939 = vmatpush.msra.mxu0 0.0
      %940 = vmatpush.msra.mxu0 0.0
      %941 = vmatpush.msra.mxu0 0.0
      %942 = vmatpush.msra.mxu0 0.0
      %943 = vmatpush.msra.mxu0 0.0
      %944 = vmatpush.msra.mxu0 0.0
      %945 = vmatpush.msra.mxu0 0.0
      %946 = vmatpush.msra.mxu0 0.0
      %947 = vmatpush.msra.mxu0 0.0
      %948 = vmatpush.msra.mxu0 0.0
      %949 = vmatpush.msra.mxu0 0.0
      %950 = vmatpush.msra.mxu0 0.0
      %951 = vmatpush.msra.mxu0 0.0
      %952 = vmatpush.msra.mxu0 %v653
      %953 = vmatmul.f32.gmra.mxu0 %v935
      %v954 = vpop.f32.mrf.mxu0
      %v955 = vadd.f32 0.0, %v954
      %956 = vdwg.mxu0
      %v957 = vmul.f32 %v931, %v651
      %v958 = vmul.f32 %v955, %v652
      %v959 = vadd.f32 %v957, %v958
      %s960 = scalar_lea.vmem %s12, 16
      %v961 = vld [vmem:[%s960] sm:$0xff]
      %v962 = vld [vmem:[%s960 + $0x8] sm:$0xff]
      %v963 = vpack.c.bf16 %v962, %v961
      %964 = vmatpush.bf16.msra.mxu0 0
      %965 = vmatpush.bf16.msra.mxu0 0
      %966 = vmatpush.bf16.msra.mxu0 0
      %967 = vmatpush.bf16.msra.mxu0 0
      %968 = vmatpush.bf16.msra.mxu0 0
      %969 = vmatpush.bf16.msra.mxu0 0
      %970 = vmatpush.bf16.msra.mxu0 0
      %971 = vmatpush.bf16.msra.mxu0 %v963
      %972 = vmatmul.bf16.gmra.mxu0 %v779
      %v973 = vpop.f32.mrf.mxu0
      %v974 = vadd.f32 0.0, %v973
      %v975 = vpop.f32.mrf.mxu0
      %976 = vdwg.mxu0
      %s977 = scalar_lea.vmem %s13, 16
      %v978 = vld [vmem:[%s977] sm:$0xff]
      %v979 = vld [vmem:[%s977 + $0x8] sm:$0xff]
      %v980 = vpack.c.bf16 %v979, %v978
      %981 = vmatpush.bf16.msra.mxu0 0
      %982 = vmatpush.bf16.msra.mxu0 0
      %983 = vmatpush.bf16.msra.mxu0 0
      %984 = vmatpush.bf16.msra.mxu0 0
      %985 = vmatpush.bf16.msra.mxu0 0
      %986 = vmatpush.bf16.msra.mxu0 0
      %987 = vmatpush.bf16.msra.mxu0 0
      %988 = vmatpush.bf16.msra.mxu0 %v980
      %989 = vmatmul.bf16.gmra.mxu0 %v779
      %v990 = vpop.f32.mrf.mxu0
      %v991 = vadd.f32 0.0, %v990
      %v992 = vpop.f32.mrf.mxu0
      %993 = vdwg.mxu0
      %v994 = vpack.c.bf16 %v909, %v909
      %v995 = vpack.c.bf16 %v974, %v974
      %v996 = vpack.c.bf16 %v959, %v959
      %v998 = vsel %vm673, %v996, 0
      %1000 = vmatpush.bf16.xpose.msra.mxu0 0
      %1001 = vmatpush.bf16.xpose.msra.mxu0 0
      %1002 = vmatpush.bf16.xpose.msra.mxu0 0
      %1003 = vmatpush.bf16.xpose.msra.mxu0 0
      %1004 = vmatpush.bf16.xpose.msra.mxu0 0
      %1005 = vmatpush.bf16.xpose.msra.mxu0 0
      %1006 = vmatpush.bf16.xpose.msra.mxu0 0
      %1007 = vmatpush.bf16.xpose.msra.mxu0 %v818
      %1008 = vmatmul.bf16.gmra.mxu0 %v998
      %v1009 = vpop.f32.mrf.mxu0
      %v1010 = vadd.f32 0.0, %v1009
      %v1011 = vpop.f32.mrf.mxu0
      %1012 = vdwg.mxu0
      %v1014 = vsel %vm623, %v994, 0
      %v1017 = vsel %vm623, %v995, 0
      %1019 = vmatpush.bf16.xpose.msra.mxu0 0
      %1020 = vmatpush.bf16.xpose.msra.mxu0 0
      %1021 = vmatpush.bf16.xpose.msra.mxu0 0
      %1022 = vmatpush.bf16.xpose.msra.mxu0 0
      %1023 = vmatpush.bf16.xpose.msra.mxu0 0
      %1024 = vmatpush.bf16.xpose.msra.mxu0 0
      %1025 = vmatpush.bf16.xpose.msra.mxu0 0
      %1026 = vmatpush.bf16.xpose.msra.mxu0 %v1017
      %1027 = vmatmul.bf16.gmra.mxu0 %v1014
      %v1028 = vpop.f32.mrf.mxu0
      %v1029 = vadd.f32 %v1010, %v1028
      %v1030 = vpop.f32.mrf.mxu0
      %1031 = vdwg.mxu0
      %v1032 = vmul.f32 %v1029, 0.20412415
      %v1033 = vadd.f32 %v1032, %v700
      %v1034 = vsel %vm673, %v1033, -inf
      %1035 = vmax.xlane.f32.xlu0 %v1034
      %v1036 = vpop.xlane.xlu0 %1035
      %v1037 = vsub.f32 %v1033, %v1036
      %v1038 = vmul.f32 %v1037, 1.442695
      %v1039 = vpow.pop %v1038
      %v1040 = vsel %vm673, %v1039, 0.0
      %1041 = vadd.xlane.f32.xlu0 %v1040
      %v1042 = vpop.xlane.xlu0 %1041
      %v1043 = vrcp.pop %v1042
      %v1044 = vmul.f32 %v1039, %v1043
      %v1045 = vpack.c.bf16 %v1044, %v1044
      %v1046 = vpack.c.bf16 %v991, %v991
      %v1048 = vsel %vm673, %v1045, 0
      %v1051 = vsel %vm710, %v1046, 0
      %1053 = vmatpush.bf16.msra.mxu0 0
      %1054 = vmatpush.bf16.msra.mxu0 0
      %1055 = vmatpush.bf16.msra.mxu0 0
      %1056 = vmatpush.bf16.msra.mxu0 0
      %1057 = vmatpush.bf16.msra.mxu0 0
      %1058 = vmatpush.bf16.msra.mxu0 0
      %1059 = vmatpush.bf16.msra.mxu0 0
      %1060 = vmatpush.bf16.msra.mxu0 %v1051
      %1061 = vmatmul.bf16.gmra.mxu0 %v1048
      %v1062 = vpop.f32.mrf.mxu0
      %v1063 = vadd.f32 0.0, %v1062
      %v1064 = vpop.f32.mrf.mxu0
      %1065 = vdwg.mxu0
      %s1066 = scalar_lea.vmem %s15, 16
      %v1067 = vld [vmem:[%s1066] sm:$0xff]
      %v1068 = vld [vmem:[%s1066 + $0x8] sm:$0xff]
      %v1069 = vpack.c.bf16 %v1063, %v1063
      %v1070 = vpack.c.bf16 %v1068, %v1067
      %v1072 = vsel %vm623, %v1069, 0
      %1074 = vmatpush.bf16.msra.mxu0 0
      %1075 = vmatpush.bf16.msra.mxu0 0
      %1076 = vmatpush.bf16.msra.mxu0 0
      %1077 = vmatpush.bf16.msra.mxu0 0
      %1078 = vmatpush.bf16.msra.mxu0 0
      %1079 = vmatpush.bf16.msra.mxu0 0
      %1080 = vmatpush.bf16.msra.mxu0 0
      %1081 = vmatpush.bf16.msra.mxu0 %v1070
      %1082 = vmatmul.bf16.gmra.mxu0 %v1072
      %v1083 = vpop.f32.mrf.mxu0
      %v1084 = vadd.f32 0.0, %v1083
      %v1085 = vpop.f32.mrf.mxu0
      %1086 = vdwg.mxu0
      %v1088 = vsel %vm623, %v888, 0
      %1090 = vmatpush.bf16.msra.mxu0 0
      %1091 = vmatpush.bf16.msra.mxu0 0
      %1092 = vmatpush.bf16.msra.mxu0 0
      %1093 = vmatpush.bf16.msra.mxu0 0
      %1094 = vmatpush.bf16.msra.mxu0 0
      %1095 = vmatpush.bf16.msra.mxu0 0
      %1096 = vmatpush.bf16.msra.mxu0 0
      %1097 = vmatpush.bf16.msra.mxu0 %v889
      %1098 = vmatmul.bf16.gmra.mxu0 %v1088
      %v1099 = vpop.f32.mrf.mxu0
      %v1100 = vadd.f32 %v1084, %v1099
      %v1101 = vpop.f32.mrf.mxu0
      %1102 = vdwg.mxu0
      %v1103 = vadd.f32 %v518, %v1100
      %1104 = vst.msk [vmem:[%s516] sm:$0xff] %vm521, %v1103
      %p1105 = scmp.lt.s32.totalorder %s27, 1
      %s1106 = scalar_select %p1105, %s27, 1
      %s1107 = smul.addr %s1106, 8
      %s1108 = scalar_lea.vmem %s16, %s1107
      // Predicated region
      $region85: #{main_model_forward.5} parent=83 // pred_check
        %p1109 = pneg %p386
      $region86: #{main_model_forward.5} parent=83 // pred_check_branch
        %1111 = sbr.rel (%p1109) target = $region88
      $region87: #{main_model_forward.5} parent=83 // pred_region
        _
      $region88: #{main_model_forward.5} parent=83 // pred_fallthru
        _
    $region84: #{main_model_forward.5} parent=5 // pred_fallthru
      _
    %p1112 = scmp.le.s32.totalorder 2, %s22
    // Predicated region
    $region89: #{main_model_forward.5} parent=5 // pred_check
      %p1113 = pneg %p1112
    $region90: #{main_model_forward.5} parent=5 // pred_check_branch
      %1115 = sbr.rel (%p1113) target = $region92
    $region91: #{main_model_forward.5} parent=5 // pred_region
      %s1116 = ssub.s32 %s22, 2
      // Predicated region
      $region93: #{main_model_forward.5} parent=91 // pred_check
        %p1117 = pneg %p392
      $region94: #{main_model_forward.5} parent=91 // pred_check_branch
        %1119 = sbr.rel (%p1117) target = $region96
      $region95: #{main_model_forward.5} parent=91 // pred_region
        %p1120 = scmp.lt.s32.totalorder %s28, 1
        %s1121 = scalar_select %p1120, %s28, 1
        %s1122 = smul.addr %s1121, 8
        %s1123 = scalar_lea.vmem %s16, %s1122
      $region96: #{main_model_forward.5} parent=91 // pred_fallthru
        _
    $region92: #{main_model_forward.5} parent=5 // pred_fallthru
      _
  $region6: #{main_model_forward.5} parent=0 // loop_footer
    %s26 = sadd.s32 1, %s22
  $region7: #{main_model_forward.5} parent=0 // loop_footer_branch
    %21 = sbr.rel target = $region3
  $region8: #{main_model_forward.5} parent=0 // loop_exit
    _

// kernel: main_model_forward.8
$region0: #{main_model_forward.8}
  #allocation0 [shape = 'u32[]', space=smem, size = 0x4, offset = 0x4, fixed_abs, tag = 'smem constant byte address 0x4 - core index']
  #allocation1 [shape = 'u32[72,128]{1,0:T(1,128)}', space=vmem, size = 0x9000, scoped, tag = 'internal scratch']
  %s0 = inlined_call_operand.vmem [shape: f32[16,32], index: 0, kind: input, shape index: {}]
  %s1 = inlined_call_operand.vmem [shape: f32[1,32], index: 1, kind: input, shape index: {}]
  %s2 = inlined_call_operand.vmem [shape: f32[32,4], index: 2, kind: input, shape index: {}]
  %s3 = inlined_call_operand.vmem [shape: f32[4,32,32], index: 3, kind: input, shape index: {}]
  %s4 = inlined_call_operand.vmem [shape: f32[4,32,32], index: 4, kind: input, shape index: {}]
  %s5 = inlined_call_operand.vmem [shape: f32[4,32,32], index: 5, kind: input, shape index: {}]
  %s6 = inlined_call_operand.vmem [shape: f32[32,32], index: 6, kind: input, shape index: {}]
  %s7 = inlined_call_operand.vmem [shape: f32[32,32], index: 7, kind: input, shape index: {}]
  %s8 = inlined_call_operand.vmem [shape: f32[32,32], index: 8, kind: input, shape index: {}]
  %s9 = inlined_call_operand.vmem [shape: f32[16,32], index: 9, kind: output, shape index: {}]
  %s10 = sld [smem:[#allocation0]]
  $region69: #{main_model_forward.8} parent=0
    _
  %s12 = ssub.s32 1, %s10
  %s13 = scalar_select 0, %s12, %s10
  loop: start=0, step=1, limit=4
  $region2: #{main_model_forward.8} parent=0 // loop_pre_header
    _
  $region3: #{main_model_forward.8} parent=0 // loop_header
    %s15 = sphi 0, %s19
    %p16 = scmp.ge.s32.totalorder %s15, 4
    %s25 = sphi 0, %s27
    %s28 = sphi 0, %s25
    %s29 = sphi 0, %s28
    %s45 = sphi 0, %s29
    %s49 = sphi 0, %s49
    %s51 = sphi 0, %s49
    %s52 = sphi 0, %s51
    %s66 = sphi 0, %s52
    %s70 = sphi 0, %s70
    %s72 = sphi 0, %s70
    %s73 = sphi 0, %s72
    %s87 = sphi 0, %s73
    %s91 = sphi 0, %s91
    %s93 = sphi 0, %s91
    %s94 = sphi 0, %s93
    %s108 = sphi 0, %s94
    %s112 = sphi 0, %s112
    %s114 = sphi 0, %s112
    %s115 = sphi 0, %s114
    %s129 = sphi 0, %s115
    %s133 = sphi 0, %s133
    %s135 = sphi 0, %s133
    %s136 = sphi 0, %s135
    %s150 = sphi 0, %s136
    %s154 = sphi 0, %s154
    %s156 = sphi 0, %s154
    %s157 = sphi 0, %s156
    %s171 = sphi 0, %s157
    %s175 = sphi 0, %s175
    %s177 = sphi 0, %s175
    %s178 = sphi 0, %s177
    %s192 = sphi 0, %s178
    %s196 = sphi 0, %s196
    %s198 = sphi 0, %s196
    %s199 = sphi 0, %s198
    %s213 = sphi 0, %s199
    %s219 = sphi 0, %s221
    %s222 = sphi 0, %s219
    %s223 = sphi 0, %s222
    %s239 = sphi 0, %s223
  $region4: #{main_model_forward.8} parent=0 // loop_header_branch
    %18 = sbr.rel (%p16) target = $region8
  $region5: #{main_model_forward.8} parent=0 // loop_body
    %s20 = ssub.s32 %s15, 1
    %s21 = ssub.s32 %s15, 2
    %s22 = sadd.s32 %s15, 1
    %s23 = ssub.s32 %s15, %s22
    %p24 = scmp.eq.s32.totalorder %s23, 0
    %s26 = sadd.s32 %s25, 1
    %s27 = scalar_select %p24, %s25, %s26
    %p30 = pneg %p24
    %p31 = scmp.eq.s32.totalorder %s15, 1
    %p32 = por %p30, %p31
    %p33 = scmp.ne.s32.totalorder %s25, %s28
    %p34 = scmp.eq.s32.totalorder %s15, 0
    %p35 = por %p33, %p34
    %p36 = scmp.ne.s32.totalorder %s25, %s28
    %p37 = scmp.eq.s32.totalorder %s20, 1
    %p38 = por %p36, %p37
    %p39 = scmp.ne.s32.totalorder %s28, %s29
    %p40 = scmp.eq.s32.totalorder %s20, 0
    %p41 = por %p39, %p40
    %p42 = scmp.ne.s32.totalorder %s28, %s29
    %p43 = scmp.eq.s32.totalorder %s21, 1
    %p44 = por %p42, %p43
    %p46 = scmp.ne.s32.totalorder %s29, %s45
    %p47 = scmp.eq.s32.totalorder %s21, 0
    %p48 = por %p46, %p47
    %s50 = sadd.s32 %s49, 1
    %p53 = scmp.eq.s32.totalorder %s15, 1
    %p54 = scmp.ne.s32.totalorder %s49, %s51
    %p55 = scmp.eq.s32.totalorder %s15, 0
    %p56 = por %p54, %p55
    %p57 = scmp.ne.s32.totalorder %s49, %s51
    %p58 = scmp.eq.s32.totalorder %s20, 1
    %p59 = por %p57, %p58
    %p60 = scmp.ne.s32.totalorder %s51, %s52
    %p61 = scmp.eq.s32.totalorder %s20, 0
    %p62 = por %p60, %p61
    %p63 = scmp.ne.s32.totalorder %s51, %s52
    %p64 = scmp.eq.s32.totalorder %s21, 1
    %p65 = por %p63, %p64
    %p67 = scmp.ne.s32.totalorder %s52, %s66
    %p68 = scmp.eq.s32.totalorder %s21, 0
    %p69 = por %p67, %p68
    %s71 = sadd.s32 %s70, 1
    %p74 = scmp.eq.s32.totalorder %s15, 1
    %p75 = scmp.ne.s32.totalorder %s70, %s72
    %p76 = scmp.eq.s32.totalorder %s15, 0
    %p77 = por %p75, %p76
    %p78 = scmp.ne.s32.totalorder %s70, %s72
    %p79 = scmp.eq.s32.totalorder %s20, 1
    %p80 = por %p78, %p79
    %p81 = scmp.ne.s32.totalorder %s72, %s73
    %p82 = scmp.eq.s32.totalorder %s20, 0
    %p83 = por %p81, %p82
    %p84 = scmp.ne.s32.totalorder %s72, %s73
    %p85 = scmp.eq.s32.totalorder %s21, 1
    %p86 = por %p84, %p85
    %p88 = scmp.ne.s32.totalorder %s73, %s87
    %p89 = scmp.eq.s32.totalorder %s21, 0
    %p90 = por %p88, %p89
    %s92 = sadd.s32 %s91, 1
    %p95 = scmp.eq.s32.totalorder %s15, 1
    %p96 = scmp.ne.s32.totalorder %s91, %s93
    %p97 = scmp.eq.s32.totalorder %s15, 0
    %p98 = por %p96, %p97
    %p99 = scmp.ne.s32.totalorder %s91, %s93
    %p100 = scmp.eq.s32.totalorder %s20, 1
    %p101 = por %p99, %p100
    %p102 = scmp.ne.s32.totalorder %s93, %s94
    %p103 = scmp.eq.s32.totalorder %s20, 0
    %p104 = por %p102, %p103
    %p105 = scmp.ne.s32.totalorder %s93, %s94
    %p106 = scmp.eq.s32.totalorder %s21, 1
    %p107 = por %p105, %p106
    %p109 = scmp.ne.s32.totalorder %s94, %s108
    %p110 = scmp.eq.s32.totalorder %s21, 0
    %p111 = por %p109, %p110
    %s113 = sadd.s32 %s112, 1
    %p116 = scmp.eq.s32.totalorder %s15, 1
    %p117 = scmp.ne.s32.totalorder %s112, %s114
    %p118 = scmp.eq.s32.totalorder %s15, 0
    %p119 = por %p117, %p118
    %p120 = scmp.ne.s32.totalorder %s112, %s114
    %p121 = scmp.eq.s32.totalorder %s20, 1
    %p122 = por %p120, %p121
    %p123 = scmp.ne.s32.totalorder %s114, %s115
    %p124 = scmp.eq.s32.totalorder %s20, 0
    %p125 = por %p123, %p124
    %p126 = scmp.ne.s32.totalorder %s114, %s115
    %p127 = scmp.eq.s32.totalorder %s21, 1
    %p128 = por %p126, %p127
    %p130 = scmp.ne.s32.totalorder %s115, %s129
    %p131 = scmp.eq.s32.totalorder %s21, 0
    %p132 = por %p130, %p131
    %s134 = sadd.s32 %s133, 1
    %p137 = scmp.eq.s32.totalorder %s15, 1
    %p138 = scmp.ne.s32.totalorder %s133, %s135
    %p139 = scmp.eq.s32.totalorder %s15, 0
    %p140 = por %p138, %p139
    %p141 = scmp.ne.s32.totalorder %s133, %s135
    %p142 = scmp.eq.s32.totalorder %s20, 1
    %p143 = por %p141, %p142
    %p144 = scmp.ne.s32.totalorder %s135, %s136
    %p145 = scmp.eq.s32.totalorder %s20, 0
    %p146 = por %p144, %p145
    %p147 = scmp.ne.s32.totalorder %s135, %s136
    %p148 = scmp.eq.s32.totalorder %s21, 1
    %p149 = por %p147, %p148
    %p151 = scmp.ne.s32.totalorder %s136, %s150
    %p152 = scmp.eq.s32.totalorder %s21, 0
    %p153 = por %p151, %p152
    %s155 = sadd.s32 %s154, 1
    %p158 = scmp.eq.s32.totalorder %s15, 1
    %p159 = scmp.ne.s32.totalorder %s154, %s156
    %p160 = scmp.eq.s32.totalorder %s15, 0
    %p161 = por %p159, %p160
    %p162 = scmp.ne.s32.totalorder %s154, %s156
    %p163 = scmp.eq.s32.totalorder %s20, 1
    %p164 = por %p162, %p163
    %p165 = scmp.ne.s32.totalorder %s156, %s157
    %p166 = scmp.eq.s32.totalorder %s20, 0
    %p167 = por %p165, %p166
    %p168 = scmp.ne.s32.totalorder %s156, %s157
    %p169 = scmp.eq.s32.totalorder %s21, 1
    %p170 = por %p168, %p169
    %p172 = scmp.ne.s32.totalorder %s157, %s171
    %p173 = scmp.eq.s32.totalorder %s21, 0
    %p174 = por %p172, %p173
    %s176 = sadd.s32 %s175, 1
    %p179 = scmp.eq.s32.totalorder %s15, 1
    %p180 = scmp.ne.s32.totalorder %s175, %s177
    %p181 = scmp.eq.s32.totalorder %s15, 0
    %p182 = por %p180, %p181
    %p183 = scmp.ne.s32.totalorder %s175, %s177
    %p184 = scmp.eq.s32.totalorder %s20, 1
    %p185 = por %p183, %p184
    %p186 = scmp.ne.s32.totalorder %s177, %s178
    %p187 = scmp.eq.s32.totalorder %s20, 0
    %p188 = por %p186, %p187
    %p189 = scmp.ne.s32.totalorder %s177, %s178
    %p190 = scmp.eq.s32.totalorder %s21, 1
    %p191 = por %p189, %p190
    %p193 = scmp.ne.s32.totalorder %s178, %s192
    %p194 = scmp.eq.s32.totalorder %s21, 0
    %p195 = por %p193, %p194
    %s197 = sadd.s32 %s196, 1
    %p200 = scmp.eq.s32.totalorder %s15, 1
    %p201 = scmp.ne.s32.totalorder %s196, %s198
    %p202 = scmp.eq.s32.totalorder %s15, 0
    %p203 = por %p201, %p202
    %p204 = scmp.ne.s32.totalorder %s196, %s198
    %p205 = scmp.eq.s32.totalorder %s20, 1
    %p206 = por %p204, %p205
    %p207 = scmp.ne.s32.totalorder %s198, %s199
    %p208 = scmp.eq.s32.totalorder %s20, 0
    %p209 = por %p207, %p208
    %p210 = scmp.ne.s32.totalorder %s198, %s199
    %p211 = scmp.eq.s32.totalorder %s21, 1
    %p212 = por %p210, %p211
    %p214 = scmp.ne.s32.totalorder %s199, %s213
    %p215 = scmp.eq.s32.totalorder %s21, 0
    %p216 = por %p214, %p215
    %s217 = ssub.s32 %s15, %s22
    %p218 = scmp.eq.s32.totalorder %s217, 0
    %s220 = sadd.s32 %s219, 1
    %s221 = scalar_select %p218, %s219, %s220
    %p224 = pneg %p218
    %p225 = scmp.eq.s32.totalorder %s15, 1
    %p226 = por %p224, %p225
    %p227 = scmp.ne.s32.totalorder %s219, %s222
    %p228 = scmp.eq.s32.totalorder %s15, 0
    %p229 = por %p227, %p228
    %p230 = scmp.ne.s32.totalorder %s219, %s222
    %p231 = scmp.eq.s32.totalorder %s20, 1
    %p232 = por %p230, %p231
    %p233 = scmp.ne.s32.totalorder %s222, %s223
    %p234 = scmp.eq.s32.totalorder %s20, 0
    %p235 = por %p233, %p234
    %p236 = scmp.ne.s32.totalorder %s222, %s223
    %p237 = scmp.eq.s32.totalorder %s21, 1
    %p238 = por %p236, %p237
    %p240 = scmp.ne.s32.totalorder %s223, %s239
    %p241 = scmp.eq.s32.totalorder %s21, 0
    %p242 = por %p240, %p241
    %p243 = scmp.le.s32.totalorder 1, %s15
    %p244 = scmp.lt.s32.totalorder %s15, 3
    %p245 = pnand %p243, %p244
    %p246 = pneg %p245
    // Predicated region
    $region9: #{main_model_forward.8} parent=5 // pred_check
      _
    $region10: #{main_model_forward.8} parent=5 // pred_check_branch
      %248 = sbr.rel (%p245) target = $region12
    $region11: #{main_model_forward.8} parent=5 // pred_region
      %s249 = ssub.s32 %s15, 1
      // Predicated region
      $region13: #{main_model_forward.8} parent=11 // pred_check
        %p250 = pneg %p62
      $region14: #{main_model_forward.8} parent=11 // pred_check_branch
        %252 = sbr.rel (%p250) target = $region16
      $region15: #{main_model_forward.8} parent=11 // pred_region
        _
      $region16: #{main_model_forward.8} parent=11 // pred_fallthru
        _
      // Predicated region
      $region17: #{main_model_forward.8} parent=11 // pred_check
        %p253 = pneg %p83
      $region18: #{main_model_forward.8} parent=11 // pred_check_branch
        %255 = sbr.rel (%p253) target = $region20
      $region19: #{main_model_forward.8} parent=11 // pred_region
        _
      $region20: #{main_model_forward.8} parent=11 // pred_fallthru
        _
      // Predicated region
      $region21: #{main_model_forward.8} parent=11 // pred_check
        %p256 = pneg %p104
      $region22: #{main_model_forward.8} parent=11 // pred_check_branch
        %258 = sbr.rel (%p256) target = $region24
      $region23: #{main_model_forward.8} parent=11 // pred_region
        _
      $region24: #{main_model_forward.8} parent=11 // pred_fallthru
        _
      // Predicated region
      $region25: #{main_model_forward.8} parent=11 // pred_check
        %p259 = pneg %p125
      $region26: #{main_model_forward.8} parent=11 // pred_check_branch
        %261 = sbr.rel (%p259) target = $region28
      $region27: #{main_model_forward.8} parent=11 // pred_region
        _
      $region28: #{main_model_forward.8} parent=11 // pred_fallthru
        _
      // Predicated region
      $region29: #{main_model_forward.8} parent=11 // pred_check
        %p262 = pneg %p146
      $region30: #{main_model_forward.8} parent=11 // pred_check_branch
        %264 = sbr.rel (%p262) target = $region32
      $region31: #{main_model_forward.8} parent=11 // pred_region
        _
      $region32: #{main_model_forward.8} parent=11 // pred_fallthru
        _
      // Predicated region
      $region33: #{main_model_forward.8} parent=11 // pred_check
        %p265 = pneg %p167
      $region34: #{main_model_forward.8} parent=11 // pred_check_branch
        %267 = sbr.rel (%p265) target = $region36
      $region35: #{main_model_forward.8} parent=11 // pred_region
        _
      $region36: #{main_model_forward.8} parent=11 // pred_fallthru
        _
      // Predicated region
      $region37: #{main_model_forward.8} parent=11 // pred_check
        %p268 = pneg %p188
      $region38: #{main_model_forward.8} parent=11 // pred_check_branch
        %270 = sbr.rel (%p268) target = $region40
      $region39: #{main_model_forward.8} parent=11 // pred_region
        _
      $region40: #{main_model_forward.8} parent=11 // pred_fallthru
        _
      // Predicated region
      $region41: #{main_model_forward.8} parent=11 // pred_check
        %p271 = pneg %p209
      $region42: #{main_model_forward.8} parent=11 // pred_check_branch
        %273 = sbr.rel (%p271) target = $region44
      $region43: #{main_model_forward.8} parent=11 // pred_region
        _
      $region44: #{main_model_forward.8} parent=11 // pred_fallthru
        _
    $region12: #{main_model_forward.8} parent=5 // pred_fallthru
      _
    %p274 = scmp.lt.s32.totalorder %s15, 2
    // Predicated region
    $region45: #{main_model_forward.8} parent=5 // pred_check
      %p275 = pneg %p274
    $region46: #{main_model_forward.8} parent=5 // pred_check_branch
      %277 = sbr.rel (%p275) target = $region48
    $region47: #{main_model_forward.8} parent=5 // pred_region
      // Predicated region
      $region49: #{main_model_forward.8} parent=47 // pred_check
        %p278 = pneg %p35
      $region50: #{main_model_forward.8} parent=47 // pred_check_branch
        %280 = sbr.rel (%p278) target = $region52
      $region51: #{main_model_forward.8} parent=47 // pred_region
        %p281 = scmp.lt.s32.totalorder %s15, 1
        %s282 = scalar_select %p281, %s15, 1
        %s283 = smul.addr %s282, 8
        %s284 = scalar_lea.vmem %s0, %s283
      $region52: #{main_model_forward.8} parent=47 // pred_fallthru
        _
    $region48: #{main_model_forward.8} parent=5 // pred_fallthru
      _
    %p285 = scmp.le.s32.totalorder 1, %s15
    %p286 = scmp.lt.s32.totalorder %s15, 3
    %p287 = pnand %p285, %p286
    %p288 = pneg %p287
    // Predicated region
    $region53: #{main_model_forward.8} parent=5 // pred_check
      _
    $region54: #{main_model_forward.8} parent=5 // pred_check_branch
      %290 = sbr.rel (%p287) target = $region56
    $region55: #{main_model_forward.8} parent=5 // pred_region
      %s291 = ssub.s32 %s15, 1
      %p292 = scmp.lt.s32.totalorder %s20, 1
      %s293 = scalar_select %p292, %s20, 1
      %s294 = smul.addr %s293, 8
      %s295 = scalar_lea.vmem %s0, %s294
      %p296 = pneg %p41
      %p297 = pneg %p38
      %p298 = pneg %p62
      %p299 = pneg %p59
      %p300 = pneg %p83
      %p301 = pneg %p80
      %p302 = pneg %p104
      %p303 = pneg %p101
      %p304 = pneg %p125
      %p305 = pneg %p122
      %p306 = pneg %p146
      %p307 = pneg %p143
      %p308 = pneg %p167
      %p309 = pneg %p164
      %p310 = pneg %p188
      %p311 = pneg %p185
      %p312 = pneg %p209
      %p313 = pneg %p206
      %p314 = pneg %p235
      %p315 = pneg %p232
      %p316 = scmp.lt.s32.totalorder %s20, 1
      %s317 = scalar_select %p316, %s20, 1
      %s318 = smul.addr %s317, 8
      %s319 = scalar_lea.vmem %s9, %s318
      %p320 = scmp.lt.s32.totalorder %s20, 1
      %s321 = scalar_select %p320, %s20, 1
      %s322 = smul.addr %s321, 8
      %s323 = scalar_lea.vmem %s0, %s322
      %p324 = scmp.lt.s32.totalorder %s20, 1
      %s325 = scalar_select %p324, %s20, 1
      %s326 = smul.addr %s325, 8
      %s327 = scalar_lea.vmem %s9, %s326
      %v329 = vld [vmem:[%s323] sm:$0xff]
      %v330 = vld [vmem:[%s1] sm:$0x1]
      %v331 = vmul.f32 %v329, %v329
      %vm332 = vcmask 261120
      %v333 = vsel %vm332, %v331, 0.0
      %334 = vadd.xlane.f32.xlu0 %v333
      %v335 = vpop.xlane.xlu0 %334
      %v336 = vrcp.pop 32.0
      %v337 = vmul.f32 32.0, %v336
      %v338 = vsub.f32 1.0, %v337
      %v339 = vmul.f32 %v336, %v338
      %v340 = vadd.f32 %v336, %v339
      %vm341 = vweird.f32 %v336
      %v342 = vsel %vm341, %v336, %v340
      %v343 = vmul.f32 %v335, %v342
      %v344 = vadd.f32 %v343, 1e-06
      %v345 = vrsqrt.pop %v344
      %v346 = vmul.f32 %v345, %v344
      %v347 = vmul.f32 %v346, %v345
      %v348 = vmul.f32 0.5, %v347
      %v349 = vsub.f32 1.5, %v348
      %v350 = vmul.f32 %v345, %v349
      %vm351 = vweird.f32 %v344
      %vm352 = vweird.f32 %v345
      %vm353 = vmor %vm351, %vm352
      %v354 = vsel %vm353, %v345, %v350
      %v355 = vmul.f32 %v329, %v354
      %v357 = vperm.slane %v330, 0
      %v359 = vmul.f32 %v355, %v357
      %v360 = vld [vmem:[%s2] sm:$0xff]
      %v361 = vld [vmem:[%s2 + $0x8] sm:$0xff]
      %v362 = vld [vmem:[%s2 + $0x10] sm:$0xff]
      %v363 = vld [vmem:[%s2 + $0x18] sm:$0xff]
      %v364 = vpack.c.bf16 %v359, %v359
      %v365 = vpack.c.bf16 %v361, %v360
      %v366 = vpack.c.bf16 %v363, %v362
      %v368 = vsel %vm332, %v364, 0
      %370 = vmatpush.bf16.msra.mxu0 0
      %371 = vmatpush.bf16.msra.mxu0 0
      %372 = vmatpush.bf16.msra.mxu0 0
      %373 = vmatpush.bf16.msra.mxu0 0
      %374 = vmatpush.bf16.msra.mxu0 0
      %375 = vmatpush.bf16.msra.mxu0 0
      %376 = vmatpush.bf16.msra.mxu0 %v366
      %377 = vmatpush.bf16.msra.mxu0 %v365
      %378 = vmatmul.bf16.gmra.mxu0 %v368
      %v379 = vpop.f32.mrf.mxu0
      %v380 = vadd.f32 0.0, %v379
      %v381 = vpop.f32.mrf.mxu0
      %382 = vdwg.mxu0
      %v383 = vsub.f32 0.0, %v380
      %v384 = vmul.f32 %v383, 1.442695
      %v385 = vpow.pop %v384
      %v386 = vadd.f32 %v385, 1.0
      %v387 = vrcp.pop %v386
      %v388 = vmul.f32 %v386, %v387
      %v389 = vsub.f32 1.0, %v388
      %v390 = vmul.f32 %v387, %v389
      %v391 = vadd.f32 %v387, %v390
      %vm392 = vweird.f32 %v386
      %vm393 = vweird.f32 %v387
      %vm394 = vmor %vm392, %vm393
      %v395 = vsel %vm394, %v387, %v391
      %v396 = vand.u32 2147483647, %v386
      %vm397 = vcmp.eq.f32.partialorder %v396, 8.507059e+37
      %v398 = vand.u32 %v386, 2147483648
      %v399 = vor.u32 1.1754944e-38, %v398
      %v400 = vsel %vm397, %v399, %v395
      %v401 = vmul.f32 1.0, %v400
      %403 = vrot.lane.b32.xlu0 %v401, 1
      %v404 = vpop.permute.xlu0 %403
      %vm406 = vcmp.gt.f32.partialorder %v401, %v404
      %v407 = vsel %vm406, 1, 0
      %v408 = vcvt.s32.f32 %v407
      %v409 = vadd.f32 %v408, 0.0
      %410 = vrot.lane.b32.xlu0 %v401, 2
      %v411 = vpop.permute.xlu0 %410
      %vm413 = vcmp.gt.f32.partialorder %v401, %v411
      %v414 = vsel %vm413, 1, 0
      %v415 = vcvt.s32.f32 %v414
      %417 = vrot.lane.b32.xlu0 %v415, 127
      %v418 = vpop.permute.xlu0 %417
      %v420 = vadd.f32 %v409, %v418
      %421 = vrot.lane.b32.xlu0 %v401, 3
      %v422 = vpop.permute.xlu0 %421
      %vm424 = vcmp.gt.f32.partialorder %v401, %v422
      %v425 = vsel %vm424, 1, 0
      %v426 = vcvt.s32.f32 %v425
      %428 = vrot.lane.b32.xlu0 %v426, 126
      %v429 = vpop.permute.xlu0 %428
      %v431 = vadd.f32 %v420, %v429
      %vm432 = vcmp.lt.f32.partialorder %v431, 2.0
      %v433 = vsel %vm432, %v404, 0.0
      %434 = vrot.lane.b32.xlu0 %v401, 127
      %v435 = vpop.permute.xlu0 %434
      %vm437 = vcmp.gt.f32.partialorder %v401, %v435
      %vm438 = vcmp.eq.f32.partialorder %v401, %v435
      %vm439 = vmor %vm437, %vm438
      %v440 = vsel %vm439, 1, 0
      %v441 = vcvt.s32.f32 %v440
      %v442 = vadd.f32 %v441, 0.0
      %444 = vrot.lane.b32.xlu0 %v408, 126
      %v445 = vpop.permute.xlu0 %444
      %v447 = vadd.f32 %v442, %v445
      %448 = vrot.lane.b32.xlu0 %v415, 125
      %v449 = vpop.permute.xlu0 %448
      %v451 = vadd.f32 %v447, %v449
      %vm452 = vcmp.lt.f32.partialorder %v451, 2.0
      %v453 = vsel %vm452, %v435, 0.0
      %454 = vrot.lane.b32.xlu0 %v401, 126
      %v455 = vpop.permute.xlu0 %454
      %vm457 = vcmp.gt.f32.partialorder %v401, %v455
      %vm458 = vcmp.eq.f32.partialorder %v401, %v455
      %vm459 = vmor %vm457, %vm458
      %v460 = vsel %vm459, 1, 0
      %v461 = vcvt.s32.f32 %v460
      %v462 = vadd.f32 %v461, 0.0
      %464 = vrot.lane.b32.xlu0 %v441, 127
      %v465 = vpop.permute.xlu0 %464
      %v467 = vadd.f32 %v462, %v465
      %468 = vrot.lane.b32.xlu0 %v408, 125
      %v469 = vpop.permute.xlu0 %468
      %v471 = vadd.f32 %v467, %v469
      %vm472 = vcmp.lt.f32.partialorder %v471, 2.0
      %v473 = vsel %vm472, %v455, 0.0
      %474 = vrot.lane.b32.xlu0 %v401, 125
      %v475 = vpop.permute.xlu0 %474
      %vm477 = vcmp.gt.f32.partialorder %v401, %v475
      %vm478 = vcmp.eq.f32.partialorder %v401, %v475
      %vm479 = vmor %vm477, %vm478
      %v480 = vsel %vm479, 1, 0
      %v481 = vcvt.s32.f32 %v480
      %v482 = vadd.f32 %v481, 0.0
      %484 = vrot.lane.b32.xlu0 %v461, 127
      %v485 = vpop.permute.xlu0 %484
      %v487 = vadd.f32 %v482, %v485
      %488 = vrot.lane.b32.xlu0 %v441, 126
      %v489 = vpop.permute.xlu0 %488
      %v491 = vadd.f32 %v487, %v489
      %vm492 = vcmp.lt.f32.partialorder %v491, 2.0
      %v493 = vsel %vm492, %v475, 0.0
      %495 = vrot.lane.b32.xlu0 %v453, 1
      %v496 = vpop.permute.xlu0 %495
      %v498 = vadd.f32 %v433, %v496
      %500 = vrot.lane.b32.xlu0 %v473, 1
      %v501 = vpop.permute.xlu0 %500
      %v503 = vadd.f32 %v498, %v501
      %505 = vrot.lane.b32.xlu0 %v493, 1
      %v506 = vpop.permute.xlu0 %505
      %v508 = vadd.f32 %v503, %v506
      %v509 = vld [vmem:[%s3] sm:$0xff]
      %v510 = vld [vmem:[%s3 + $0x8] sm:$0xff]
      %v511 = vld [vmem:[%s3 + $0x10] sm:$0xff]
      %v512 = vld [vmem:[%s3 + $0x18] sm:$0xff]
      %v513 = vpack.c.bf16 %v510, %v509
      %v514 = vpack.c.bf16 %v512, %v511
      %515 = vmatpush.bf16.msra.mxu0 0
      %516 = vmatpush.bf16.msra.mxu0 0
      %517 = vmatpush.bf16.msra.mxu0 0
      %518 = vmatpush.bf16.msra.mxu0 0
      %519 = vmatpush.bf16.msra.mxu0 0
      %520 = vmatpush.bf16.msra.mxu0 0
      %521 = vmatpush.bf16.msra.mxu0 %v514
      %522 = vmatpush.bf16.msra.mxu0 %v513
      %523 = vmatmul.bf16.gmra.mxu0 %v368
      %v524 = vpop.f32.mrf.mxu0
      %v525 = vadd.f32 0.0, %v524
      %v526 = vpop.f32.mrf.mxu0
      %527 = vdwg.mxu0
      %v528 = vld [vmem:[%s4] sm:$0xff]
      %v529 = vld [vmem:[%s4 + $0x8] sm:$0xff]
      %v530 = vld [vmem:[%s4 + $0x10] sm:$0xff]
      %v531 = vld [vmem:[%s4 + $0x18] sm:$0xff]
      %v532 = vpack.c.bf16 %v529, %v528
      %v533 = vpack.c.bf16 %v531, %v530
      %534 = vmatpush.bf16.msra.mxu0 0
      %535 = vmatpush.bf16.msra.mxu0 0
      %536 = vmatpush.bf16.msra.mxu0 0
      %537 = vmatpush.bf16.msra.mxu0 0
      %538 = vmatpush.bf16.msra.mxu0 0
      %539 = vmatpush.bf16.msra.mxu0 0
      %540 = vmatpush.bf16.msra.mxu0 %v533
      %541 = vmatpush.bf16.msra.mxu0 %v532
      %542 = vmatmul.bf16.gmra.mxu0 %v368
      %v543 = vpop.f32.mrf.mxu0
      %v544 = vadd.f32 0.0, %v543
      %v545 = vpop.f32.mrf.mxu0
      %546 = vdwg.mxu0
      %v547 = vsub.f32 0.0, %v525
      %v548 = vmul.f32 %v547, 1.442695
      %v549 = vpow.pop %v548
      %v550 = vadd.f32 %v549, 1.0
      %v551 = vrcp.pop %v550
      %v552 = vmul.f32 %v550, %v551
      %v553 = vsub.f32 1.0, %v552
      %v554 = vmul.f32 %v551, %v553
      %v555 = vadd.f32 %v551, %v554
      %vm556 = vweird.f32 %v550
      %vm557 = vweird.f32 %v551
      %vm558 = vmor %vm556, %vm557
      %v559 = vsel %vm558, %v551, %v555
      %v560 = vand.u32 2147483647, %v550
      %vm561 = vcmp.eq.f32.partialorder %v560, 8.507059e+37
      %v562 = vand.u32 %v550, 2147483648
      %v563 = vor.u32 1.1754944e-38, %v562
      %v564 = vsel %vm561, %v563, %v559
      %v565 = vmul.f32 1.0, %v564
      %v566 = vmul.f32 %v525, %v565
      %v567 = vmul.f32 %v566, %v544
      %v568 = vld [vmem:[%s5] sm:$0xff]
      %v569 = vld [vmem:[%s5 + $0x8] sm:$0xff]
      %v570 = vld [vmem:[%s5 + $0x10] sm:$0xff]
      %v571 = vld [vmem:[%s5 + $0x18] sm:$0xff]
      %v572 = vpack.c.bf16 %v567, %v567
      %v573 = vpack.c.bf16 %v569, %v568
      %v574 = vpack.c.bf16 %v571, %v570
      %v576 = vsel %vm332, %v572, 0
      %578 = vmatpush.bf16.msra.mxu0 0
      %579 = vmatpush.bf16.msra.mxu0 0
      %580 = vmatpush.bf16.msra.mxu0 0
      %581 = vmatpush.bf16.msra.mxu0 0
      %582 = vmatpush.bf16.msra.mxu0 0
      %583 = vmatpush.bf16.msra.mxu0 0
      %584 = vmatpush.bf16.msra.mxu0 %v574
      %585 = vmatpush.bf16.msra.mxu0 %v573
      %586 = vmatmul.bf16.gmra.mxu0 %v576
      %v587 = vpop.f32.mrf.mxu0
      %v588 = vadd.f32 0.0, %v587
      %v589 = vpop.f32.mrf.mxu0
      %590 = vdwg.mxu0
      %v591 = vrcp.pop %v508
      %v592 = vmul.f32 %v508, %v591
      %v593 = vsub.f32 1.0, %v592
      %v594 = vmul.f32 %v591, %v593
      %v595 = vadd.f32 %v591, %v594
      %vm596 = vweird.f32 %v508
      %vm597 = vweird.f32 %v591
      %vm598 = vmor %vm596, %vm597
      %v599 = vsel %vm598, %v591, %v595
      %v600 = vand.u32 2147483647, %v508
      %vm601 = vcmp.eq.f32.partialorder %v600, 8.507059e+37
      %v602 = vand.u32 %v508, 2147483648
      %v603 = vor.u32 1.1754944e-38, %v602
      %v604 = vsel %vm601, %v603, %v599
      %v605 = vmul.f32 %v433, %v604
      %607 = vset.pattern.permute.xlu0 1
      %608 = vperm.xlu0 %607, %v605
      %v609 = vpop.permute.xlu0 %608
      %v611 = vmul.f32 %v609, %v588
      %v612 = vadd.f32 %v611, 0.0
      %s613 = scalar_lea.vmem %s3, 32
      %v614 = vld [vmem:[%s613] sm:$0xff]
      %v615 = vld [vmem:[%s613 + $0x8] sm:$0xff]
      %v616 = vld [vmem:[%s613 + $0x10] sm:$0xff]
      %v617 = vld [vmem:[%s613 + $0x18] sm:$0xff]
      %v618 = vpack.c.bf16 %v615, %v614
      %v619 = vpack.c.bf16 %v617, %v616
      %620 = vmatpush.bf16.msra.mxu0 0
      %621 = vmatpush.bf16.msra.mxu0 0
      %622 = vmatpush.bf16.msra.mxu0 0
      %623 = vmatpush.bf16.msra.mxu0 0
      %624 = vmatpush.bf16.msra.mxu0 0
      %625 = vmatpush.bf16.msra.mxu0 0
      %626 = vmatpush.bf16.msra.mxu0 %v619
      %627 = vmatpush.bf16.msra.mxu0 %v618
      %628 = vmatmul.bf16.gmra.mxu0 %v368
      %v629 = vpop.f32.mrf.mxu0
      %v630 = vadd.f32 0.0, %v629
      %v631 = vpop.f32.mrf.mxu0
      %632 = vdwg.mxu0
      %s633 = scalar_lea.vmem %s4, 32
      %v634 = vld [vmem:[%s633] sm:$0xff]
      %v635 = vld [vmem:[%s633 + $0x8] sm:$0xff]
      %v636 = vld [vmem:[%s633 + $0x10] sm:$0xff]
      %v637 = vld [vmem:[%s633 + $0x18] sm:$0xff]
      %v638 = vpack.c.bf16 %v635, %v634
      %v639 = vpack.c.bf16 %v637, %v636
      %640 = vmatpush.bf16.msra.mxu0 0
      %641 = vmatpush.bf16.msra.mxu0 0
      %642 = vmatpush.bf16.msra.mxu0 0
      %643 = vmatpush.bf16.msra.mxu0 0
      %644 = vmatpush.bf16.msra.mxu0 0
      %645 = vmatpush.bf16.msra.mxu0 0
      %646 = vmatpush.bf16.msra.mxu0 %v639
      %647 = vmatpush.bf16.msra.mxu0 %v638
      %648 = vmatmul.bf16.gmra.mxu0 %v368
      %v649 = vpop.f32.mrf.mxu0
      %v650 = vadd.f32 0.0, %v649
      %v651 = vpop.f32.mrf.mxu0
      %652 = vdwg.mxu0
      %v653 = vsub.f32 0.0, %v630
      %v654 = vmul.f32 %v653, 1.442695
      %v655 = vpow.pop %v654
      %v656 = vadd.f32 %v655, 1.0
      %v657 = vrcp.pop %v656
      %v658 = vmul.f32 %v656, %v657
      %v659 = vsub.f32 1.0, %v658
      %v660 = vmul.f32 %v657, %v659
      %v661 = vadd.f32 %v657, %v660
      %vm662 = vweird.f32 %v656
      %vm663 = vweird.f32 %v657
      %vm664 = vmor %vm662, %vm663
      %v665 = vsel %vm664, %v657, %v661
      %v666 = vand.u32 2147483647, %v656
      %vm667 = vcmp.eq.f32.partialorder %v666, 8.507059e+37
      %v668 = vand.u32 %v656, 2147483648
      %v669 = vor.u32 1.1754944e-38, %v668
      %v670 = vsel %vm667, %v669, %v665
      %v671 = vmul.f32 1.0, %v670
      %v672 = vmul.f32 %v630, %v671
      %v673 = vmul.f32 %v672, %v650
      %s674 = scalar_lea.vmem %s5, 32
      %v675 = vld [vmem:[%s674] sm:$0xff]
      %v676 = vld [vmem:[%s674 + $0x8] sm:$0xff]
      %v677 = vld [vmem:[%s674 + $0x10] sm:$0xff]
      %v678 = vld [vmem:[%s674 + $0x18] sm:$0xff]
      %v679 = vpack.c.bf16 %v673, %v673
      %v680 = vpack.c.bf16 %v676, %v675
      %v681 = vpack.c.bf16 %v678, %v677
      %v683 = vsel %vm332, %v679, 0
      %685 = vmatpush.bf16.msra.mxu0 0
      %686 = vmatpush.bf16.msra.mxu0 0
      %687 = vmatpush.bf16.msra.mxu0 0
      %688 = vmatpush.bf16.msra.mxu0 0
      %689 = vmatpush.bf16.msra.mxu0 0
      %690 = vmatpush.bf16.msra.mxu0 0
      %691 = vmatpush.bf16.msra.mxu0 %v681
      %692 = vmatpush.bf16.msra.mxu0 %v680
      %693 = vmatmul.bf16.gmra.mxu0 %v683
      %v694 = vpop.f32.mrf.mxu0
      %v695 = vadd.f32 0.0, %v694
      %v696 = vpop.f32.mrf.mxu0
      %697 = vdwg.mxu0
      %699 = vrot.lane.b32.xlu0 %v508, 127
      %v700 = vpop.permute.xlu0 %699
      %v702 = vrcp.pop %v700
      %v703 = vmul.f32 %v700, %v702
      %v704 = vsub.f32 1.0, %v703
      %v705 = vmul.f32 %v702, %v704
      %v706 = vadd.f32 %v702, %v705
      %vm707 = vweird.f32 %v700
      %vm708 = vweird.f32 %v702
      %vm709 = vmor %vm707, %vm708
      %v710 = vsel %vm709, %v702, %v706
      %v711 = vand.u32 2147483647, %v700
      %vm712 = vcmp.eq.f32.partialorder %v711, 8.507059e+37
      %v713 = vand.u32 %v700, 2147483648
      %v714 = vor.u32 1.1754944e-38, %v713
      %v715 = vsel %vm712, %v714, %v710
      %v716 = vmul.f32 %v453, %v715
      %718 = vset.pattern.permute.xlu0 0
      %719 = vperm.xlu0 %718, %v716
      %v720 = vpop.permute.xlu0 %719
      %v722 = vmul.f32 %v720, %v695
      %v723 = vadd.f32 %v612, %v722
      %s724 = scalar_lea.vmem %s3, 64
      %v725 = vld [vmem:[%s724] sm:$0xff]
      %v726 = vld [vmem:[%s724 + $0x8] sm:$0xff]
      %v727 = vld [vmem:[%s724 + $0x10] sm:$0xff]
      %v728 = vld [vmem:[%s724 + $0x18] sm:$0xff]
      %v729 = vpack.c.bf16 %v726, %v725
      %v730 = vpack.c.bf16 %v728, %v727
      %731 = vmatpush.bf16.msra.mxu0 0
      %732 = vmatpush.bf16.msra.mxu0 0
      %733 = vmatpush.bf16.msra.mxu0 0
      %734 = vmatpush.bf16.msra.mxu0 0
      %735 = vmatpush.bf16.msra.mxu0 0
      %736 = vmatpush.bf16.msra.mxu0 0
      %737 = vmatpush.bf16.msra.mxu0 %v730
      %738 = vmatpush.bf16.msra.mxu0 %v729
      %739 = vmatmul.bf16.gmra.mxu0 %v368
      %v740 = vpop.f32.mrf.mxu0
      %v741 = vadd.f32 0.0, %v740
      %v742 = vpop.f32.mrf.mxu0
      %743 = vdwg.mxu0
      %s744 = scalar_lea.vmem %s4, 64
      %v745 = vld [vmem:[%s744] sm:$0xff]
      %v746 = vld [vmem:[%s744 + $0x8] sm:$0xff]
      %v747 = vld [vmem:[%s744 + $0x10] sm:$0xff]
      %v748 = vld [vmem:[%s744 + $0x18] sm:$0xff]
      %v749 = vpack.c.bf16 %v746, %v745
      %v750 = vpack.c.bf16 %v748, %v747
      %751 = vmatpush.bf16.msra.mxu0 0
      %752 = vmatpush.bf16.msra.mxu0 0
      %753 = vmatpush.bf16.msra.mxu0 0
      %754 = vmatpush.bf16.msra.mxu0 0
      %755 = vmatpush.bf16.msra.mxu0 0
      %756 = vmatpush.bf16.msra.mxu0 0
      %757 = vmatpush.bf16.msra.mxu0 %v750
      %758 = vmatpush.bf16.msra.mxu0 %v749
      %759 = vmatmul.bf16.gmra.mxu0 %v368
      %v760 = vpop.f32.mrf.mxu0
      %v761 = vadd.f32 0.0, %v760
      %v762 = vpop.f32.mrf.mxu0
      %763 = vdwg.mxu0
      %v764 = vsub.f32 0.0, %v741
      %v765 = vmul.f32 %v764, 1.442695
      %v766 = vpow.pop %v765
      %v767 = vadd.f32 %v766, 1.0
      %v768 = vrcp.pop %v767
      %v769 = vmul.f32 %v767, %v768
      %v770 = vsub.f32 1.0, %v769
      %v771 = vmul.f32 %v768, %v770
      %v772 = vadd.f32 %v768, %v771
      %vm773 = vweird.f32 %v767
      %vm774 = vweird.f32 %v768
      %vm775 = vmor %vm773, %vm774
      %v776 = vsel %vm775, %v768, %v772
      %v777 = vand.u32 2147483647, %v767
      %vm778 = vcmp.eq.f32.partialorder %v777, 8.507059e+37
      %v779 = vand.u32 %v767, 2147483648
      %v780 = vor.u32 1.1754944e-38, %v779
      %v781 = vsel %vm778, %v780, %v776
      %v782 = vmul.f32 1.0, %v781
      %v783 = vmul.f32 %v741, %v782
      %v784 = vmul.f32 %v783, %v761
      %s785 = scalar_lea.vmem %s5, 64
      %v786 = vld [vmem:[%s785] sm:$0xff]
      %v787 = vld [vmem:[%s785 + $0x8] sm:$0xff]
      %v788 = vld [vmem:[%s785 + $0x10] sm:$0xff]
      %v789 = vld [vmem:[%s785 + $0x18] sm:$0xff]
      %v790 = vpack.c.bf16 %v784, %v784
      %v791 = vpack.c.bf16 %v787, %v786
      %v792 = vpack.c.bf16 %v789, %v788
      %v794 = vsel %vm332, %v790, 0
      %796 = vmatpush.bf16.msra.mxu0 0
      %797 = vmatpush.bf16.msra.mxu0 0
      %798 = vmatpush.bf16.msra.mxu0 0
      %799 = vmatpush.bf16.msra.mxu0 0
      %800 = vmatpush.bf16.msra.mxu0 0
      %801 = vmatpush.bf16.msra.mxu0 0
      %802 = vmatpush.bf16.msra.mxu0 %v792
      %803 = vmatpush.bf16.msra.mxu0 %v791
      %804 = vmatmul.bf16.gmra.mxu0 %v794
      %v805 = vpop.f32.mrf.mxu0
      %v806 = vadd.f32 0.0, %v805
      %v807 = vpop.f32.mrf.mxu0
      %808 = vdwg.mxu0
      %v809 = vmul.f32 %v473, %v715
      %811 = vset.pattern.permute.xlu0 0
      %812 = vperm.xlu0 %811, %v809
      %v813 = vpop.permute.xlu0 %812
      %v815 = vmul.f32 %v813, %v806
      %v816 = vadd.f32 %v723, %v815
      %s817 = scalar_lea.vmem %s3, 96
      %v818 = vld [vmem:[%s817] sm:$0xff]
      %v819 = vld [vmem:[%s817 + $0x8] sm:$0xff]
      %v820 = vld [vmem:[%s817 + $0x10] sm:$0xff]
      %v821 = vld [vmem:[%s817 + $0x18] sm:$0xff]
      %v822 = vpack.c.bf16 %v819, %v818
      %v823 = vpack.c.bf16 %v821, %v820
      %824 = vmatpush.bf16.msra.mxu0 0
      %825 = vmatpush.bf16.msra.mxu0 0
      %826 = vmatpush.bf16.msra.mxu0 0
      %827 = vmatpush.bf16.msra.mxu0 0
      %828 = vmatpush.bf16.msra.mxu0 0
      %829 = vmatpush.bf16.msra.mxu0 0
      %830 = vmatpush.bf16.msra.mxu0 %v823
      %831 = vmatpush.bf16.msra.mxu0 %v822
      %832 = vmatmul.bf16.gmra.mxu0 %v368
      %v833 = vpop.f32.mrf.mxu0
      %v834 = vadd.f32 0.0, %v833
      %v835 = vpop.f32.mrf.mxu0
      %836 = vdwg.mxu0
      %s837 = scalar_lea.vmem %s4, 96
      %v838 = vld [vmem:[%s837] sm:$0xff]
      %v839 = vld [vmem:[%s837 + $0x8] sm:$0xff]
      %v840 = vld [vmem:[%s837 + $0x10] sm:$0xff]
      %v841 = vld [vmem:[%s837 + $0x18] sm:$0xff]
      %v842 = vpack.c.bf16 %v839, %v838
      %v843 = vpack.c.bf16 %v841, %v840
      %844 = vmatpush.bf16.msra.mxu0 0
      %845 = vmatpush.bf16.msra.mxu0 0
      %846 = vmatpush.bf16.msra.mxu0 0
      %847 = vmatpush.bf16.msra.mxu0 0
      %848 = vmatpush.bf16.msra.mxu0 0
      %849 = vmatpush.bf16.msra.mxu0 0
      %850 = vmatpush.bf16.msra.mxu0 %v843
      %851 = vmatpush.bf16.msra.mxu0 %v842
      %852 = vmatmul.bf16.gmra.mxu0 %v368
      %v853 = vpop.f32.mrf.mxu0
      %v854 = vadd.f32 0.0, %v853
      %v855 = vpop.f32.mrf.mxu0
      %856 = vdwg.mxu0
      %v857 = vsub.f32 0.0, %v834
      %v858 = vmul.f32 %v857, 1.442695
      %v859 = vpow.pop %v858
      %v860 = vadd.f32 %v859, 1.0
      %v861 = vrcp.pop %v860
      %v862 = vmul.f32 %v860, %v861
      %v863 = vsub.f32 1.0, %v862
      %v864 = vmul.f32 %v861, %v863
      %v865 = vadd.f32 %v861, %v864
      %vm866 = vweird.f32 %v860
      %vm867 = vweird.f32 %v861
      %vm868 = vmor %vm866, %vm867
      %v869 = vsel %vm868, %v861, %v865
      %v870 = vand.u32 2147483647, %v860
      %vm871 = vcmp.eq.f32.partialorder %v870, 8.507059e+37
      %v872 = vand.u32 %v860, 2147483648
      %v873 = vor.u32 1.1754944e-38, %v872
      %v874 = vsel %vm871, %v873, %v869
      %v875 = vmul.f32 1.0, %v874
      %v876 = vmul.f32 %v834, %v875
      %v877 = vmul.f32 %v876, %v854
      %s878 = scalar_lea.vmem %s5, 96
      %v879 = vld [vmem:[%s878] sm:$0xff]
      %v880 = vld [vmem:[%s878 + $0x8] sm:$0xff]
      %v881 = vld [vmem:[%s878 + $0x10] sm:$0xff]
      %v882 = vld [vmem:[%s878 + $0x18] sm:$0xff]
      %v883 = vpack.c.bf16 %v877, %v877
      %v884 = vpack.c.bf16 %v880, %v879
      %v885 = vpack.c.bf16 %v882, %v881
      %v887 = vsel %vm332, %v883, 0
      %889 = vmatpush.bf16.msra.mxu0 0
      %890 = vmatpush.bf16.msra.mxu0 0
      %891 = vmatpush.bf16.msra.mxu0 0
      %892 = vmatpush.bf16.msra.mxu0 0
      %893 = vmatpush.bf16.msra.mxu0 0
      %894 = vmatpush.bf16.msra.mxu0 0
      %895 = vmatpush.bf16.msra.mxu0 %v885
      %896 = vmatpush.bf16.msra.mxu0 %v884
      %897 = vmatmul.bf16.gmra.mxu0 %v887
      %v898 = vpop.f32.mrf.mxu0
      %v899 = vadd.f32 0.0, %v898
      %v900 = vpop.f32.mrf.mxu0
      %901 = vdwg.mxu0
      %v902 = vmul.f32 %v493, %v715
      %904 = vset.pattern.permute.xlu0 0
      %905 = vperm.xlu0 %904, %v902
      %v906 = vpop.permute.xlu0 %905
      %v908 = vmul.f32 %v906, %v899
      %v909 = vadd.f32 %v816, %v908
      %v910 = vld [vmem:[%s6] sm:$0xff]
      %v911 = vld [vmem:[%s6 + $0x8] sm:$0xff]
      %v912 = vld [vmem:[%s6 + $0x10] sm:$0xff]
      %v913 = vld [vmem:[%s6 + $0x18] sm:$0xff]
      %v914 = vpack.c.bf16 %v911, %v910
      %v915 = vpack.c.bf16 %v913, %v912
      %916 = vmatpush.bf16.msra.mxu0 0
      %917 = vmatpush.bf16.msra.mxu0 0
      %918 = vmatpush.bf16.msra.mxu0 0
      %919 = vmatpush.bf16.msra.mxu0 0
      %920 = vmatpush.bf16.msra.mxu0 0
      %921 = vmatpush.bf16.msra.mxu0 0
      %922 = vmatpush.bf16.msra.mxu0 %v915
      %923 = vmatpush.bf16.msra.mxu0 %v914
      %924 = vmatmul.bf16.gmra.mxu0 %v368
      %v925 = vpop.f32.mrf.mxu0
      %v926 = vadd.f32 0.0, %v925
      %v927 = vpop.f32.mrf.mxu0
      %928 = vdwg.mxu0
      %v929 = vld [vmem:[%s7] sm:$0xff]
      %v930 = vld [vmem:[%s7 + $0x8] sm:$0xff]
      %v931 = vld [vmem:[%s7 + $0x10] sm:$0xff]
      %v932 = vld [vmem:[%s7 + $0x18] sm:$0xff]
      %v933 = vpack.c.bf16 %v930, %v929
      %v934 = vpack.c.bf16 %v932, %v931
      %935 = vmatpush.bf16.msra.mxu0 0
      %936 = vmatpush.bf16.msra.mxu0 0
      %937 = vmatpush.bf16.msra.mxu0 0
      %938 = vmatpush.bf16.msra.mxu0 0
      %939 = vmatpush.bf16.msra.mxu0 0
      %940 = vmatpush.bf16.msra.mxu0 0
      %941 = vmatpush.bf16.msra.mxu0 %v934
      %942 = vmatpush.bf16.msra.mxu0 %v933
      %943 = vmatmul.bf16.gmra.mxu0 %v368
      %v944 = vpop.f32.mrf.mxu0
      %v945 = vadd.f32 0.0, %v944
      %v946 = vpop.f32.mrf.mxu0
      %947 = vdwg.mxu0
      %v948 = vsub.f32 0.0, %v926
      %v949 = vmul.f32 %v948, 1.442695
      %v950 = vpow.pop %v949
      %v951 = vadd.f32 %v950, 1.0
      %v952 = vrcp.pop %v951
      %v953 = vmul.f32 %v951, %v952
      %v954 = vsub.f32 1.0, %v953
      %v955 = vmul.f32 %v952, %v954
      %v956 = vadd.f32 %v952, %v955
      %vm957 = vweird.f32 %v951
      %vm958 = vweird.f32 %v952
      %vm959 = vmor %vm957, %vm958
      %v960 = vsel %vm959, %v952, %v956
      %v961 = vand.u32 2147483647, %v951
      %vm962 = vcmp.eq.f32.partialorder %v961, 8.507059e+37
      %v963 = vand.u32 %v951, 2147483648
      %v964 = vor.u32 1.1754944e-38, %v963
      %v965 = vsel %vm962, %v964, %v960
      %v966 = vmul.f32 1.0, %v965
      %v967 = vmul.f32 %v926, %v966
      %v968 = vmul.f32 %v967, %v945
      %v969 = vld [vmem:[%s8] sm:$0xff]
      %v970 = vld [vmem:[%s8 + $0x8] sm:$0xff]
      %v971 = vld [vmem:[%s8 + $0x10] sm:$0xff]
      %v972 = vld [vmem:[%s8 + $0x18] sm:$0xff]
      %v973 = vpack.c.bf16 %v968, %v968
      %v974 = vpack.c.bf16 %v970, %v969
      %v975 = vpack.c.bf16 %v972, %v971
      %v977 = vsel %vm332, %v973, 0
      %979 = vmatpush.bf16.msra.mxu0 0
      %980 = vmatpush.bf16.msra.mxu0 0
      %981 = vmatpush.bf16.msra.mxu0 0
      %982 = vmatpush.bf16.msra.mxu0 0
      %983 = vmatpush.bf16.msra.mxu0 0
      %984 = vmatpush.bf16.msra.mxu0 0
      %985 = vmatpush.bf16.msra.mxu0 %v975
      %986 = vmatpush.bf16.msra.mxu0 %v974
      %987 = vmatmul.bf16.gmra.mxu0 %v977
      %v988 = vpop.f32.mrf.mxu0
      %v989 = vadd.f32 0.0, %v988
      %v990 = vpop.f32.mrf.mxu0
      %991 = vdwg.mxu0
      %v992 = vadd.f32 %v909, %v989
      %v993 = vadd.f32 %v329, %v992
      %994 = vst.msk [vmem:[%s327] sm:$0xff] %vm332, %v993
      %p995 = scmp.lt.s32.totalorder %s20, 1
      %s996 = scalar_select %p995, %s20, 1
      %s997 = smul.addr %s996, 8
      %s998 = scalar_lea.vmem %s9, %s997
      // Predicated region
      $region57: #{main_model_forward.8} parent=55 // pred_check
        %p999 = pneg %p232
      $region58: #{main_model_forward.8} parent=55 // pred_check_branch
        %1001 = sbr.rel (%p999) target = $region60
      $region59: #{main_model_forward.8} parent=55 // pred_region
        _
      $region60: #{main_model_forward.8} parent=55 // pred_fallthru
        _
    $region56: #{main_model_forward.8} parent=5 // pred_fallthru
      _
    %p1002 = scmp.le.s32.totalorder 2, %s15
    // Predicated region
    $region61: #{main_model_forward.8} parent=5 // pred_check
      %p1003 = pneg %p1002
    $region62: #{main_model_forward.8} parent=5 // pred_check_branch
      %1005 = sbr.rel (%p1003) target = $region64
    $region63: #{main_model_forward.8} parent=5 // pred_region
      %s1006 = ssub.s32 %s15, 2
      // Predicated region
      $region65: #{main_model_forward.8} parent=63 // pred_check
        %p1007 = pneg %p238
      $region66: #{main_model_forward.8} parent=63 // pred_check_branch
        %1009 = sbr.rel (%p1007) target = $region68
      $region67: #{main_model_forward.8} parent=63 // pred_region
        %p1010 = scmp.lt.s32.totalorder %s21, 1
        %s1011 = scalar_select %p1010, %s21, 1
        %s1012 = smul.addr %s1011, 8
        %s1013 = scalar_lea.vmem %s9, %s1012
      $region68: #{main_model_forward.8} parent=63 // pred_fallthru
        _
    $region64: #{main_model_forward.8} parent=5 // pred_fallthru
      _
  $region6: #{main_model_forward.8} parent=0 // loop_footer
    %s19 = sadd.s32 1, %s15
  $region7: #{main_model_forward.8} parent=0 // loop_footer_branch
    %14 = sbr.rel target = $region3
  $region8: #{main_model_forward.8} parent=0 // loop_exit
    _

</llo_original>
